<compile_context>
chip_gen: v5e
topology: v5e:2x2
jax: 0.10.0
libtpu: 0.0.40
codegen_flags: <defaults>
</compile_context>

<pallas_src>
import functools

import jax
import jax.numpy as jnp
import numpy as np
from jax.experimental import pallas as pl
from jax.experimental.pallas import tpu as pltpu


# ----------------------------------------------------------------------------
# Fused GAT encoder: all layers back-to-back inside one Pallas kernel
# ----------------------------------------------------------------------------
def _gat_layer(x, w_cat, a_cat, bias, cmask, adj_b, mask_b, *, heads, out_c,
               concat, relu_out, negative_slope):
    """One GATConv layer on VMEM-resident values.

    x      : [N, F]          node features
    w_cat  : [F, 2*H*C]      [W_src | W_dst]
    a_cat  : [2*H*C, 2*H]    block matrix -> alpha = xw @ a_cat = [a_src|a_dst]
    bias   : [1, out_dim]
    cmask  : [H, H*C]        per-head lane mask (1 on lanes h*C:(h+1)*C)
    adj_b  : [H*N, N]        head-stacked adjacency (edge multiplicities)
    mask_b : [H*N, N]        adj_b > 0
    """
    n = x.shape[0]
    hc = heads * out_c

    # One matmul for both linear transforms, one for all per-head reductions.
    xw = jnp.dot(x, w_cat, preferred_element_type=jnp.float32)       # [N, 2HC]
    xw_src = xw[:, :hc]                                              # [N, HC]
    alpha = jnp.dot(xw, a_cat, preferred_element_type=jnp.float32)   # [N, 2H]
    alpha_src_t = alpha[:, :heads].T                                 # [H, N]
    alpha_dst = alpha[:, heads:]                                     # [N, H]

    # Attention logits for ALL heads, heads stacked along sublanes:
    #   e[h*N + i, j] = alpha_dst[i, h] + alpha_src[j, h]
    e = jnp.concatenate(
        [alpha_dst[:, h:h + 1] + alpha_src_t[h:h + 1, :] for h in range(heads)],
        axis=0)                                                       # [H*N, N]

    # ONE leaky-relu / mask / row-max / exp / row-sum / divide for all heads.
    e = jnp.where(e >= 0.0, e, negative_slope * e)                    # LeakyReLU
    e = jnp.where(mask_b, e, -1e30)                                   # mask non-edges
    e_max = jnp.max(e, axis=1, keepdims=True)
    p = jnp.exp(e - e_max) * adj_b            # adj_b carries edge multiplicity
    denom = jnp.sum(p, axis=1, keepdims=True) + 1e-16                 # PyG eps
    attn = p / denom                                                  # [H*N, N]

    # ONE MXU matmul aggregates every head; the diagonal per-head blocks of the
    # [H*N, H*C] result are combined with a lane-masked sum (pure VPU work).
    big = jnp.dot(attn, xw_src, preferred_element_type=jnp.float32)  # [H*N, HC]
    out = big[0:n, :] * cmask[0:1, :]
    for h in range(1, heads):
        out = out + big[h * n:(h + 1) * n, :] * cmask[h:h + 1, :]    # [N, HC]

    if (not concat) and heads > 1:                                    # head mean
        out = sum(out[:, h * out_c:(h + 1) * out_c]
                  for h in range(heads)) * (1.0 / heads)
    out = out + bias
    if relu_out:
        out = jnp.maximum(out, 0.0)
    return out


def fused_gat_encoder_kernel(x_ref, adj_ref, *rest, layer_cfgs, negative_slope):
    """rest = (w_cat, a_cat, bias, cmask) per layer, then out_ref."""
    wrefs, out_ref = rest[:-1], rest[-1]
    x = x_ref[...]
    adj = adj_ref[...]

    # Hoist the head-stacked adjacency (and its >0 mask) once per distinct
    # head count; layers sharing a head count reuse it.
    adj_by_heads = {}
    for heads, _, _, _ in layer_cfgs:
        if heads not in adj_by_heads:
            adj_b = adj if heads == 1 else jnp.concatenate([adj] * heads, axis=0)
            adj_by_heads[heads] = (adj_b, adj_b > 0.0)

    h_act = x
    for li, (heads, out_c, concat, relu_out) in enumerate(layer_cfgs):
        w_cat = wrefs[4 * li][...]
        a_cat = wrefs[4 * li + 1][...]
        bias = wrefs[4 * li + 2][...]
        cmask = wrefs[4 * li + 3][...]
        adj_b, mask_b = adj_by_heads[heads]
        h_act = _gat_layer(h_act, w_cat, a_cat, bias, cmask, adj_b, mask_b,
                           heads=heads, out_c=out_c, concat=concat,
                           relu_out=relu_out, negative_slope=negative_slope)

    out_ref[...] = h_act   # single lane-dense store of the final embeddings


# ----------------------------------------------------------------------------
# Wrappers (glue)
# ----------------------------------------------------------------------------
def link_predictor_forward(params, x, edge_index, *, two_layers):
    """Equivalent of LinkPredictor.forward (GAT encoder): node embeddings z."""
    n = x.shape[0]
    # adj[i, j] = number of edges j -> i; counts (not 0/1) keep PyG's
    # scatter-softmax semantics on multigraphs with duplicate edges.
    adj = jnp.zeros((n, n), jnp.float32).at[edge_index[1], edge_index[0]].add(1.0)

    names = ("conv1b", "conv2b") if two_layers else ("conv1", "conv2", "conv3")
    relus = (True,) * (len(names) - 1) + (False,)     # torch.relu between layers
    cfgs, args = [], [x, adj]
    for name, relu_out in zip(names, relus):
        p = params[name]
        cfgs.append((p["heads"], p["out_channels"], p["concat"], relu_out))
        args += [p["w_cat"], p["a_cat"], p["bias"], p["cmask"]]
    heads, out_c, concat, _ = cfgs[-1]
    out_dim = heads * out_c if concat else out_c

    kernel = functools.partial(fused_gat_encoder_kernel,
                               layer_cfgs=tuple(cfgs), negative_slope=0.2)
    vmem = pl.BlockSpec(memory_space=pltpu.MemorySpace.VMEM)
    # TODO(synk): for large N, switch to a row-tiled grid over target nodes
    # (BlockSpec (TM, N) for adj/x/out, dimension_semantics=("parallel",)):
    # the dense O(N^2) attention otherwise exceeds VMEM (esp. v7x's 64 MiB)
    # and a grid-less call cannot use both v7x TensorCores.
    return pl.pallas_call(
        kernel,
        out_shape=jax.ShapeDtypeStruct((n, out_dim), jnp.float32),
        in_specs=[vmem] * len(args),
        out_specs=vmem,
    )(*args)


def link_predictor_decode(params, z, edge_label_index, total_paper_nodes,
                          num_classes):
    """LinkPredictor.decode (EdgeDecoder). Kept in plain XLA per the
    performance review: pallas_call launch overhead >> the [E,D]x[D,1] math."""
    z_paper = z[:total_paper_nodes, :]
    z_label = z[-num_classes:, :]
    src, dst = edge_label_index
    x = z_paper[src] * z_label[dst - total_paper_nodes]
    return (x @ params["dec_w"] + params["dec_b"])[:, 0]


# ----------------------------------------------------------------------------
# Deterministic parameter init (shapes follow the torch module __init__)
# ----------------------------------------------------------------------------
def init_gat_conv(key, in_dim, out_c, heads, concat):
    k1, k2, k3, k4, k5 = jax.random.split(key, 5)
    s_in = 1.0 / np.sqrt(in_dim)
    s_c = 1.0 / np.sqrt(out_c)
    w_src = jax.random.normal(k1, (in_dim, heads * out_c), jnp.float32) * s_in
    w_dst = jax.random.normal(k2, (in_dim, heads * out_c), jnp.float32) * s_in
    att_src = jax.random.normal(k3, (heads, out_c), jnp.float32) * s_c
    att_dst = jax.random.normal(k4, (heads, out_c), jnp.float32) * s_c
    out_dim = heads * out_c if concat else out_c
    bias = jax.random.normal(k5, (1, out_dim), jnp.float32) * 0.01

    hc = heads * out_c
    # Fused projection [W_src | W_dst] -> one matmul for both transforms.
    w_cat = jnp.concatenate([w_src, w_dst], axis=1)                  # [F, 2HC]
    # Block attention matrix so alpha_src / alpha_dst come out of ONE matmul:
    # cols 0..H-1 hold att_src per head, cols H..2H-1 hold att_dst per head.
    rows = np.arange(hc)
    cols = np.repeat(np.arange(heads), out_c)
    a_cat_np = np.zeros((2 * hc, 2 * heads), np.float32)
    a_cat_np[rows, cols] = np.asarray(att_src).reshape(-1)
    a_cat_np[hc + rows, heads + cols] = np.asarray(att_dst).reshape(-1)
    a_cat = jnp.asarray(a_cat_np)
    # Per-head lane mask used to fold the fused aggregation matmul's
    # [H*N, H*C] result into the concatenated [N, H*C] output.
    cmask = jnp.asarray(
        (np.arange(hc)[None, :] // out_c == np.arange(heads)[:, None])
        .astype(np.float32))                                         # [H, HC]
    return dict(w_cat=w_cat, a_cat=a_cat, bias=bias, cmask=cmask,
                w_src=w_src, w_dst=w_dst, att_src=att_src, att_dst=att_dst,
                heads=heads, out_channels=out_c, concat=concat)


def init_link_predictor(key, in_dim, hidden_channels, embedding_size, heads):
    keys = jax.random.split(key, 7)
    return {
        "conv1": init_gat_conv(keys[0], in_dim, hidden_channels, heads, True),
        "conv2": init_gat_conv(keys[1], heads * hidden_channels, 48, heads, True),
        "conv3": init_gat_conv(keys[2], heads * 48, embedding_size, 1, False),
        "conv1b": init_gat_conv(keys[3], in_dim, hidden_channels, heads, True),
        "conv2b": init_gat_conv(keys[4], heads * hidden_channels,
                                embedding_size, 1, False),
        "dec_w": jax.random.normal(keys[5], (embedding_size, 1), jnp.float32)
                 * (1.0 / np.sqrt(embedding_size)),
        "dec_b": jax.random.normal(keys[6], (1, 1), jnp.float32) * 0.01,
    }


# ----------------------------------------------------------------------------
# Pure-JAX reference (dense multigraph formulation) for a sanity check
# ----------------------------------------------------------------------------
def ref_gat_conv(x, p, adj, relu_out):
    h, c, concat = p["heads"], p["out_channels"], p["concat"]
    xs = (x @ p["w_src"]).reshape(-1, h, c)
    xd = (x @ p["w_dst"]).reshape(-1, h, c)
    a_s = (xs * p["att_src"][None]).sum(-1)
    a_d = (xd * p["att_dst"][None]).sum(-1)
    e = a_d[:, None, :] + a_s[None, :, :]
    e = jnp.where(e >= 0, e, 0.2 * e)
    e = jnp.where(adj[:, :, None] > 0, e, -1e30)
    pp = jnp.exp(e - e.max(axis=1, keepdims=True)) * adj[:, :, None]
    attn = pp / (pp.sum(axis=1, keepdims=True) + 1e-16)
    out = jnp.einsum('ijh,jhc->ihc', attn, xs)
    out = out.reshape(-1, h * c) if concat else out.mean(axis=1)
    out = out + p["bias"]
    return jnp.maximum(out, 0.0) if relu_out else out


def ref_forward(params, x, edge_index, two_layers):
    n = x.shape[0]
    adj = jnp.zeros((n, n), jnp.float32).at[edge_index[1], edge_index[0]].add(1.0)
    if two_layers:
        z = ref_gat_conv(x, params["conv1b"], adj, True)
        z = ref_gat_conv(z, params["conv2b"], adj, False)
    else:
        z = ref_gat_conv(x, params["conv1"], adj, True)
        z = ref_gat_conv(z, params["conv2"], adj, True)
        z = ref_gat_conv(z, params["conv3"], adj, False)
    return z


# ----------------------------------------------------------------------------
if __name__ == "__main__":
    N = 16                 # total nodes (papers + label nodes)
    F_IN = 32              # input feature dim
    HIDDEN = 8             # hidden_channels
    EMB = 16               # embedding_size
    HEADS = 8
    E = 48                 # number of edges (duplicates allowed)

    root = jax.random.PRNGKey(0)
    k_param, k_x, k_src, k_dst, k_lsrc, k_ldst = jax.random.split(root, 6)

    params = init_link_predictor(k_param, F_IN, HIDDEN, EMB, HEADS)
    x = jax.random.normal(k_x, (N, F_IN), jnp.float32)
    edge_index = jnp.stack([
        jax.random.randint(k_src, (E,), 0, N, dtype=jnp.int32),
        jax.random.randint(k_dst, (E,), 0, N, dtype=jnp.int32),
    ], axis=0)

    # --- encoder, three-layer branch (two_layers=False) ---
    z = link_predictor_forward(params, x, edge_index, two_layers=False)
    z = jax.block_until_ready(z)
    z_ref = ref_forward(params, x, edge_index, False)
    err = float(jnp.max(jnp.abs(z - z_ref)))
    scale = float(jnp.max(jnp.abs(z_ref))) + 1.0
    assert np.isfinite(np.asarray(z)).all(), "non-finite output"
    assert err <= 1e-2 * scale, f"3-layer mismatch vs reference: {err}"

    # --- encoder, two-layer branch ---
    z2 = link_predictor_forward(params, x, edge_index, two_layers=True)
    z2 = jax.block_until_ready(z2)
    z2_ref = ref_forward(params, x, edge_index, True)
    err2 = float(jnp.max(jnp.abs(z2 - z2_ref)))
    scale2 = float(jnp.max(jnp.abs(z2_ref))) + 1.0
    assert np.isfinite(np.asarray(z2)).all(), "non-finite output (2-layer)"
    assert err2 <= 1e-2 * scale2, f"2-layer mismatch vs reference: {err2}"

    # --- decode (EdgeDecoder) on a few paper->label edges ---
    total_paper_nodes, num_classes = 12, 4
    n_lbl = 8
    lbl_src = jax.random.randint(k_lsrc, (n_lbl,), 0, total_paper_nodes,
                                 dtype=jnp.int32)
    lbl_dst = jax.random.randint(k_ldst, (n_lbl,), total_paper_nodes, N,
                                 dtype=jnp.int32)
    scores = link_predictor_decode(params, z, (lbl_src, lbl_dst),
                                   total_paper_nodes, num_classes)
    scores = jax.block_until_ready(scores)
    assert scores.shape == (n_lbl,)
    assert np.isfinite(np.asarray(scores)).all()

    print("KERNEL_OK")
</pallas_src>

<mosaic_0001>
module attributes {stable_mosaic.version = 11 : i64} {
  func.func @fused_gat_encoder_kernel(%arg0: memref<16x32xf32, #tpu.memory_space<vmem>>, %arg1: memref<16x16xf32, #tpu.memory_space<vmem>>, %arg2: memref<32x128xf32, #tpu.memory_space<vmem>>, %arg3: memref<128x16xf32, #tpu.memory_space<vmem>>, %arg4: memref<1x64xf32, #tpu.memory_space<vmem>>, %arg5: memref<8x64xf32, #tpu.memory_space<vmem>>, %arg6: memref<64x768xf32, #tpu.memory_space<vmem>>, %arg7: memref<768x16xf32, #tpu.memory_space<vmem>>, %arg8: memref<1x384xf32, #tpu.memory_space<vmem>>, %arg9: memref<8x384xf32, #tpu.memory_space<vmem>>, %arg10: memref<384x32xf32, #tpu.memory_space<vmem>>, %arg11: memref<32x2xf32, #tpu.memory_space<vmem>>, %arg12: memref<1x16xf32, #tpu.memory_space<vmem>>, %arg13: memref<1x16xf32, #tpu.memory_space<vmem>>, %arg14: memref<16x16xf32, #tpu.memory_space<vmem>>) attributes {dimension_semantics = [], scalar_prefetch = 0 : i64, scratch_operands = 0 : i64, tpu.core_type = #tpu.core_type<tc>} {
    %c0 = arith.constant 0 : index
    %c0_0 = arith.constant 0 : index
    %0 = vector.load %arg0[%c0, %c0_0] : memref<16x32xf32, #tpu.memory_space<vmem>>, vector<16x32xf32>
    %c0_1 = arith.constant 0 : index
    %c0_2 = arith.constant 0 : index
    %1 = vector.load %arg1[%c0_1, %c0_2] : memref<16x16xf32, #tpu.memory_space<vmem>>, vector<16x16xf32>
    %2 = tpu.concatenate %1, %1, %1, %1, %1, %1, %1, %1 in 0 : vector<16x16xf32>, vector<16x16xf32>, vector<16x16xf32>, vector<16x16xf32>, vector<16x16xf32>, vector<16x16xf32>, vector<16x16xf32>, vector<16x16xf32> -> vector<128x16xf32>
    %cst = arith.constant 0.000000e+00 : f32
    %3 = vector.broadcast %cst : f32 to vector<128x16xf32>
    %4 = arith.cmpf ogt, %2, %3 : vector<128x16xf32>
    %cst_3 = arith.constant 0.000000e+00 : f32
    %5 = vector.broadcast %cst_3 : f32 to vector<16x16xf32>
    %6 = arith.cmpf ogt, %1, %5 : vector<16x16xf32>
    %c0_4 = arith.constant 0 : index
    %c0_5 = arith.constant 0 : index
    %7 = vector.load %arg2[%c0_4, %c0_5] : memref<32x128xf32, #tpu.memory_space<vmem>>, vector<32x128xf32>
    %c0_6 = arith.constant 0 : index
    %c0_7 = arith.constant 0 : index
    %8 = vector.load %arg3[%c0_6, %c0_7] : memref<128x16xf32, #tpu.memory_space<vmem>>, vector<128x16xf32>
    %c0_8 = arith.constant 0 : index
    %c0_9 = arith.constant 0 : index
    %9 = vector.load %arg4[%c0_8, %c0_9] : memref<1x64xf32, #tpu.memory_space<vmem>>, vector<1x64xf32>
    %c0_10 = arith.constant 0 : index
    %c0_11 = arith.constant 0 : index
    %10 = vector.load %arg5[%c0_10, %c0_11] : memref<8x64xf32, #tpu.memory_space<vmem>>, vector<8x64xf32>
    %cst_12 = arith.constant dense<0.000000e+00> : vector<16x128xf32>
    %11 = tpu.matmul %0, %7, %cst_12 {dimension_numbers = #tpu.dot_dimension_numbers<[1], [0], [0], [1], [0, 0, 1, 1], [], []>} : vector<16x32xf32>, vector<32x128xf32>, vector<16x128xf32> -> vector<16x128xf32>
    %12 = vector.extract_strided_slice %11 {offsets = [0, 0], sizes = [16, 64], strides = [1, 1]} : vector<16x128xf32> to vector<16x64xf32>
    %cst_13 = arith.constant dense<0.000000e+00> : vector<16x16xf32>
    %13 = tpu.matmul %11, %8, %cst_13 {dimension_numbers = #tpu.dot_dimension_numbers<[1], [0], [0], [1], [0, 0, 1, 1], [], []>} : vector<16x128xf32>, vector<128x16xf32>, vector<16x16xf32> -> vector<16x16xf32>
    %14 = vector.extract_strided_slice %13 {offsets = [0, 0], sizes = [16, 8], strides = [1, 1]} : vector<16x16xf32> to vector<16x8xf32>
    %15 = tpu.transpose %14, [1, 0] : vector<16x8xf32> -> vector<8x16xf32>
    %16 = vector.extract_strided_slice %13 {offsets = [0, 8], sizes = [16, 8], strides = [1, 1]} : vector<16x16xf32> to vector<16x8xf32>
    %17 = vector.extract_strided_slice %16 {offsets = [0, 0], sizes = [16, 1], strides = [1, 1]} : vector<16x8xf32> to vector<16x1xf32>
    %18 = vector.extract_strided_slice %15 {offsets = [0, 0], sizes = [1, 16], strides = [1, 1]} : vector<8x16xf32> to vector<1x16xf32>
    %19 = vector.broadcast %17 : vector<16x1xf32> to vector<16x16xf32>
    %20 = vector.broadcast %18 : vector<1x16xf32> to vector<16x16xf32>
    %21 = arith.addf %19, %20 : vector<16x16xf32>
    %22 = vector.extract_strided_slice %16 {offsets = [0, 1], sizes = [16, 1], strides = [1, 1]} : vector<16x8xf32> to vector<16x1xf32>
    %23 = vector.extract_strided_slice %15 {offsets = [1, 0], sizes = [1, 16], strides = [1, 1]} : vector<8x16xf32> to vector<1x16xf32>
    %24 = vector.broadcast %22 : vector<16x1xf32> to vector<16x16xf32>
    %25 = vector.broadcast %23 : vector<1x16xf32> to vector<16x16xf32>
    %26 = arith.addf %24, %25 : vector<16x16xf32>
    %27 = vector.extract_strided_slice %16 {offsets = [0, 2], sizes = [16, 1], strides = [1, 1]} : vector<16x8xf32> to vector<16x1xf32>
    %28 = vector.extract_strided_slice %15 {offsets = [2, 0], sizes = [1, 16], strides = [1, 1]} : vector<8x16xf32> to vector<1x16xf32>
    %29 = vector.broadcast %27 : vector<16x1xf32> to vector<16x16xf32>
    %30 = vector.broadcast %28 : vector<1x16xf32> to vector<16x16xf32>
    %31 = arith.addf %29, %30 : vector<16x16xf32>
    %32 = vector.extract_strided_slice %16 {offsets = [0, 3], sizes = [16, 1], strides = [1, 1]} : vector<16x8xf32> to vector<16x1xf32>
    %33 = vector.extract_strided_slice %15 {offsets = [3, 0], sizes = [1, 16], strides = [1, 1]} : vector<8x16xf32> to vector<1x16xf32>
    %34 = vector.broadcast %32 : vector<16x1xf32> to vector<16x16xf32>
    %35 = vector.broadcast %33 : vector<1x16xf32> to vector<16x16xf32>
    %36 = arith.addf %34, %35 : vector<16x16xf32>
    %37 = vector.extract_strided_slice %16 {offsets = [0, 4], sizes = [16, 1], strides = [1, 1]} : vector<16x8xf32> to vector<16x1xf32>
    %38 = vector.extract_strided_slice %15 {offsets = [4, 0], sizes = [1, 16], strides = [1, 1]} : vector<8x16xf32> to vector<1x16xf32>
    %39 = vector.broadcast %37 : vector<16x1xf32> to vector<16x16xf32>
    %40 = vector.broadcast %38 : vector<1x16xf32> to vector<16x16xf32>
    %41 = arith.addf %39, %40 : vector<16x16xf32>
    %42 = vector.extract_strided_slice %16 {offsets = [0, 5], sizes = [16, 1], strides = [1, 1]} : vector<16x8xf32> to vector<16x1xf32>
    %43 = vector.extract_strided_slice %15 {offsets = [5, 0], sizes = [1, 16], strides = [1, 1]} : vector<8x16xf32> to vector<1x16xf32>
    %44 = vector.broadcast %42 : vector<16x1xf32> to vector<16x16xf32>
    %45 = vector.broadcast %43 : vector<1x16xf32> to vector<16x16xf32>
    %46 = arith.addf %44, %45 : vector<16x16xf32>
    %47 = vector.extract_strided_slice %16 {offsets = [0, 6], sizes = [16, 1], strides = [1, 1]} : vector<16x8xf32> to vector<16x1xf32>
    %48 = vector.extract_strided_slice %15 {offsets = [6, 0], sizes = [1, 16], strides = [1, 1]} : vector<8x16xf32> to vector<1x16xf32>
    %49 = vector.broadcast %47 : vector<16x1xf32> to vector<16x16xf32>
    %50 = vector.broadcast %48 : vector<1x16xf32> to vector<16x16xf32>
    %51 = arith.addf %49, %50 : vector<16x16xf32>
    %52 = vector.extract_strided_slice %16 {offsets = [0, 7], sizes = [16, 1], strides = [1, 1]} : vector<16x8xf32> to vector<16x1xf32>
    %53 = vector.extract_strided_slice %15 {offsets = [7, 0], sizes = [1, 16], strides = [1, 1]} : vector<8x16xf32> to vector<1x16xf32>
    %54 = vector.broadcast %52 : vector<16x1xf32> to vector<16x16xf32>
    %55 = vector.broadcast %53 : vector<1x16xf32> to vector<16x16xf32>
    %56 = arith.addf %54, %55 : vector<16x16xf32>
    %57 = tpu.concatenate %21, %26, %31, %36, %41, %46, %51, %56 in 0 : vector<16x16xf32>, vector<16x16xf32>, vector<16x16xf32>, vector<16x16xf32>, vector<16x16xf32>, vector<16x16xf32>, vector<16x16xf32>, vector<16x16xf32> -> vector<128x16xf32>
    %cst_14 = arith.constant 0.000000e+00 : f32
    %58 = vector.broadcast %cst_14 : f32 to vector<128x16xf32>
    %59 = arith.cmpf oge, %57, %58 : vector<128x16xf32>
    %cst_15 = arith.constant 2.000000e-01 : f32
    %60 = vector.broadcast %cst_15 : f32 to vector<128x16xf32>
    %61 = arith.mulf %60, %57 : vector<128x16xf32>
    %62 = arith.select %59, %57, %61 : vector<128x16xi1>, vector<128x16xf32>
    %cst_16 = arith.constant -1.000000e+30 : f32
    %63 = vector.broadcast %cst_16 : f32 to vector<128x16xf32>
    %64 = arith.select %4, %62, %63 : vector<128x16xi1>, vector<128x16xf32>
    %cst_17 = arith.constant dense<0xFF800000> : vector<128xf32>
    %65 = vector.multi_reduction <maximumf>, %64, %cst_17 [1] : vector<128x16xf32> to vector<128xf32>
    %66 = vector.shape_cast %65 : vector<128xf32> to vector<128x1xf32>
    %67 = vector.broadcast %66 : vector<128x1xf32> to vector<128x16xf32>
    %68 = arith.subf %64, %67 : vector<128x16xf32>
    %69 = math.exp %68 : vector<128x16xf32>
    %70 = arith.mulf %69, %2 : vector<128x16xf32>
    %cst_18 = arith.constant dense<0.000000e+00> : vector<128xf32>
    %71 = vector.multi_reduction <add>, %70, %cst_18 [1] : vector<128x16xf32> to vector<128xf32>
    %72 = vector.shape_cast %71 : vector<128xf32> to vector<128x1xf32>
    %cst_19 = arith.constant 1.000000e-16 : f32
    %73 = vector.broadcast %cst_19 : f32 to vector<128x1xf32>
    %74 = arith.addf %72, %73 : vector<128x1xf32>
    %75 = vector.broadcast %74 : vector<128x1xf32> to vector<128x16xf32>
    %76 = arith.divf %70, %75 : vector<128x16xf32>
    %cst_20 = arith.constant dense<0.000000e+00> : vector<128x64xf32>
    %77 = tpu.matmul %76, %12, %cst_20 {dimension_numbers = #tpu.dot_dimension_numbers<[1], [0], [0], [1], [0, 0, 1, 1], [], []>} : vector<128x16xf32>, vector<16x64xf32>, vector<128x64xf32> -> vector<128x64xf32>
    %78 = vector.extract_strided_slice %77 {offsets = [0, 0], sizes = [16, 64], strides = [1, 1]} : vector<128x64xf32> to vector<16x64xf32>
    %79 = vector.extract_strided_slice %10 {offsets = [0, 0], sizes = [1, 64], strides = [1, 1]} : vector<8x64xf32> to vector<1x64xf32>
    %80 = vector.broadcast %79 : vector<1x64xf32> to vector<16x64xf32>
    %81 = arith.mulf %78, %80 : vector<16x64xf32>
    %82 = vector.extract_strided_slice %77 {offsets = [16, 0], sizes = [16, 64], strides = [1, 1]} : vector<128x64xf32> to vector<16x64xf32>
    %83 = vector.extract_strided_slice %10 {offsets = [1, 0], sizes = [1, 64], strides = [1, 1]} : vector<8x64xf32> to vector<1x64xf32>
    %84 = vector.broadcast %83 : vector<1x64xf32> to vector<16x64xf32>
    %85 = arith.mulf %82, %84 : vector<16x64xf32>
    %86 = arith.addf %81, %85 : vector<16x64xf32>
    %87 = vector.extract_strided_slice %77 {offsets = [32, 0], sizes = [16, 64], strides = [1, 1]} : vector<128x64xf32> to vector<16x64xf32>
    %88 = vector.extract_strided_slice %10 {offsets = [2, 0], sizes = [1, 64], strides = [1, 1]} : vector<8x64xf32> to vector<1x64xf32>
    %89 = vector.broadcast %88 : vector<1x64xf32> to vector<16x64xf32>
    %90 = arith.mulf %87, %89 : vector<16x64xf32>
    %91 = arith.addf %86, %90 : vector<16x64xf32>
    %92 = vector.extract_strided_slice %77 {offsets = [48, 0], sizes = [16, 64], strides = [1, 1]} : vector<128x64xf32> to vector<16x64xf32>
    %93 = vector.extract_strided_slice %10 {offsets = [3, 0], sizes = [1, 64], strides = [1, 1]} : vector<8x64xf32> to vector<1x64xf32>
    %94 = vector.broadcast %93 : vector<1x64xf32> to vector<16x64xf32>
    %95 = arith.mulf %92, %94 : vector<16x64xf32>
    %96 = arith.addf %91, %95 : vector<16x64xf32>
    %97 = vector.extract_strided_slice %77 {offsets = [64, 0], sizes = [16, 64], strides = [1, 1]} : vector<128x64xf32> to vector<16x64xf32>
    %98 = vector.extract_strided_slice %10 {offsets = [4, 0], sizes = [1, 64], strides = [1, 1]} : vector<8x64xf32> to vector<1x64xf32>
    %99 = vector.broadcast %98 : vector<1x64xf32> to vector<16x64xf32>
    %100 = arith.mulf %97, %99 : vector<16x64xf32>
    %101 = arith.addf %96, %100 : vector<16x64xf32>
    %102 = vector.extract_strided_slice %77 {offsets = [80, 0], sizes = [16, 64], strides = [1, 1]} : vector<128x64xf32> to vector<16x64xf32>
    %103 = vector.extract_strided_slice %10 {offsets = [5, 0], sizes = [1, 64], strides = [1, 1]} : vector<8x64xf32> to vector<1x64xf32>
    %104 = vector.broadcast %103 : vector<1x64xf32> to vector<16x64xf32>
    %105 = arith.mulf %102, %104 : vector<16x64xf32>
    %106 = arith.addf %101, %105 : vector<16x64xf32>
    %107 = vector.extract_strided_slice %77 {offsets = [96, 0], sizes = [16, 64], strides = [1, 1]} : vector<128x64xf32> to vector<16x64xf32>
    %108 = vector.extract_strided_slice %10 {offsets = [6, 0], sizes = [1, 64], strides = [1, 1]} : vector<8x64xf32> to vector<1x64xf32>
    %109 = vector.broadcast %108 : vector<1x64xf32> to vector<16x64xf32>
    %110 = arith.mulf %107, %109 : vector<16x64xf32>
    %111 = arith.addf %106, %110 : vector<16x64xf32>
    %112 = vector.extract_strided_slice %77 {offsets = [112, 0], sizes = [16, 64], strides = [1, 1]} : vector<128x64xf32> to vector<16x64xf32>
    %113 = vector.extract_strided_slice %10 {offsets = [7, 0], sizes = [1, 64], strides = [1, 1]} : vector<8x64xf32> to vector<1x64xf32>
    %114 = vector.broadcast %113 : vector<1x64xf32> to vector<16x64xf32>
    %115 = arith.mulf %112, %114 : vector<16x64xf32>
    %116 = arith.addf %111, %115 : vector<16x64xf32>
    %117 = vector.broadcast %9 : vector<1x64xf32> to vector<16x64xf32>
    %118 = arith.addf %116, %117 : vector<16x64xf32>
    %cst_21 = arith.constant 0.000000e+00 : f32
    %119 = vector.broadcast %cst_21 : f32 to vector<16x64xf32>
    %120 = arith.maximumf %118, %119 : vector<16x64xf32>
    %c0_22 = arith.constant 0 : index
    %c0_23 = arith.constant 0 : index
    %121 = vector.load %arg6[%c0_22, %c0_23] : memref<64x768xf32, #tpu.memory_space<vmem>>, vector<64x768xf32>
    %c0_24 = arith.constant 0 : index
    %c0_25 = arith.constant 0 : index
    %122 = vector.load %arg7[%c0_24, %c0_25] : memref<768x16xf32, #tpu.memory_space<vmem>>, vector<768x16xf32>
    %c0_26 = arith.constant 0 : index
    %c0_27 = arith.constant 0 : index
    %123 = vector.load %arg8[%c0_26, %c0_27] : memref<1x384xf32, #tpu.memory_space<vmem>>, vector<1x384xf32>
    %c0_28 = arith.constant 0 : index
    %c0_29 = arith.constant 0 : index
    %124 = vector.load %arg9[%c0_28, %c0_29] : memref<8x384xf32, #tpu.memory_space<vmem>>, vector<8x384xf32>
    %cst_30 = arith.constant dense<0.000000e+00> : vector<16x768xf32>
    %125 = tpu.matmul %120, %121, %cst_30 {dimension_numbers = #tpu.dot_dimension_numbers<[1], [0], [0], [1], [0, 0, 1, 1], [], []>} : vector<16x64xf32>, vector<64x768xf32>, vector<16x768xf32> -> vector<16x768xf32>
    %126 = vector.extract_strided_slice %125 {offsets = [0, 0], sizes = [16, 384], strides = [1, 1]} : vector<16x768xf32> to vector<16x384xf32>
    %cst_31 = arith.constant dense<0.000000e+00> : vector<16x16xf32>
    %127 = tpu.matmul %125, %122, %cst_31 {dimension_numbers = #tpu.dot_dimension_numbers<[1], [0], [0], [1], [0, 0, 1, 1], [], []>} : vector<16x768xf32>, vector<768x16xf32>, vector<16x16xf32> -> vector<16x16xf32>
    %128 = vector.extract_strided_slice %127 {offsets = [0, 0], sizes = [16, 8], strides = [1, 1]} : vector<16x16xf32> to vector<16x8xf32>
    %129 = tpu.transpose %128, [1, 0] : vector<16x8xf32> -> vector<8x16xf32>
    %130 = vector.extract_strided_slice %127 {offsets = [0, 8], sizes = [16, 8], strides = [1, 1]} : vector<16x16xf32> to vector<16x8xf32>
    %131 = vector.extract_strided_slice %130 {offsets = [0, 0], sizes = [16, 1], strides = [1, 1]} : vector<16x8xf32> to vector<16x1xf32>
    %132 = vector.extract_strided_slice %129 {offsets = [0, 0], sizes = [1, 16], strides = [1, 1]} : vector<8x16xf32> to vector<1x16xf32>
    %133 = vector.broadcast %131 : vector<16x1xf32> to vector<16x16xf32>
    %134 = vector.broadcast %132 : vector<1x16xf32> to vector<16x16xf32>
    %135 = arith.addf %133, %134 : vector<16x16xf32>
    %136 = vector.extract_strided_slice %130 {offsets = [0, 1], sizes = [16, 1], strides = [1, 1]} : vector<16x8xf32> to vector<16x1xf32>
    %137 = vector.extract_strided_slice %129 {offsets = [1, 0], sizes = [1, 16], strides = [1, 1]} : vector<8x16xf32> to vector<1x16xf32>
    %138 = vector.broadcast %136 : vector<16x1xf32> to vector<16x16xf32>
    %139 = vector.broadcast %137 : vector<1x16xf32> to vector<16x16xf32>
    %140 = arith.addf %138, %139 : vector<16x16xf32>
    %141 = vector.extract_strided_slice %130 {offsets = [0, 2], sizes = [16, 1], strides = [1, 1]} : vector<16x8xf32> to vector<16x1xf32>
    %142 = vector.extract_strided_slice %129 {offsets = [2, 0], sizes = [1, 16], strides = [1, 1]} : vector<8x16xf32> to vector<1x16xf32>
    %143 = vector.broadcast %141 : vector<16x1xf32> to vector<16x16xf32>
    %144 = vector.broadcast %142 : vector<1x16xf32> to vector<16x16xf32>
    %145 = arith.addf %143, %144 : vector<16x16xf32>
    %146 = vector.extract_strided_slice %130 {offsets = [0, 3], sizes = [16, 1], strides = [1, 1]} : vector<16x8xf32> to vector<16x1xf32>
    %147 = vector.extract_strided_slice %129 {offsets = [3, 0], sizes = [1, 16], strides = [1, 1]} : vector<8x16xf32> to vector<1x16xf32>
    %148 = vector.broadcast %146 : vector<16x1xf32> to vector<16x16xf32>
    %149 = vector.broadcast %147 : vector<1x16xf32> to vector<16x16xf32>
    %150 = arith.addf %148, %149 : vector<16x16xf32>
    %151 = vector.extract_strided_slice %130 {offsets = [0, 4], sizes = [16, 1], strides = [1, 1]} : vector<16x8xf32> to vector<16x1xf32>
    %152 = vector.extract_strided_slice %129 {offsets = [4, 0], sizes = [1, 16], strides = [1, 1]} : vector<8x16xf32> to vector<1x16xf32>
    %153 = vector.broadcast %151 : vector<16x1xf32> to vector<16x16xf32>
    %154 = vector.broadcast %152 : vector<1x16xf32> to vector<16x16xf32>
    %155 = arith.addf %153, %154 : vector<16x16xf32>
    %156 = vector.extract_strided_slice %130 {offsets = [0, 5], sizes = [16, 1], strides = [1, 1]} : vector<16x8xf32> to vector<16x1xf32>
    %157 = vector.extract_strided_slice %129 {offsets = [5, 0], sizes = [1, 16], strides = [1, 1]} : vector<8x16xf32> to vector<1x16xf32>
    %158 = vector.broadcast %156 : vector<16x1xf32> to vector<16x16xf32>
    %159 = vector.broadcast %157 : vector<1x16xf32> to vector<16x16xf32>
    %160 = arith.addf %158, %159 : vector<16x16xf32>
    %161 = vector.extract_strided_slice %130 {offsets = [0, 6], sizes = [16, 1], strides = [1, 1]} : vector<16x8xf32> to vector<16x1xf32>
    %162 = vector.extract_strided_slice %129 {offsets = [6, 0], sizes = [1, 16], strides = [1, 1]} : vector<8x16xf32> to vector<1x16xf32>
    %163 = vector.broadcast %161 : vector<16x1xf32> to vector<16x16xf32>
    %164 = vector.broadcast %162 : vector<1x16xf32> to vector<16x16xf32>
    %165 = arith.addf %163, %164 : vector<16x16xf32>
    %166 = vector.extract_strided_slice %130 {offsets = [0, 7], sizes = [16, 1], strides = [1, 1]} : vector<16x8xf32> to vector<16x1xf32>
    %167 = vector.extract_strided_slice %129 {offsets = [7, 0], sizes = [1, 16], strides = [1, 1]} : vector<8x16xf32> to vector<1x16xf32>
    %168 = vector.broadcast %166 : vector<16x1xf32> to vector<16x16xf32>
    %169 = vector.broadcast %167 : vector<1x16xf32> to vector<16x16xf32>
    %170 = arith.addf %168, %169 : vector<16x16xf32>
    %171 = tpu.concatenate %135, %140, %145, %150, %155, %160, %165, %170 in 0 : vector<16x16xf32>, vector<16x16xf32>, vector<16x16xf32>, vector<16x16xf32>, vector<16x16xf32>, vector<16x16xf32>, vector<16x16xf32>, vector<16x16xf32> -> vector<128x16xf32>
    %cst_32 = arith.constant 0.000000e+00 : f32
    %172 = vector.broadcast %cst_32 : f32 to vector<128x16xf32>
    %173 = arith.cmpf oge, %171, %172 : vector<128x16xf32>
    %cst_33 = arith.constant 2.000000e-01 : f32
    %174 = vector.broadcast %cst_33 : f32 to vector<128x16xf32>
    %175 = arith.mulf %174, %171 : vector<128x16xf32>
    %176 = arith.select %173, %171, %175 : vector<128x16xi1>, vector<128x16xf32>
    %cst_34 = arith.constant -1.000000e+30 : f32
    %177 = vector.broadcast %cst_34 : f32 to vector<128x16xf32>
    %178 = arith.select %4, %176, %177 : vector<128x16xi1>, vector<128x16xf32>
    %cst_35 = arith.constant dense<0xFF800000> : vector<128xf32>
    %179 = vector.multi_reduction <maximumf>, %178, %cst_35 [1] : vector<128x16xf32> to vector<128xf32>
    %180 = vector.shape_cast %179 : vector<128xf32> to vector<128x1xf32>
    %181 = vector.broadcast %180 : vector<128x1xf32> to vector<128x16xf32>
    %182 = arith.subf %178, %181 : vector<128x16xf32>
    %183 = math.exp %182 : vector<128x16xf32>
    %184 = arith.mulf %183, %2 : vector<128x16xf32>
    %cst_36 = arith.constant dense<0.000000e+00> : vector<128xf32>
    %185 = vector.multi_reduction <add>, %184, %cst_36 [1] : vector<128x16xf32> to vector<128xf32>
    %186 = vector.shape_cast %185 : vector<128xf32> to vector<128x1xf32>
    %cst_37 = arith.constant 1.000000e-16 : f32
    %187 = vector.broadcast %cst_37 : f32 to vector<128x1xf32>
    %188 = arith.addf %186, %187 : vector<128x1xf32>
    %189 = vector.broadcast %188 : vector<128x1xf32> to vector<128x16xf32>
    %190 = arith.divf %184, %189 : vector<128x16xf32>
    %cst_38 = arith.constant dense<0.000000e+00> : vector<128x384xf32>
    %191 = tpu.matmul %190, %126, %cst_38 {dimension_numbers = #tpu.dot_dimension_numbers<[1], [0], [0], [1], [0, 0, 1, 1], [], []>} : vector<128x16xf32>, vector<16x384xf32>, vector<128x384xf32> -> vector<128x384xf32>
    %192 = vector.extract_strided_slice %191 {offsets = [0, 0], sizes = [16, 384], strides = [1, 1]} : vector<128x384xf32> to vector<16x384xf32>
    %193 = vector.extract_strided_slice %124 {offsets = [0, 0], sizes = [1, 384], strides = [1, 1]} : vector<8x384xf32> to vector<1x384xf32>
    %194 = vector.broadcast %193 : vector<1x384xf32> to vector<16x384xf32>
    %195 = arith.mulf %192, %194 : vector<16x384xf32>
    %196 = vector.extract_strided_slice %191 {offsets = [16, 0], sizes = [16, 384], strides = [1, 1]} : vector<128x384xf32> to vector<16x384xf32>
    %197 = vector.extract_strided_slice %124 {offsets = [1, 0], sizes = [1, 384], strides = [1, 1]} : vector<8x384xf32> to vector<1x384xf32>
    %198 = vector.broadcast %197 : vector<1x384xf32> to vector<16x384xf32>
    %199 = arith.mulf %196, %198 : vector<16x384xf32>
    %200 = arith.addf %195, %199 : vector<16x384xf32>
    %201 = vector.extract_strided_slice %191 {offsets = [32, 0], sizes = [16, 384], strides = [1, 1]} : vector<128x384xf32> to vector<16x384xf32>
    %202 = vector.extract_strided_slice %124 {offsets = [2, 0], sizes = [1, 384], strides = [1, 1]} : vector<8x384xf32> to vector<1x384xf32>
    %203 = vector.broadcast %202 : vector<1x384xf32> to vector<16x384xf32>
    %204 = arith.mulf %201, %203 : vector<16x384xf32>
    %205 = arith.addf %200, %204 : vector<16x384xf32>
    %206 = vector.extract_strided_slice %191 {offsets = [48, 0], sizes = [16, 384], strides = [1, 1]} : vector<128x384xf32> to vector<16x384xf32>
    %207 = vector.extract_strided_slice %124 {offsets = [3, 0], sizes = [1, 384], strides = [1, 1]} : vector<8x384xf32> to vector<1x384xf32>
    %208 = vector.broadcast %207 : vector<1x384xf32> to vector<16x384xf32>
    %209 = arith.mulf %206, %208 : vector<16x384xf32>
    %210 = arith.addf %205, %209 : vector<16x384xf32>
    %211 = vector.extract_strided_slice %191 {offsets = [64, 0], sizes = [16, 384], strides = [1, 1]} : vector<128x384xf32> to vector<16x384xf32>
    %212 = vector.extract_strided_slice %124 {offsets = [4, 0], sizes = [1, 384], strides = [1, 1]} : vector<8x384xf32> to vector<1x384xf32>
    %213 = vector.broadcast %212 : vector<1x384xf32> to vector<16x384xf32>
    %214 = arith.mulf %211, %213 : vector<16x384xf32>
    %215 = arith.addf %210, %214 : vector<16x384xf32>
    %216 = vector.extract_strided_slice %191 {offsets = [80, 0], sizes = [16, 384], strides = [1, 1]} : vector<128x384xf32> to vector<16x384xf32>
    %217 = vector.extract_strided_slice %124 {offsets = [5, 0], sizes = [1, 384], strides = [1, 1]} : vector<8x384xf32> to vector<1x384xf32>
    %218 = vector.broadcast %217 : vector<1x384xf32> to vector<16x384xf32>
    %219 = arith.mulf %216, %218 : vector<16x384xf32>
    %220 = arith.addf %215, %219 : vector<16x384xf32>
    %221 = vector.extract_strided_slice %191 {offsets = [96, 0], sizes = [16, 384], strides = [1, 1]} : vector<128x384xf32> to vector<16x384xf32>
    %222 = vector.extract_strided_slice %124 {offsets = [6, 0], sizes = [1, 384], strides = [1, 1]} : vector<8x384xf32> to vector<1x384xf32>
    %223 = vector.broadcast %222 : vector<1x384xf32> to vector<16x384xf32>
    %224 = arith.mulf %221, %223 : vector<16x384xf32>
    %225 = arith.addf %220, %224 : vector<16x384xf32>
    %226 = vector.extract_strided_slice %191 {offsets = [112, 0], sizes = [16, 384], strides = [1, 1]} : vector<128x384xf32> to vector<16x384xf32>
    %227 = vector.extract_strided_slice %124 {offsets = [7, 0], sizes = [1, 384], strides = [1, 1]} : vector<8x384xf32> to vector<1x384xf32>
    %228 = vector.broadcast %227 : vector<1x384xf32> to vector<16x384xf32>
    %229 = arith.mulf %226, %228 : vector<16x384xf32>
    %230 = arith.addf %225, %229 : vector<16x384xf32>
    %231 = vector.broadcast %123 : vector<1x384xf32> to vector<16x384xf32>
    %232 = arith.addf %230, %231 : vector<16x384xf32>
    %cst_39 = arith.constant 0.000000e+00 : f32
    %233 = vector.broadcast %cst_39 : f32 to vector<16x384xf32>
    %234 = arith.maximumf %232, %233 : vector<16x384xf32>
    %c0_40 = arith.constant 0 : index
    %c0_41 = arith.constant 0 : index
    %235 = vector.load %arg10[%c0_40, %c0_41] : memref<384x32xf32, #tpu.memory_space<vmem>>, vector<384x32xf32>
    %c0_42 = arith.constant 0 : index
    %c0_43 = arith.constant 0 : index
    %236 = vector.load %arg11[%c0_42, %c0_43] : memref<32x2xf32, #tpu.memory_space<vmem>>, vector<32x2xf32>
    %c0_44 = arith.constant 0 : index
    %c0_45 = arith.constant 0 : index
    %237 = vector.load %arg12[%c0_44, %c0_45] : memref<1x16xf32, #tpu.memory_space<vmem>>, vector<1x16xf32>
    %c0_46 = arith.constant 0 : index
    %c0_47 = arith.constant 0 : index
    %238 = vector.load %arg13[%c0_46, %c0_47] : memref<1x16xf32, #tpu.memory_space<vmem>>, vector<1x16xf32>
    %cst_48 = arith.constant dense<0.000000e+00> : vector<16x32xf32>
    %239 = tpu.matmul %234, %235, %cst_48 {dimension_numbers = #tpu.dot_dimension_numbers<[1], [0], [0], [1], [0, 0, 1, 1], [], []>} : vector<16x384xf32>, vector<384x32xf32>, vector<16x32xf32> -> vector<16x32xf32>
    %240 = vector.extract_strided_slice %239 {offsets = [0, 0], sizes = [16, 16], strides = [1, 1]} : vector<16x32xf32> to vector<16x16xf32>
    %cst_49 = arith.constant dense<0.000000e+00> : vector<16x2xf32>
    %241 = tpu.matmul %239, %236, %cst_49 {dimension_numbers = #tpu.dot_dimension_numbers<[1], [0], [0], [1], [0, 0, 1, 1], [], []>} : vector<16x32xf32>, vector<32x2xf32>, vector<16x2xf32> -> vector<16x2xf32>
    %242 = vector.extract_strided_slice %241 {offsets = [0, 0], sizes = [16, 1], strides = [1, 1]} : vector<16x2xf32> to vector<16x1xf32>
    %243 = tpu.transpose %242, [1, 0] : vector<16x1xf32> -> vector<1x16xf32>
    %244 = vector.extract_strided_slice %241 {offsets = [0, 1], sizes = [16, 1], strides = [1, 1]} : vector<16x2xf32> to vector<16x1xf32>
    %245 = vector.broadcast %244 : vector<16x1xf32> to vector<16x16xf32>
    %246 = vector.broadcast %243 : vector<1x16xf32> to vector<16x16xf32>
    %247 = arith.addf %245, %246 : vector<16x16xf32>
    %cst_50 = arith.constant 0.000000e+00 : f32
    %248 = vector.broadcast %cst_50 : f32 to vector<16x16xf32>
    %249 = arith.cmpf oge, %247, %248 : vector<16x16xf32>
    %cst_51 = arith.constant 2.000000e-01 : f32
    %250 = vector.broadcast %cst_51 : f32 to vector<16x16xf32>
    %251 = arith.mulf %250, %247 : vector<16x16xf32>
    %252 = arith.select %249, %247, %251 : vector<16x16xi1>, vector<16x16xf32>
    %cst_52 = arith.constant -1.000000e+30 : f32
    %253 = vector.broadcast %cst_52 : f32 to vector<16x16xf32>
    %254 = arith.select %6, %252, %253 : vector<16x16xi1>, vector<16x16xf32>
    %cst_53 = arith.constant dense<0xFF800000> : vector<16xf32>
    %255 = vector.multi_reduction <maximumf>, %254, %cst_53 [1] : vector<16x16xf32> to vector<16xf32>
    %256 = vector.shape_cast %255 : vector<16xf32> to vector<16x1xf32>
    %257 = vector.broadcast %256 : vector<16x1xf32> to vector<16x16xf32>
    %258 = arith.subf %254, %257 : vector<16x16xf32>
    %259 = math.exp %258 : vector<16x16xf32>
    %260 = arith.mulf %259, %1 : vector<16x16xf32>
    %cst_54 = arith.constant dense<0.000000e+00> : vector<16xf32>
    %261 = vector.multi_reduction <add>, %260, %cst_54 [1] : vector<16x16xf32> to vector<16xf32>
    %262 = vector.shape_cast %261 : vector<16xf32> to vector<16x1xf32>
    %cst_55 = arith.constant 1.000000e-16 : f32
    %263 = vector.broadcast %cst_55 : f32 to vector<16x1xf32>
    %264 = arith.addf %262, %263 : vector<16x1xf32>
    %265 = vector.broadcast %264 : vector<16x1xf32> to vector<16x16xf32>
    %266 = arith.divf %260, %265 : vector<16x16xf32>
    %cst_56 = arith.constant dense<0.000000e+00> : vector<16x16xf32>
    %267 = tpu.matmul %266, %240, %cst_56 {dimension_numbers = #tpu.dot_dimension_numbers<[1], [0], [0], [1], [0, 0, 1, 1], [], []>} : vector<16x16xf32>, vector<16x16xf32>, vector<16x16xf32> -> vector<16x16xf32>
    %268 = vector.broadcast %238 : vector<1x16xf32> to vector<16x16xf32>
    %269 = arith.mulf %267, %268 : vector<16x16xf32>
    %270 = vector.broadcast %237 : vector<1x16xf32> to vector<16x16xf32>
    %271 = arith.addf %269, %270 : vector<16x16xf32>
    %c0_57 = arith.constant 0 : index
    %c0_58 = arith.constant 0 : index
    %272 = vector.load %arg14[%c0_57, %c0_58] : memref<16x16xf32, #tpu.memory_space<vmem>>, vector<16x16xf32>
    tpu.vector_store %arg14[%c0_57, %c0_58], %271 {strides = array<i32>} : memref<16x16xf32, #tpu.memory_space<vmem>>, vector<16x16xf32>,
    return
  }
}

</mosaic_0001>

<llo_original>
// kernel: tpu_custom_call.1
$region0: #{tpu_custom_call.1}
  #allocation0 [shape = 'u32[]', space=smem, size = 0x4, offset = 0x4, fixed_abs, tag = 'smem constant byte address 0x4 - core index']
  #allocation1 [shape = 'u32[72,128]{1,0:T(1,128)}', space=vmem, size = 0x9000, scoped, tag = 'internal scratch']
  %s0 = inlined_call_operand.vmem [shape: f32[16,32], index: 0, kind: input, shape index: {}]
  %s1 = inlined_call_operand.vmem [shape: f32[16,16], index: 1, kind: input, shape index: {}]
  %s2 = inlined_call_operand.vmem [shape: f32[32,128], index: 2, kind: input, shape index: {}]
  %s3 = inlined_call_operand.vmem [shape: f32[128,16], index: 3, kind: input, shape index: {}]
  %s4 = inlined_call_operand.vmem [shape: f32[1,64], index: 4, kind: input, shape index: {}]
  %s5 = inlined_call_operand.vmem [shape: f32[8,64], index: 5, kind: input, shape index: {}]
  %s6 = inlined_call_operand.vmem [shape: f32[64,768], index: 6, kind: input, shape index: {}]
  %s7 = inlined_call_operand.vmem [shape: f32[768,16], index: 7, kind: input, shape index: {}]
  %s8 = inlined_call_operand.vmem [shape: f32[1,384], index: 8, kind: input, shape index: {}]
  %s9 = inlined_call_operand.vmem [shape: f32[8,384], index: 9, kind: input, shape index: {}]
  %s10 = inlined_call_operand.vmem [shape: f32[384,32], index: 10, kind: input, shape index: {}]
  %s11 = inlined_call_operand.vmem [shape: f32[32,2], index: 11, kind: input, shape index: {}]
  %s12 = inlined_call_operand.vmem [shape: f32[1,16], index: 12, kind: input, shape index: {}]
  %s13 = inlined_call_operand.vmem [shape: f32[1,16], index: 13, kind: input, shape index: {}]
  %s14 = inlined_call_operand.hbm [shape: f32[16,16], index: 14, kind: output, shape index: {}]
  %s15 = sld [smem:[#allocation0]]
  $region66: #{tpu_custom_call.1} parent=0
    _
  %s17 = ssub.s32 1, %s15
  %s18 = scalar_select 0, %s17, %s15
  $region1: #{tpu_custom_call.1} parent=0
    #allocation2 [shape = 'u8[8192]{0}', space=vmem, size = 0x2000, scoped, tag = 'output window, operand 0, single buffered']
    #allocation3 [shape = 's32[1]{0}', space=sflag, size = 0x4, scoped, tag = 'scoped memory for tpu_custom_call.1']
    %19 = vsyncpa [#allocation3], 0
    // Predicated region
    $region2: #{tpu_custom_call.1} parent=1 // pred_check
      _
    $region3: #{tpu_custom_call.1} parent=1 // pred_check_branch
      %21 = sbr.rel (0) target = $region5
    $region4: #{tpu_custom_call.1} parent=1 // pred_region
      _
    $region5: #{tpu_custom_call.1} parent=1 // pred_fallthru
      _
    // Predicated region
    $region6: #{tpu_custom_call.1} parent=1 // pred_check
      _
    $region7: #{tpu_custom_call.1} parent=1 // pred_check_branch
      %23 = sbr.rel (0) target = $region9
    $region8: #{tpu_custom_call.1} parent=1 // pred_region
      _
    $region9: #{tpu_custom_call.1} parent=1 // pred_fallthru
      _
    // Predicated region
    $region10: #{tpu_custom_call.1} parent=1 // pred_check
      _
    $region11: #{tpu_custom_call.1} parent=1 // pred_check_branch
      %25 = sbr.rel (0) target = $region13
    $region12: #{tpu_custom_call.1} parent=1 // pred_region
      _
    $region13: #{tpu_custom_call.1} parent=1 // pred_fallthru
      _
    // Predicated region
    $region14: #{tpu_custom_call.1} parent=1 // pred_check
      _
    $region15: #{tpu_custom_call.1} parent=1 // pred_check_branch
      %27 = sbr.rel (0) target = $region17
    $region16: #{tpu_custom_call.1} parent=1 // pred_region
      _
    $region17: #{tpu_custom_call.1} parent=1 // pred_fallthru
      _
    // Predicated region
    $region18: #{tpu_custom_call.1} parent=1 // pred_check
      _
    $region19: #{tpu_custom_call.1} parent=1 // pred_check_branch
      %29 = sbr.rel (0) target = $region21
    $region20: #{tpu_custom_call.1} parent=1 // pred_region
      _
    $region21: #{tpu_custom_call.1} parent=1 // pred_fallthru
      _
    // Predicated region
    $region22: #{tpu_custom_call.1} parent=1 // pred_check
      _
    $region23: #{tpu_custom_call.1} parent=1 // pred_check_branch
      %31 = sbr.rel (0) target = $region25
    $region24: #{tpu_custom_call.1} parent=1 // pred_region
      _
    $region25: #{tpu_custom_call.1} parent=1 // pred_fallthru
      _
    // Predicated region
    $region26: #{tpu_custom_call.1} parent=1 // pred_check
      _
    $region27: #{tpu_custom_call.1} parent=1 // pred_check_branch
      %33 = sbr.rel (0) target = $region29
    $region28: #{tpu_custom_call.1} parent=1 // pred_region
      _
    $region29: #{tpu_custom_call.1} parent=1 // pred_fallthru
      _
    // Predicated region
    $region30: #{tpu_custom_call.1} parent=1 // pred_check
      _
    $region31: #{tpu_custom_call.1} parent=1 // pred_check_branch
      %35 = sbr.rel (0) target = $region33
    $region32: #{tpu_custom_call.1} parent=1 // pred_region
      _
    $region33: #{tpu_custom_call.1} parent=1 // pred_fallthru
      _
    // Predicated region
    $region34: #{tpu_custom_call.1} parent=1 // pred_check
      _
    $region35: #{tpu_custom_call.1} parent=1 // pred_check_branch
      %37 = sbr.rel (0) target = $region37
    $region36: #{tpu_custom_call.1} parent=1 // pred_region
      _
    $region37: #{tpu_custom_call.1} parent=1 // pred_fallthru
      _
    // Predicated region
    $region38: #{tpu_custom_call.1} parent=1 // pred_check
      _
    $region39: #{tpu_custom_call.1} parent=1 // pred_check_branch
      %39 = sbr.rel (0) target = $region41
    $region40: #{tpu_custom_call.1} parent=1 // pred_region
      _
    $region41: #{tpu_custom_call.1} parent=1 // pred_fallthru
      _
    // Predicated region
    $region42: #{tpu_custom_call.1} parent=1 // pred_check
      _
    $region43: #{tpu_custom_call.1} parent=1 // pred_check_branch
      %41 = sbr.rel (0) target = $region45
    $region44: #{tpu_custom_call.1} parent=1 // pred_region
      _
    $region45: #{tpu_custom_call.1} parent=1 // pred_fallthru
      _
    // Predicated region
    $region46: #{tpu_custom_call.1} parent=1 // pred_check
      _
    $region47: #{tpu_custom_call.1} parent=1 // pred_check_branch
      %43 = sbr.rel (0) target = $region49
    $region48: #{tpu_custom_call.1} parent=1 // pred_region
      _
    $region49: #{tpu_custom_call.1} parent=1 // pred_fallthru
      _
    // Predicated region
    $region50: #{tpu_custom_call.1} parent=1 // pred_check
      _
    $region51: #{tpu_custom_call.1} parent=1 // pred_check_branch
      %45 = sbr.rel (0) target = $region53
    $region52: #{tpu_custom_call.1} parent=1 // pred_region
      _
    $region53: #{tpu_custom_call.1} parent=1 // pred_fallthru
      _
    // Predicated region
    $region54: #{tpu_custom_call.1} parent=1 // pred_check
      _
    $region55: #{tpu_custom_call.1} parent=1 // pred_check_branch
      %47 = sbr.rel (0) target = $region57
    $region56: #{tpu_custom_call.1} parent=1 // pred_region
      _
    $region57: #{tpu_custom_call.1} parent=1 // pred_fallthru
      _
    %v48 = vld [vmem:[%s0] sm:$0xff]
    %v49 = vld [vmem:[%s0 + $0x8] sm:$0xff]
    %v50 = vld [vmem:[%s1] sm:$0xff]
    %v51 = vld [vmem:[%s1 + $0x8] sm:$0xff]
    %vm52 = vcmp.gt.f32.partialorder %v50, 0.0
    %vm53 = vcmp.gt.f32.partialorder %v51, 0.0
    %v54 = vld [vmem:[%s2] sm:$0xff]
    %v55 = vld [vmem:[%s2 + $0x8] sm:$0xff]
    %v56 = vld [vmem:[%s2 + $0x10] sm:$0xff]
    %v57 = vld [vmem:[%s2 + $0x18] sm:$0xff]
    %v58 = vld [vmem:[%s3] sm:$0xff]
    %v59 = vld [vmem:[%s3 + $0x8] sm:$0xff]
    %v60 = vld [vmem:[%s3 + $0x10] sm:$0xff]
    %v61 = vld [vmem:[%s3 + $0x18] sm:$0xff]
    %v62 = vld [vmem:[%s3 + $0x20] sm:$0xff]
    %v63 = vld [vmem:[%s3 + $0x28] sm:$0xff]
    %v64 = vld [vmem:[%s3 + $0x30] sm:$0xff]
    %v65 = vld [vmem:[%s3 + $0x38] sm:$0xff]
    %v66 = vld [vmem:[%s3 + $0x40] sm:$0xff]
    %v67 = vld [vmem:[%s3 + $0x48] sm:$0xff]
    %v68 = vld [vmem:[%s3 + $0x50] sm:$0xff]
    %v69 = vld [vmem:[%s3 + $0x58] sm:$0xff]
    %v70 = vld [vmem:[%s3 + $0x60] sm:$0xff]
    %v71 = vld [vmem:[%s3 + $0x68] sm:$0xff]
    %v72 = vld [vmem:[%s3 + $0x70] sm:$0xff]
    %v73 = vld [vmem:[%s3 + $0x78] sm:$0xff]
    %v74 = vld [vmem:[%s4] sm:$0x1]
    %v75 = vld [vmem:[%s5] sm:$0xff]
    %vm76 = vcmask 261120
    %v78 = vsel %vm76, %v48, 0
    %v81 = vsel %vm76, %v49, 0
    %83 = vmatpush.msra.mxu0 0.0
    %84 = vmatpush.msra.mxu0 0.0
    %85 = vmatpush.msra.mxu0 0.0
    %86 = vmatpush.msra.mxu0 0.0
    %87 = vmatpush.msra.mxu0 0.0
    %88 = vmatpush.msra.mxu0 0.0
    %89 = vmatpush.msra.mxu0 0.0
    %90 = vmatpush.msra.mxu0 0.0
    %91 = vmatpush.msra.mxu0 0.0
    %92 = vmatpush.msra.mxu0 0.0
    %93 = vmatpush.msra.mxu0 0.0
    %94 = vmatpush.msra.mxu0 0.0
    %95 = vmatpush.msra.mxu0 %v57
    %96 = vmatpush.msra.mxu0 %v56
    %97 = vmatpush.msra.mxu0 %v55
    %98 = vmatpush.msra.mxu0 %v54
    %99 = vmatmul.f32.gmra.mxu0 %v78
    %v100 = vpop.f32.mrf.mxu0
    %v101 = vadd.f32 0.0, %v100
    %102 = vmatmul.f32.gmra.mxu0 %v81
    %v103 = vpop.f32.mrf.mxu0
    %v104 = vadd.f32 0.0, %v103
    %105 = vdwg.mxu0
    %106 = vmatpush.msra.mxu0 %v73
    %107 = vmatpush.msra.mxu0 %v72
    %108 = vmatpush.msra.mxu0 %v71
    %109 = vmatpush.msra.mxu0 %v70
    %110 = vmatpush.msra.mxu0 %v69
    %111 = vmatpush.msra.mxu0 %v68
    %112 = vmatpush.msra.mxu0 %v67
    %113 = vmatpush.msra.mxu0 %v66
    %114 = vmatpush.msra.mxu0 %v65
    %115 = vmatpush.msra.mxu0 %v64
    %116 = vmatpush.msra.mxu0 %v63
    %117 = vmatpush.msra.mxu0 %v62
    %118 = vmatpush.msra.mxu0 %v61
    %119 = vmatpush.msra.mxu0 %v60
    %120 = vmatpush.msra.mxu0 %v59
    %121 = vmatpush.msra.mxu0 %v58
    %122 = vmatmul.f32.gmra.mxu0 %v101
    %v123 = vpop.f32.mrf.mxu0
    %v124 = vadd.f32 0.0, %v123
    %125 = vmatmul.f32.gmra.mxu0 %v104
    %v126 = vpop.f32.mrf.mxu0
    %v127 = vadd.f32 0.0, %v126
    %128 = vdwg.mxu0
    %129 = vxpose.xlu0.b32.start [1/16] %v124, 128
    %130 = vxpose.xlu0.b32.cont [2/16] %v127, 128
    %131 = vxpose.xlu0.b32.cont [3/16] 0.0, 128
    %132 = vxpose.xlu0.b32.cont [4/16] 0.0, 128
    %133 = vxpose.xlu0.b32.cont [5/16] 0.0, 128
    %134 = vxpose.xlu0.b32.cont [6/16] 0.0, 128
    %135 = vxpose.xlu0.b32.cont [7/16] 0.0, 128
    %136 = vxpose.xlu0.b32.cont [8/16] 0.0, 128
    %137 = vxpose.xlu0.b32.cont [9/16] 0.0, 128
    %138 = vxpose.xlu0.b32.cont [10/16] 0.0, 128
    %139 = vxpose.xlu0.b32.cont [11/16] 0.0, 128
    %140 = vxpose.xlu0.b32.cont [12/16] 0.0, 128
    %141 = vxpose.xlu0.b32.cont [13/16] 0.0, 128
    %142 = vxpose.xlu0.b32.cont [14/16] 0.0, 128
    %143 = vxpose.xlu0.b32.cont [15/16] 0.0, 128
    %144 = vxpose.xlu0.b32.end [16/16] 0.0, 128
    %v145 = vpop.trf.xlu0
    %v146 = vpop.trf.xlu0
    %v147 = vpop.trf.xlu0
    %v148 = vpop.trf.xlu0
    %v149 = vpop.trf.xlu0
    %v150 = vpop.trf.xlu0
    %v151 = vpop.trf.xlu0
    %v152 = vpop.trf.xlu0
    %v153 = vpop.trf.xlu0
    %v154 = vpop.trf.xlu0
    %v155 = vpop.trf.xlu0
    %v156 = vpop.trf.xlu0
    %v157 = vpop.trf.xlu0
    %v158 = vpop.trf.xlu0
    %v159 = vpop.trf.xlu0
    %v160 = vpop.trf.xlu0
    %162 = vset.pattern.permute.xlu0 8
    %163 = vperm.xlu0 %162, %v124
    %v164 = vpop.permute.xlu0 %163
    %167 = vset.pattern.permute.xlu0 8
    %168 = vperm.xlu0 %167, %v127
    %v169 = vpop.permute.xlu0 %168
    %v171 = vperm.slane %v145, 0
    %v172 = vadd.f32 %v164, %v171
    %v173 = vadd.f32 %v169, %v171
    %174 = vset.pattern.permute.xlu0 9
    %175 = vperm.xlu0 %174, %v124
    %v176 = vpop.permute.xlu0 %175
    %178 = vset.pattern.permute.xlu0 9
    %179 = vperm.xlu0 %178, %v127
    %v180 = vpop.permute.xlu0 %179
    %v182 = vperm.slane %v145, 1
    %v183 = vadd.f32 %v176, %v182
    %v184 = vadd.f32 %v180, %v182
    %185 = vset.pattern.permute.xlu0 10
    %186 = vperm.xlu0 %185, %v124
    %v187 = vpop.permute.xlu0 %186
    %189 = vset.pattern.permute.xlu0 10
    %190 = vperm.xlu0 %189, %v127
    %v191 = vpop.permute.xlu0 %190
    %v193 = vperm.slane %v145, 2
    %v194 = vadd.f32 %v187, %v193
    %v195 = vadd.f32 %v191, %v193
    %196 = vset.pattern.permute.xlu0 11
    %197 = vperm.xlu0 %196, %v124
    %v198 = vpop.permute.xlu0 %197
    %200 = vset.pattern.permute.xlu0 11
    %201 = vperm.xlu0 %200, %v127
    %v202 = vpop.permute.xlu0 %201
    %v204 = vperm.slane %v145, 3
    %v205 = vadd.f32 %v198, %v204
    %v206 = vadd.f32 %v202, %v204
    %207 = vset.pattern.permute.xlu0 12
    %208 = vperm.xlu0 %207, %v124
    %v209 = vpop.permute.xlu0 %208
    %211 = vset.pattern.permute.xlu0 12
    %212 = vperm.xlu0 %211, %v127
    %v213 = vpop.permute.xlu0 %212
    %v215 = vperm.slane %v145, 4
    %v216 = vadd.f32 %v209, %v215
    %v217 = vadd.f32 %v213, %v215
    %218 = vset.pattern.permute.xlu0 13
    %219 = vperm.xlu0 %218, %v124
    %v220 = vpop.permute.xlu0 %219
    %222 = vset.pattern.permute.xlu0 13
    %223 = vperm.xlu0 %222, %v127
    %v224 = vpop.permute.xlu0 %223
    %v226 = vperm.slane %v145, 5
    %v227 = vadd.f32 %v220, %v226
    %v228 = vadd.f32 %v224, %v226
    %229 = vset.pattern.permute.xlu0 14
    %230 = vperm.xlu0 %229, %v124
    %v231 = vpop.permute.xlu0 %230
    %233 = vset.pattern.permute.xlu0 14
    %234 = vperm.xlu0 %233, %v127
    %v235 = vpop.permute.xlu0 %234
    %v237 = vperm.slane %v145, 6
    %v238 = vadd.f32 %v231, %v237
    %v239 = vadd.f32 %v235, %v237
    %240 = vset.pattern.permute.xlu0 15
    %241 = vperm.xlu0 %240, %v124
    %v242 = vpop.permute.xlu0 %241
    %244 = vset.pattern.permute.xlu0 15
    %245 = vperm.xlu0 %244, %v127
    %v246 = vpop.permute.xlu0 %245
    %v248 = vperm.slane %v145, 7
    %v249 = vadd.f32 %v242, %v248
    %v250 = vadd.f32 %v246, %v248
    %vm251 = vcmp.ge.f32.partialorder %v172, 0.0
    %vm252 = vcmp.ge.f32.partialorder %v173, 0.0
    %vm253 = vcmp.ge.f32.partialorder %v183, 0.0
    %vm254 = vcmp.ge.f32.partialorder %v184, 0.0
    %vm255 = vcmp.ge.f32.partialorder %v194, 0.0
    %vm256 = vcmp.ge.f32.partialorder %v195, 0.0
    %vm257 = vcmp.ge.f32.partialorder %v205, 0.0
    %vm258 = vcmp.ge.f32.partialorder %v206, 0.0
    %vm259 = vcmp.ge.f32.partialorder %v216, 0.0
    %vm260 = vcmp.ge.f32.partialorder %v217, 0.0
    %vm261 = vcmp.ge.f32.partialorder %v227, 0.0
    %vm262 = vcmp.ge.f32.partialorder %v228, 0.0
    %vm263 = vcmp.ge.f32.partialorder %v238, 0.0
    %vm264 = vcmp.ge.f32.partialorder %v239, 0.0
    %vm265 = vcmp.ge.f32.partialorder %v249, 0.0
    %vm266 = vcmp.ge.f32.partialorder %v250, 0.0
    %v267 = vmul.f32 %v172, 0.2
    %v268 = vmul.f32 %v173, 0.2
    %v269 = vmul.f32 %v183, 0.2
    %v270 = vmul.f32 %v184, 0.2
    %v271 = vmul.f32 %v194, 0.2
    %v272 = vmul.f32 %v195, 0.2
    %v273 = vmul.f32 %v205, 0.2
    %v274 = vmul.f32 %v206, 0.2
    %v275 = vmul.f32 %v216, 0.2
    %v276 = vmul.f32 %v217, 0.2
    %v277 = vmul.f32 %v227, 0.2
    %v278 = vmul.f32 %v228, 0.2
    %v279 = vmul.f32 %v238, 0.2
    %v280 = vmul.f32 %v239, 0.2
    %v281 = vmul.f32 %v249, 0.2
    %v282 = vmul.f32 %v250, 0.2
    %v283 = vsel %vm251, %v172, %v267
    %v284 = vsel %vm252, %v173, %v268
    %v285 = vsel %vm253, %v183, %v269
    %v286 = vsel %vm254, %v184, %v270
    %v287 = vsel %vm255, %v194, %v271
    %v288 = vsel %vm256, %v195, %v272
    %v289 = vsel %vm257, %v205, %v273
    %v290 = vsel %vm258, %v206, %v274
    %v291 = vsel %vm259, %v216, %v275
    %v292 = vsel %vm260, %v217, %v276
    %v293 = vsel %vm261, %v227, %v277
    %v294 = vsel %vm262, %v228, %v278
    %v295 = vsel %vm263, %v238, %v279
    %v296 = vsel %vm264, %v239, %v280
    %v297 = vsel %vm265, %v249, %v281
    %v298 = vsel %vm266, %v250, %v282
    %v299 = vsel %vm52, %v283, -1e+30
    %v300 = vsel %vm53, %v284, -1e+30
    %v301 = vsel %vm52, %v285, -1e+30
    %v302 = vsel %vm53, %v286, -1e+30
    %v303 = vsel %vm52, %v287, -1e+30
    %v304 = vsel %vm53, %v288, -1e+30
    %v305 = vsel %vm52, %v289, -1e+30
    %v306 = vsel %vm53, %v290, -1e+30
    %v307 = vsel %vm52, %v291, -1e+30
    %v308 = vsel %vm53, %v292, -1e+30
    %v309 = vsel %vm52, %v293, -1e+30
    %v310 = vsel %vm53, %v294, -1e+30
    %v311 = vsel %vm52, %v295, -1e+30
    %v312 = vsel %vm53, %v296, -1e+30
    %v313 = vsel %vm52, %v297, -1e+30
    %v314 = vsel %vm53, %v298, -1e+30
    %vm315 = vcmask 130048
    %v316 = vsel %vm315, %v299, -inf
    %317 = vmax.xlane.f32.xlu0 %v316
    %v318 = vpop.xlane.xlu0 %317
    %v319 = vsel %vm315, %v300, -inf
    %320 = vmax.xlane.f32.xlu0 %v319
    %v321 = vpop.xlane.xlu0 %320
    %v322 = vsel %vm315, %v301, -inf
    %323 = vmax.xlane.f32.xlu0 %v322
    %v324 = vpop.xlane.xlu0 %323
    %v325 = vsel %vm315, %v302, -inf
    %326 = vmax.xlane.f32.xlu0 %v325
    %v327 = vpop.xlane.xlu0 %326
    %v328 = vsel %vm315, %v303, -inf
    %329 = vmax.xlane.f32.xlu0 %v328
    %v330 = vpop.xlane.xlu0 %329
    %v331 = vsel %vm315, %v304, -inf
    %332 = vmax.xlane.f32.xlu0 %v331
    %v333 = vpop.xlane.xlu0 %332
    %v334 = vsel %vm315, %v305, -inf
    %335 = vmax.xlane.f32.xlu0 %v334
    %v336 = vpop.xlane.xlu0 %335
    %v337 = vsel %vm315, %v306, -inf
    %338 = vmax.xlane.f32.xlu0 %v337
    %v339 = vpop.xlane.xlu0 %338
    %v340 = vsel %vm315, %v307, -inf
    %341 = vmax.xlane.f32.xlu0 %v340
    %v342 = vpop.xlane.xlu0 %341
    %v343 = vsel %vm315, %v308, -inf
    %344 = vmax.xlane.f32.xlu0 %v343
    %v345 = vpop.xlane.xlu0 %344
    %v346 = vsel %vm315, %v309, -inf
    %347 = vmax.xlane.f32.xlu0 %v346
    %v348 = vpop.xlane.xlu0 %347
    %v349 = vsel %vm315, %v310, -inf
    %350 = vmax.xlane.f32.xlu0 %v349
    %v351 = vpop.xlane.xlu0 %350
    %v352 = vsel %vm315, %v311, -inf
    %353 = vmax.xlane.f32.xlu0 %v352
    %v354 = vpop.xlane.xlu0 %353
    %v355 = vsel %vm315, %v312, -inf
    %356 = vmax.xlane.f32.xlu0 %v355
    %v357 = vpop.xlane.xlu0 %356
    %v358 = vsel %vm315, %v313, -inf
    %359 = vmax.xlane.f32.xlu0 %v358
    %v360 = vpop.xlane.xlu0 %359
    %v361 = vsel %vm315, %v314, -inf
    %362 = vmax.xlane.f32.xlu0 %v361
    %v363 = vpop.xlane.xlu0 %362
    %v364 = vsub.f32 %v299, %v318
    %v365 = vsub.f32 %v300, %v321
    %v366 = vsub.f32 %v301, %v324
    %v367 = vsub.f32 %v302, %v327
    %v368 = vsub.f32 %v303, %v330
    %v369 = vsub.f32 %v304, %v333
    %v370 = vsub.f32 %v305, %v336
    %v371 = vsub.f32 %v306, %v339
    %v372 = vsub.f32 %v307, %v342
    %v373 = vsub.f32 %v308, %v345
    %v374 = vsub.f32 %v309, %v348
    %v375 = vsub.f32 %v310, %v351
    %v376 = vsub.f32 %v311, %v354
    %v377 = vsub.f32 %v312, %v357
    %v378 = vsub.f32 %v313, %v360
    %v379 = vsub.f32 %v314, %v363
    %v380 = vmul.f32 %v364, 1.442695
    %v381 = vpow.pop %v380
    %v382 = vmul.f32 %v365, 1.442695
    %v383 = vpow.pop %v382
    %v384 = vmul.f32 %v366, 1.442695
    %v385 = vpow.pop %v384
    %v386 = vmul.f32 %v367, 1.442695
    %v387 = vpow.pop %v386
    %v388 = vmul.f32 %v368, 1.442695
    %v389 = vpow.pop %v388
    %v390 = vmul.f32 %v369, 1.442695
    %v391 = vpow.pop %v390
    %v392 = vmul.f32 %v370, 1.442695
    %v393 = vpow.pop %v392
    %v394 = vmul.f32 %v371, 1.442695
    %v395 = vpow.pop %v394
    %v396 = vmul.f32 %v372, 1.442695
    %v397 = vpow.pop %v396
    %v398 = vmul.f32 %v373, 1.442695
    %v399 = vpow.pop %v398
    %v400 = vmul.f32 %v374, 1.442695
    %v401 = vpow.pop %v400
    %v402 = vmul.f32 %v375, 1.442695
    %v403 = vpow.pop %v402
    %v404 = vmul.f32 %v376, 1.442695
    %v405 = vpow.pop %v404
    %v406 = vmul.f32 %v377, 1.442695
    %v407 = vpow.pop %v406
    %v408 = vmul.f32 %v378, 1.442695
    %v409 = vpow.pop %v408
    %v410 = vmul.f32 %v379, 1.442695
    %v411 = vpow.pop %v410
    %v412 = vmul.f32 %v381, %v50
    %v413 = vmul.f32 %v383, %v51
    %v414 = vmul.f32 %v385, %v50
    %v415 = vmul.f32 %v387, %v51
    %v416 = vmul.f32 %v389, %v50
    %v417 = vmul.f32 %v391, %v51
    %v418 = vmul.f32 %v393, %v50
    %v419 = vmul.f32 %v395, %v51
    %v420 = vmul.f32 %v397, %v50
    %v421 = vmul.f32 %v399, %v51
    %v422 = vmul.f32 %v401, %v50
    %v423 = vmul.f32 %v403, %v51
    %v424 = vmul.f32 %v405, %v50
    %v425 = vmul.f32 %v407, %v51
    %v426 = vmul.f32 %v409, %v50
    %v427 = vmul.f32 %v411, %v51
    %v428 = vsel %vm315, %v412, 0.0
    %429 = vadd.xlane.f32.xlu0 %v428
    %v430 = vpop.xlane.xlu0 %429
    %v431 = vsel %vm315, %v413, 0.0
    %432 = vadd.xlane.f32.xlu0 %v431
    %v433 = vpop.xlane.xlu0 %432
    %v434 = vsel %vm315, %v414, 0.0
    %435 = vadd.xlane.f32.xlu0 %v434
    %v436 = vpop.xlane.xlu0 %435
    %v437 = vsel %vm315, %v415, 0.0
    %438 = vadd.xlane.f32.xlu0 %v437
    %v439 = vpop.xlane.xlu0 %438
    %v440 = vsel %vm315, %v416, 0.0
    %441 = vadd.xlane.f32.xlu0 %v440
    %v442 = vpop.xlane.xlu0 %441
    %v443 = vsel %vm315, %v417, 0.0
    %444 = vadd.xlane.f32.xlu0 %v443
    %v445 = vpop.xlane.xlu0 %444
    %v446 = vsel %vm315, %v418, 0.0
    %447 = vadd.xlane.f32.xlu0 %v446
    %v448 = vpop.xlane.xlu0 %447
    %v449 = vsel %vm315, %v419, 0.0
    %450 = vadd.xlane.f32.xlu0 %v449
    %v451 = vpop.xlane.xlu0 %450
    %v452 = vsel %vm315, %v420, 0.0
    %453 = vadd.xlane.f32.xlu0 %v452
    %v454 = vpop.xlane.xlu0 %453
    %v455 = vsel %vm315, %v421, 0.0
    %456 = vadd.xlane.f32.xlu0 %v455
    %v457 = vpop.xlane.xlu0 %456
    %v458 = vsel %vm315, %v422, 0.0
    %459 = vadd.xlane.f32.xlu0 %v458
    %v460 = vpop.xlane.xlu0 %459
    %v461 = vsel %vm315, %v423, 0.0
    %462 = vadd.xlane.f32.xlu0 %v461
    %v463 = vpop.xlane.xlu0 %462
    %v464 = vsel %vm315, %v424, 0.0
    %465 = vadd.xlane.f32.xlu0 %v464
    %v466 = vpop.xlane.xlu0 %465
    %v467 = vsel %vm315, %v425, 0.0
    %468 = vadd.xlane.f32.xlu0 %v467
    %v469 = vpop.xlane.xlu0 %468
    %v470 = vsel %vm315, %v426, 0.0
    %471 = vadd.xlane.f32.xlu0 %v470
    %v472 = vpop.xlane.xlu0 %471
    %v473 = vsel %vm315, %v427, 0.0
    %474 = vadd.xlane.f32.xlu0 %v473
    %v475 = vpop.xlane.xlu0 %474
    %v476 = vadd.f32 %v430, 1e-16
    %v477 = vadd.f32 %v433, 1e-16
    %v478 = vadd.f32 %v436, 1e-16
    %v479 = vadd.f32 %v439, 1e-16
    %v480 = vadd.f32 %v442, 1e-16
    %v481 = vadd.f32 %v445, 1e-16
    %v482 = vadd.f32 %v448, 1e-16
    %v483 = vadd.f32 %v451, 1e-16
    %v484 = vadd.f32 %v454, 1e-16
    %v485 = vadd.f32 %v457, 1e-16
    %v486 = vadd.f32 %v460, 1e-16
    %v487 = vadd.f32 %v463, 1e-16
    %v488 = vadd.f32 %v466, 1e-16
    %v489 = vadd.f32 %v469, 1e-16
    %v490 = vadd.f32 %v472, 1e-16
    %v491 = vadd.f32 %v475, 1e-16
    %v492 = vrcp.pop %v476
    %v493 = vmul.f32 %v476, %v492
    %v494 = vsub.f32 1.0, %v493
    %v495 = vmul.f32 %v492, %v494
    %v496 = vadd.f32 %v492, %v495
    %vm497 = vweird.f32 %v476
    %vm498 = vweird.f32 %v492
    %vm499 = vmor %vm497, %vm498
    %v500 = vsel %vm499, %v492, %v496
    %v501 = vand.u32 2147483647, %v476
    %vm502 = vcmp.eq.f32.partialorder %v501, 8.507059e+37
    %v503 = vand.u32 %v476, 2147483648
    %v504 = vor.u32 1.1754944e-38, %v503
    %v505 = vsel %vm502, %v504, %v500
    %v506 = vmul.f32 %v412, %v505
    %v507 = vrcp.pop %v477
    %v508 = vmul.f32 %v477, %v507
    %v509 = vsub.f32 1.0, %v508
    %v510 = vmul.f32 %v507, %v509
    %v511 = vadd.f32 %v507, %v510
    %vm512 = vweird.f32 %v477
    %vm513 = vweird.f32 %v507
    %vm514 = vmor %vm512, %vm513
    %v515 = vsel %vm514, %v507, %v511
    %v516 = vand.u32 2147483647, %v477
    %vm517 = vcmp.eq.f32.partialorder %v516, 8.507059e+37
    %v518 = vand.u32 %v477, 2147483648
    %v519 = vor.u32 1.1754944e-38, %v518
    %v520 = vsel %vm517, %v519, %v515
    %v521 = vmul.f32 %v413, %v520
    %v522 = vrcp.pop %v478
    %v523 = vmul.f32 %v478, %v522
    %v524 = vsub.f32 1.0, %v523
    %v525 = vmul.f32 %v522, %v524
    %v526 = vadd.f32 %v522, %v525
    %vm527 = vweird.f32 %v478
    %vm528 = vweird.f32 %v522
    %vm529 = vmor %vm527, %vm528
    %v530 = vsel %vm529, %v522, %v526
    %v531 = vand.u32 2147483647, %v478
    %vm532 = vcmp.eq.f32.partialorder %v531, 8.507059e+37
    %v533 = vand.u32 %v478, 2147483648
    %v534 = vor.u32 1.1754944e-38, %v533
    %v535 = vsel %vm532, %v534, %v530
    %v536 = vmul.f32 %v414, %v535
    %v537 = vrcp.pop %v479
    %v538 = vmul.f32 %v479, %v537
    %v539 = vsub.f32 1.0, %v538
    %v540 = vmul.f32 %v537, %v539
    %v541 = vadd.f32 %v537, %v540
    %vm542 = vweird.f32 %v479
    %vm543 = vweird.f32 %v537
    %vm544 = vmor %vm542, %vm543
    %v545 = vsel %vm544, %v537, %v541
    %v546 = vand.u32 2147483647, %v479
    %vm547 = vcmp.eq.f32.partialorder %v546, 8.507059e+37
    %v548 = vand.u32 %v479, 2147483648
    %v549 = vor.u32 1.1754944e-38, %v548
    %v550 = vsel %vm547, %v549, %v545
    %v551 = vmul.f32 %v415, %v550
    %v552 = vrcp.pop %v480
    %v553 = vmul.f32 %v480, %v552
    %v554 = vsub.f32 1.0, %v553
    %v555 = vmul.f32 %v552, %v554
    %v556 = vadd.f32 %v552, %v555
    %vm557 = vweird.f32 %v480
    %vm558 = vweird.f32 %v552
    %vm559 = vmor %vm557, %vm558
    %v560 = vsel %vm559, %v552, %v556
    %v561 = vand.u32 2147483647, %v480
    %vm562 = vcmp.eq.f32.partialorder %v561, 8.507059e+37
    %v563 = vand.u32 %v480, 2147483648
    %v564 = vor.u32 1.1754944e-38, %v563
    %v565 = vsel %vm562, %v564, %v560
    %v566 = vmul.f32 %v416, %v565
    %v567 = vrcp.pop %v481
    %v568 = vmul.f32 %v481, %v567
    %v569 = vsub.f32 1.0, %v568
    %v570 = vmul.f32 %v567, %v569
    %v571 = vadd.f32 %v567, %v570
    %vm572 = vweird.f32 %v481
    %vm573 = vweird.f32 %v567
    %vm574 = vmor %vm572, %vm573
    %v575 = vsel %vm574, %v567, %v571
    %v576 = vand.u32 2147483647, %v481
    %vm577 = vcmp.eq.f32.partialorder %v576, 8.507059e+37
    %v578 = vand.u32 %v481, 2147483648
    %v579 = vor.u32 1.1754944e-38, %v578
    %v580 = vsel %vm577, %v579, %v575
    %v581 = vmul.f32 %v417, %v580
    %v582 = vrcp.pop %v482
    %v583 = vmul.f32 %v482, %v582
    %v584 = vsub.f32 1.0, %v583
    %v585 = vmul.f32 %v582, %v584
    %v586 = vadd.f32 %v582, %v585
    %vm587 = vweird.f32 %v482
    %vm588 = vweird.f32 %v582
    %vm589 = vmor %vm587, %vm588
    %v590 = vsel %vm589, %v582, %v586
    %v591 = vand.u32 2147483647, %v482
    %vm592 = vcmp.eq.f32.partialorder %v591, 8.507059e+37
    %v593 = vand.u32 %v482, 2147483648
    %v594 = vor.u32 1.1754944e-38, %v593
    %v595 = vsel %vm592, %v594, %v590
    %v596 = vmul.f32 %v418, %v595
    %v597 = vrcp.pop %v483
    %v598 = vmul.f32 %v483, %v597
    %v599 = vsub.f32 1.0, %v598
    %v600 = vmul.f32 %v597, %v599
    %v601 = vadd.f32 %v597, %v600
    %vm602 = vweird.f32 %v483
    %vm603 = vweird.f32 %v597
    %vm604 = vmor %vm602, %vm603
    %v605 = vsel %vm604, %v597, %v601
    %v606 = vand.u32 2147483647, %v483
    %vm607 = vcmp.eq.f32.partialorder %v606, 8.507059e+37
    %v608 = vand.u32 %v483, 2147483648
    %v609 = vor.u32 1.1754944e-38, %v608
    %v610 = vsel %vm607, %v609, %v605
    %v611 = vmul.f32 %v419, %v610
    %v612 = vrcp.pop %v484
    %v613 = vmul.f32 %v484, %v612
    %v614 = vsub.f32 1.0, %v613
    %v615 = vmul.f32 %v612, %v614
    %v616 = vadd.f32 %v612, %v615
    %vm617 = vweird.f32 %v484
    %vm618 = vweird.f32 %v612
    %vm619 = vmor %vm617, %vm618
    %v620 = vsel %vm619, %v612, %v616
    %v621 = vand.u32 2147483647, %v484
    %vm622 = vcmp.eq.f32.partialorder %v621, 8.507059e+37
    %v623 = vand.u32 %v484, 2147483648
    %v624 = vor.u32 1.1754944e-38, %v623
    %v625 = vsel %vm622, %v624, %v620
    %v626 = vmul.f32 %v420, %v625
    %v627 = vrcp.pop %v485
    %v628 = vmul.f32 %v485, %v627
    %v629 = vsub.f32 1.0, %v628
    %v630 = vmul.f32 %v627, %v629
    %v631 = vadd.f32 %v627, %v630
    %vm632 = vweird.f32 %v485
    %vm633 = vweird.f32 %v627
    %vm634 = vmor %vm632, %vm633
    %v635 = vsel %vm634, %v627, %v631
    %v636 = vand.u32 2147483647, %v485
    %vm637 = vcmp.eq.f32.partialorder %v636, 8.507059e+37
    %v638 = vand.u32 %v485, 2147483648
    %v639 = vor.u32 1.1754944e-38, %v638
    %v640 = vsel %vm637, %v639, %v635
    %v641 = vmul.f32 %v421, %v640
    %v642 = vrcp.pop %v486
    %v643 = vmul.f32 %v486, %v642
    %v644 = vsub.f32 1.0, %v643
    %v645 = vmul.f32 %v642, %v644
    %v646 = vadd.f32 %v642, %v645
    %vm647 = vweird.f32 %v486
    %vm648 = vweird.f32 %v642
    %vm649 = vmor %vm647, %vm648
    %v650 = vsel %vm649, %v642, %v646
    %v651 = vand.u32 2147483647, %v486
    %vm652 = vcmp.eq.f32.partialorder %v651, 8.507059e+37
    %v653 = vand.u32 %v486, 2147483648
    %v654 = vor.u32 1.1754944e-38, %v653
    %v655 = vsel %vm652, %v654, %v650
    %v656 = vmul.f32 %v422, %v655
    %v657 = vrcp.pop %v487
    %v658 = vmul.f32 %v487, %v657
    %v659 = vsub.f32 1.0, %v658
    %v660 = vmul.f32 %v657, %v659
    %v661 = vadd.f32 %v657, %v660
    %vm662 = vweird.f32 %v487
    %vm663 = vweird.f32 %v657
    %vm664 = vmor %vm662, %vm663
    %v665 = vsel %vm664, %v657, %v661
    %v666 = vand.u32 2147483647, %v487
    %vm667 = vcmp.eq.f32.partialorder %v666, 8.507059e+37
    %v668 = vand.u32 %v487, 2147483648
    %v669 = vor.u32 1.1754944e-38, %v668
    %v670 = vsel %vm667, %v669, %v665
    %v671 = vmul.f32 %v423, %v670
    %v672 = vrcp.pop %v488
    %v673 = vmul.f32 %v488, %v672
    %v674 = vsub.f32 1.0, %v673
    %v675 = vmul.f32 %v672, %v674
    %v676 = vadd.f32 %v672, %v675
    %vm677 = vweird.f32 %v488
    %vm678 = vweird.f32 %v672
    %vm679 = vmor %vm677, %vm678
    %v680 = vsel %vm679, %v672, %v676
    %v681 = vand.u32 2147483647, %v488
    %vm682 = vcmp.eq.f32.partialorder %v681, 8.507059e+37
    %v683 = vand.u32 %v488, 2147483648
    %v684 = vor.u32 1.1754944e-38, %v683
    %v685 = vsel %vm682, %v684, %v680
    %v686 = vmul.f32 %v424, %v685
    %v687 = vrcp.pop %v489
    %v688 = vmul.f32 %v489, %v687
    %v689 = vsub.f32 1.0, %v688
    %v690 = vmul.f32 %v687, %v689
    %v691 = vadd.f32 %v687, %v690
    %vm692 = vweird.f32 %v489
    %vm693 = vweird.f32 %v687
    %vm694 = vmor %vm692, %vm693
    %v695 = vsel %vm694, %v687, %v691
    %v696 = vand.u32 2147483647, %v489
    %vm697 = vcmp.eq.f32.partialorder %v696, 8.507059e+37
    %v698 = vand.u32 %v489, 2147483648
    %v699 = vor.u32 1.1754944e-38, %v698
    %v700 = vsel %vm697, %v699, %v695
    %v701 = vmul.f32 %v425, %v700
    %v702 = vrcp.pop %v490
    %v703 = vmul.f32 %v490, %v702
    %v704 = vsub.f32 1.0, %v703
    %v705 = vmul.f32 %v702, %v704
    %v706 = vadd.f32 %v702, %v705
    %vm707 = vweird.f32 %v490
    %vm708 = vweird.f32 %v702
    %vm709 = vmor %vm707, %vm708
    %v710 = vsel %vm709, %v702, %v706
    %v711 = vand.u32 2147483647, %v490
    %vm712 = vcmp.eq.f32.partialorder %v711, 8.507059e+37
    %v713 = vand.u32 %v490, 2147483648
    %v714 = vor.u32 1.1754944e-38, %v713
    %v715 = vsel %vm712, %v714, %v710
    %v716 = vmul.f32 %v426, %v715
    %v717 = vrcp.pop %v491
    %v718 = vmul.f32 %v491, %v717
    %v719 = vsub.f32 1.0, %v718
    %v720 = vmul.f32 %v717, %v719
    %v721 = vadd.f32 %v717, %v720
    %vm722 = vweird.f32 %v491
    %vm723 = vweird.f32 %v717
    %vm724 = vmor %vm722, %vm723
    %v725 = vsel %vm724, %v717, %v721
    %v726 = vand.u32 2147483647, %v491
    %vm727 = vcmp.eq.f32.partialorder %v726, 8.507059e+37
    %v728 = vand.u32 %v491, 2147483648
    %v729 = vor.u32 1.1754944e-38, %v728
    %v730 = vsel %vm727, %v729, %v725
    %v731 = vmul.f32 %v427, %v730
    %v733 = vsel %vm315, %v506, 0
    %v736 = vsel %vm315, %v521, 0
    %v739 = vsel %vm315, %v536, 0
    %v742 = vsel %vm315, %v551, 0
    %v745 = vsel %vm315, %v566, 0
    %v748 = vsel %vm315, %v581, 0
    %v751 = vsel %vm315, %v596, 0
    %v754 = vsel %vm315, %v611, 0
    %v757 = vsel %vm315, %v626, 0
    %v760 = vsel %vm315, %v641, 0
    %v763 = vsel %vm315, %v656, 0
    %v766 = vsel %vm315, %v671, 0
    %v769 = vsel %vm315, %v686, 0
    %v772 = vsel %vm315, %v701, 0
    %v775 = vsel %vm315, %v716, 0
    %v778 = vsel %vm315, %v731, 0
    %780 = vmatpush.msra.mxu0 0.0
    %781 = vmatpush.msra.mxu0 0.0
    %782 = vmatpush.msra.mxu0 0.0
    %783 = vmatpush.msra.mxu0 0.0
    %784 = vmatpush.msra.mxu0 0.0
    %785 = vmatpush.msra.mxu0 0.0
    %786 = vmatpush.msra.mxu0 0.0
    %787 = vmatpush.msra.mxu0 0.0
    %788 = vmatpush.msra.mxu0 0.0
    %789 = vmatpush.msra.mxu0 0.0
    %790 = vmatpush.msra.mxu0 0.0
    %791 = vmatpush.msra.mxu0 0.0
    %792 = vmatpush.msra.mxu0 0.0
    %793 = vmatpush.msra.mxu0 0.0
    %794 = vmatpush.msra.mxu0 %v104
    %795 = vmatpush.msra.mxu0 %v101
    %796 = vmatmul.f32.gmra.mxu0 %v733
    %v797 = vpop.f32.mrf.mxu0
    %v798 = vadd.f32 0.0, %v797
    %799 = vmatmul.f32.gmra.mxu0 %v736
    %v800 = vpop.f32.mrf.mxu0
    %v801 = vadd.f32 0.0, %v800
    %802 = vmatmul.f32.gmra.mxu0 %v739
    %v803 = vpop.f32.mrf.mxu0
    %v804 = vadd.f32 0.0, %v803
    %805 = vmatmul.f32.gmra.mxu0 %v742
    %v806 = vpop.f32.mrf.mxu0
    %v807 = vadd.f32 0.0, %v806
    %808 = vmatmul.f32.gmra.mxu0 %v745
    %v809 = vpop.f32.mrf.mxu0
    %v810 = vadd.f32 0.0, %v809
    %811 = vmatmul.f32.gmra.mxu0 %v748
    %v812 = vpop.f32.mrf.mxu0
    %v813 = vadd.f32 0.0, %v812
    %814 = vmatmul.f32.gmra.mxu0 %v751
    %v815 = vpop.f32.mrf.mxu0
    %v816 = vadd.f32 0.0, %v815
    %817 = vmatmul.f32.gmra.mxu0 %v754
    %v818 = vpop.f32.mrf.mxu0
    %v819 = vadd.f32 0.0, %v818
    %820 = vmatmul.f32.gmra.mxu0 %v757
    %v821 = vpop.f32.mrf.mxu0
    %v822 = vadd.f32 0.0, %v821
    %823 = vmatmul.f32.gmra.mxu0 %v760
    %v824 = vpop.f32.mrf.mxu0
    %v825 = vadd.f32 0.0, %v824
    %826 = vmatmul.f32.gmra.mxu0 %v763
    %v827 = vpop.f32.mrf.mxu0
    %v828 = vadd.f32 0.0, %v827
    %829 = vmatmul.f32.gmra.mxu0 %v766
    %v830 = vpop.f32.mrf.mxu0
    %v831 = vadd.f32 0.0, %v830
    %832 = vmatmul.f32.gmra.mxu0 %v769
    %v833 = vpop.f32.mrf.mxu0
    %v834 = vadd.f32 0.0, %v833
    %835 = vmatmul.f32.gmra.mxu0 %v772
    %v836 = vpop.f32.mrf.mxu0
    %v837 = vadd.f32 0.0, %v836
    %838 = vmatmul.f32.gmra.mxu0 %v775
    %v839 = vpop.f32.mrf.mxu0
    %v840 = vadd.f32 0.0, %v839
    %841 = vmatmul.f32.gmra.mxu0 %v778
    %v842 = vpop.f32.mrf.mxu0
    %v843 = vadd.f32 0.0, %v842
    %844 = vdwg.mxu0
    %v845 = vperm.slane %v75, 0
    %v846 = vmul.f32 %v798, %v845
    %v847 = vmul.f32 %v801, %v845
    %v848 = vperm.slane %v75, 1
    %v849 = vmul.f32 %v804, %v848
    %v850 = vmul.f32 %v807, %v848
    %v851 = vadd.f32 %v846, %v849
    %v852 = vadd.f32 %v847, %v850
    %v853 = vperm.slane %v75, 2
    %v854 = vmul.f32 %v810, %v853
    %v855 = vmul.f32 %v813, %v853
    %v856 = vadd.f32 %v851, %v854
    %v857 = vadd.f32 %v852, %v855
    %v858 = vperm.slane %v75, 3
    %v859 = vmul.f32 %v816, %v858
    %v860 = vmul.f32 %v819, %v858
    %v861 = vadd.f32 %v856, %v859
    %v862 = vadd.f32 %v857, %v860
    %v863 = vperm.slane %v75, 4
    %v864 = vmul.f32 %v822, %v863
    %v865 = vmul.f32 %v825, %v863
    %v866 = vadd.f32 %v861, %v864
    %v867 = vadd.f32 %v862, %v865
    %v868 = vperm.slane %v75, 5
    %v869 = vmul.f32 %v828, %v868
    %v870 = vmul.f32 %v831, %v868
    %v871 = vadd.f32 %v866, %v869
    %v872 = vadd.f32 %v867, %v870
    %v873 = vperm.slane %v75, 6
    %v874 = vmul.f32 %v834, %v873
    %v875 = vmul.f32 %v837, %v873
    %v876 = vadd.f32 %v871, %v874
    %v877 = vadd.f32 %v872, %v875
    %v878 = vperm.slane %v75, 7
    %v879 = vmul.f32 %v840, %v878
    %v880 = vmul.f32 %v843, %v878
    %v881 = vadd.f32 %v876, %v879
    %v882 = vadd.f32 %v877, %v880
    %v884 = vperm.slane %v74, 0
    %v886 = vadd.f32 %v881, %v884
    %v887 = vadd.f32 %v882, %v884
    %v888 = vmax.f32 %v886, 0.0
    %v889 = vmax.f32 %v887, 0.0
    %v890 = vld [vmem:[%s6] sm:$0xff]
    %v891 = vld [vmem:[%s6 + $0x8] sm:$0xff]
    %v892 = vld [vmem:[%s6 + $0x10] sm:$0xff]
    %v893 = vld [vmem:[%s6 + $0x18] sm:$0xff]
    %v894 = vld [vmem:[%s6 + $0x20] sm:$0xff]
    %v895 = vld [vmem:[%s6 + $0x28] sm:$0xff]
    %v896 = vld [vmem:[%s6 + $0x30] sm:$0xff]
    %v897 = vld [vmem:[%s6 + $0x38] sm:$0xff]
    %v898 = vld [vmem:[%s6 + $0x40] sm:$0xff]
    %v899 = vld [vmem:[%s6 + $0x48] sm:$0xff]
    %v900 = vld [vmem:[%s6 + $0x50] sm:$0xff]
    %v901 = vld [vmem:[%s6 + $0x58] sm:$0xff]
    %v902 = vld [vmem:[%s6 + $0x60] sm:$0xff]
    %v903 = vld [vmem:[%s6 + $0x68] sm:$0xff]
    %v904 = vld [vmem:[%s6 + $0x70] sm:$0xff]
    %v905 = vld [vmem:[%s6 + $0x78] sm:$0xff]
    %v906 = vld [vmem:[%s6 + $0x80] sm:$0xff]
    %v907 = vld [vmem:[%s6 + $0x88] sm:$0xff]
    %v908 = vld [vmem:[%s6 + $0x90] sm:$0xff]
    %v909 = vld [vmem:[%s6 + $0x98] sm:$0xff]
    %v910 = vld [vmem:[%s6 + $0xa0] sm:$0xff]
    %v911 = vld [vmem:[%s6 + $0xa8] sm:$0xff]
    %v912 = vld [vmem:[%s6 + $0xb0] sm:$0xff]
    %v913 = vld [vmem:[%s6 + $0xb8] sm:$0xff]
    %v914 = vld [vmem:[%s6 + $0xc0] sm:$0xff]
    %v915 = vld [vmem:[%s6 + $0xc8] sm:$0xff]
    %v916 = vld [vmem:[%s6 + $0xd0] sm:$0xff]
    %v917 = vld [vmem:[%s6 + $0xd8] sm:$0xff]
    %v918 = vld [vmem:[%s6 + $0xe0] sm:$0xff]
    %v919 = vld [vmem:[%s6 + $0xe8] sm:$0xff]
    %v920 = vld [vmem:[%s6 + $0xf0] sm:$0xff]
    %v921 = vld [vmem:[%s6 + $0xf8] sm:$0xff]
    %v922 = vld [vmem:[%s6 + $0x100] sm:$0xff]
    %v923 = vld [vmem:[%s6 + $0x108] sm:$0xff]
    %v924 = vld [vmem:[%s6 + $0x110] sm:$0xff]
    %v925 = vld [vmem:[%s6 + $0x118] sm:$0xff]
    %v926 = vld [vmem:[%s6 + $0x120] sm:$0xff]
    %v927 = vld [vmem:[%s6 + $0x128] sm:$0xff]
    %v928 = vld [vmem:[%s6 + $0x130] sm:$0xff]
    %v929 = vld [vmem:[%s6 + $0x138] sm:$0xff]
    %v930 = vld [vmem:[%s6 + $0x140] sm:$0xff]
    %v931 = vld [vmem:[%s6 + $0x148] sm:$0xff]
    %v932 = vld [vmem:[%s6 + $0x150] sm:$0xff]
    %v933 = vld [vmem:[%s6 + $0x158] sm:$0xff]
    %v934 = vld [vmem:[%s6 + $0x160] sm:$0xff]
    %v935 = vld [vmem:[%s6 + $0x168] sm:$0xff]
    %v936 = vld [vmem:[%s6 + $0x170] sm:$0xff]
    %v937 = vld [vmem:[%s6 + $0x178] sm:$0xff]
    %v938 = vld [vmem:[%s7] sm:$0xff]
    %v939 = vld [vmem:[%s7 + $0x8] sm:$0xff]
    %v940 = vld [vmem:[%s7 + $0x10] sm:$0xff]
    %v941 = vld [vmem:[%s7 + $0x18] sm:$0xff]
    %v942 = vld [vmem:[%s7 + $0x20] sm:$0xff]
    %v943 = vld [vmem:[%s7 + $0x28] sm:$0xff]
    %v944 = vld [vmem:[%s7 + $0x30] sm:$0xff]
    %v945 = vld [vmem:[%s7 + $0x38] sm:$0xff]
    %v946 = vld [vmem:[%s7 + $0x40] sm:$0xff]
    %v947 = vld [vmem:[%s7 + $0x48] sm:$0xff]
    %v948 = vld [vmem:[%s7 + $0x50] sm:$0xff]
    %v949 = vld [vmem:[%s7 + $0x58] sm:$0xff]
    %v950 = vld [vmem:[%s7 + $0x60] sm:$0xff]
    %v951 = vld [vmem:[%s7 + $0x68] sm:$0xff]
    %v952 = vld [vmem:[%s7 + $0x70] sm:$0xff]
    %v953 = vld [vmem:[%s7 + $0x78] sm:$0xff]
    %v954 = vld [vmem:[%s7 + $0x80] sm:$0xff]
    %v955 = vld [vmem:[%s7 + $0x88] sm:$0xff]
    %v956 = vld [vmem:[%s7 + $0x90] sm:$0xff]
    %v957 = vld [vmem:[%s7 + $0x98] sm:$0xff]
    %v958 = vld [vmem:[%s7 + $0xa0] sm:$0xff]
    %v959 = vld [vmem:[%s7 + $0xa8] sm:$0xff]
    %v960 = vld [vmem:[%s7 + $0xb0] sm:$0xff]
    %v961 = vld [vmem:[%s7 + $0xb8] sm:$0xff]
    %v962 = vld [vmem:[%s7 + $0xc0] sm:$0xff]
    %v963 = vld [vmem:[%s7 + $0xc8] sm:$0xff]
    %v964 = vld [vmem:[%s7 + $0xd0] sm:$0xff]
    %v965 = vld [vmem:[%s7 + $0xd8] sm:$0xff]
    %v966 = vld [vmem:[%s7 + $0xe0] sm:$0xff]
    %v967 = vld [vmem:[%s7 + $0xe8] sm:$0xff]
    %v968 = vld [vmem:[%s7 + $0xf0] sm:$0xff]
    %v969 = vld [vmem:[%s7 + $0xf8] sm:$0xff]
    %v970 = vld [vmem:[%s7 + $0x100] sm:$0xff]
    %v971 = vld [vmem:[%s7 + $0x108] sm:$0xff]
    %v972 = vld [vmem:[%s7 + $0x110] sm:$0xff]
    %v973 = vld [vmem:[%s7 + $0x118] sm:$0xff]
    %v974 = vld [vmem:[%s7 + $0x120] sm:$0xff]
    %v975 = vld [vmem:[%s7 + $0x128] sm:$0xff]
    %v976 = vld [vmem:[%s7 + $0x130] sm:$0xff]
    %v977 = vld [vmem:[%s7 + $0x138] sm:$0xff]
    %v978 = vld [vmem:[%s7 + $0x140] sm:$0xff]
    %v979 = vld [vmem:[%s7 + $0x148] sm:$0xff]
    %v980 = vld [vmem:[%s7 + $0x150] sm:$0xff]
    %v981 = vld [vmem:[%s7 + $0x158] sm:$0xff]
    %v982 = vld [vmem:[%s7 + $0x160] sm:$0xff]
    %v983 = vld [vmem:[%s7 + $0x168] sm:$0xff]
    %v984 = vld [vmem:[%s7 + $0x170] sm:$0xff]
    %v985 = vld [vmem:[%s7 + $0x178] sm:$0xff]
    %v986 = vld [vmem:[%s7 + $0x180] sm:$0xff]
    %v987 = vld [vmem:[%s7 + $0x188] sm:$0xff]
    %v988 = vld [vmem:[%s7 + $0x190] sm:$0xff]
    %v989 = vld [vmem:[%s7 + $0x198] sm:$0xff]
    %v990 = vld [vmem:[%s7 + $0x1a0] sm:$0xff]
    %v991 = vld [vmem:[%s7 + $0x1a8] sm:$0xff]
    %v992 = vld [vmem:[%s7 + $0x1b0] sm:$0xff]
    %v993 = vld [vmem:[%s7 + $0x1b8] sm:$0xff]
    %v994 = vld [vmem:[%s7 + $0x1c0] sm:$0xff]
    %v995 = vld [vmem:[%s7 + $0x1c8] sm:$0xff]
    %v996 = vld [vmem:[%s7 + $0x1d0] sm:$0xff]
    %v997 = vld [vmem:[%s7 + $0x1d8] sm:$0xff]
    %v998 = vld [vmem:[%s7 + $0x1e0] sm:$0xff]
    %v999 = vld [vmem:[%s7 + $0x1e8] sm:$0xff]
    %v1000 = vld [vmem:[%s7 + $0x1f0] sm:$0xff]
    %v1001 = vld [vmem:[%s7 + $0x1f8] sm:$0xff]
    %v1002 = vld [vmem:[%s7 + $0x200] sm:$0xff]
    %v1003 = vld [vmem:[%s7 + $0x208] sm:$0xff]
    %v1004 = vld [vmem:[%s7 + $0x210] sm:$0xff]
    %v1005 = vld [vmem:[%s7 + $0x218] sm:$0xff]
    %v1006 = vld [vmem:[%s7 + $0x220] sm:$0xff]
    %v1007 = vld [vmem:[%s7 + $0x228] sm:$0xff]
    %v1008 = vld [vmem:[%s7 + $0x230] sm:$0xff]
    %v1009 = vld [vmem:[%s7 + $0x238] sm:$0xff]
    %v1010 = vld [vmem:[%s7 + $0x240] sm:$0xff]
    %v1011 = vld [vmem:[%s7 + $0x248] sm:$0xff]
    %v1012 = vld [vmem:[%s7 + $0x250] sm:$0xff]
    %v1013 = vld [vmem:[%s7 + $0x258] sm:$0xff]
    %v1014 = vld [vmem:[%s7 + $0x260] sm:$0xff]
    %v1015 = vld [vmem:[%s7 + $0x268] sm:$0xff]
    %v1016 = vld [vmem:[%s7 + $0x270] sm:$0xff]
    %v1017 = vld [vmem:[%s7 + $0x278] sm:$0xff]
    %v1018 = vld [vmem:[%s7 + $0x280] sm:$0xff]
    %v1019 = vld [vmem:[%s7 + $0x288] sm:$0xff]
    %v1020 = vld [vmem:[%s7 + $0x290] sm:$0xff]
    %v1021 = vld [vmem:[%s7 + $0x298] sm:$0xff]
    %v1022 = vld [vmem:[%s7 + $0x2a0] sm:$0xff]
    %v1023 = vld [vmem:[%s7 + $0x2a8] sm:$0xff]
    %v1024 = vld [vmem:[%s7 + $0x2b0] sm:$0xff]
    %v1025 = vld [vmem:[%s7 + $0x2b8] sm:$0xff]
    %v1026 = vld [vmem:[%s7 + $0x2c0] sm:$0xff]
    %v1027 = vld [vmem:[%s7 + $0x2c8] sm:$0xff]
    %v1028 = vld [vmem:[%s7 + $0x2d0] sm:$0xff]
    %v1029 = vld [vmem:[%s7 + $0x2d8] sm:$0xff]
    %v1030 = vld [vmem:[%s7 + $0x2e0] sm:$0xff]
    %v1031 = vld [vmem:[%s7 + $0x2e8] sm:$0xff]
    %v1032 = vld [vmem:[%s7 + $0x2f0] sm:$0xff]
    %v1033 = vld [vmem:[%s7 + $0x2f8] sm:$0xff]
    %v1034 = vld [vmem:[%s8] sm:$0x7]
    %v1035 = vld [vmem:[%s9] sm:$0xff]
    %v1036 = vld [vmem:[%s9 + $0x8] sm:$0xff]
    %v1037 = vld [vmem:[%s9 + $0x10] sm:$0xff]
    %vm1038 = vcmask 523264
    %v1040 = vsel %vm1038, %v888, 0
    %v1043 = vsel %vm1038, %v889, 0
    %1045 = vmatpush.msra.mxu0 0.0
    %1046 = vmatpush.msra.mxu0 0.0
    %1047 = vmatpush.msra.mxu0 0.0
    %1048 = vmatpush.msra.mxu0 0.0
    %1049 = vmatpush.msra.mxu0 0.0
    %1050 = vmatpush.msra.mxu0 0.0
    %1051 = vmatpush.msra.mxu0 0.0
    %1052 = vmatpush.msra.mxu0 0.0
    %1053 = vmatpush.msra.mxu0 %v932
    %1054 = vmatpush.msra.mxu0 %v926
    %1055 = vmatpush.msra.mxu0 %v920
    %1056 = vmatpush.msra.mxu0 %v914
    %1057 = vmatpush.msra.mxu0 %v908
    %1058 = vmatpush.msra.mxu0 %v902
    %1059 = vmatpush.msra.mxu0 %v896
    %1060 = vmatpush.msra.mxu0 %v890
    %1061 = vmatmul.f32.gmra.mxu0 %v1040
    %v1062 = vpop.f32.mrf.mxu0
    %v1063 = vadd.f32 0.0, %v1062
    %1064 = vmatmul.f32.gmra.mxu0 %v1043
    %v1065 = vpop.f32.mrf.mxu0
    %v1066 = vadd.f32 0.0, %v1065
    %1067 = vdwg.mxu0
    %1068 = vmatpush.msra.mxu0 0.0
    %1069 = vmatpush.msra.mxu0 0.0
    %1070 = vmatpush.msra.mxu0 0.0
    %1071 = vmatpush.msra.mxu0 0.0
    %1072 = vmatpush.msra.mxu0 0.0
    %1073 = vmatpush.msra.mxu0 0.0
    %1074 = vmatpush.msra.mxu0 0.0
    %1075 = vmatpush.msra.mxu0 0.0
    %1076 = vmatpush.msra.mxu0 %v933
    %1077 = vmatpush.msra.mxu0 %v927
    %1078 = vmatpush.msra.mxu0 %v921
    %1079 = vmatpush.msra.mxu0 %v915
    %1080 = vmatpush.msra.mxu0 %v909
    %1081 = vmatpush.msra.mxu0 %v903
    %1082 = vmatpush.msra.mxu0 %v897
    %1083 = vmatpush.msra.mxu0 %v891
    %1084 = vmatmul.f32.gmra.mxu0 %v1040
    %v1085 = vpop.f32.mrf.mxu0
    %v1086 = vadd.f32 0.0, %v1085
    %1087 = vmatmul.f32.gmra.mxu0 %v1043
    %v1088 = vpop.f32.mrf.mxu0
    %v1089 = vadd.f32 0.0, %v1088
    %1090 = vdwg.mxu0
    %1091 = vmatpush.msra.mxu0 0.0
    %1092 = vmatpush.msra.mxu0 0.0
    %1093 = vmatpush.msra.mxu0 0.0
    %1094 = vmatpush.msra.mxu0 0.0
    %1095 = vmatpush.msra.mxu0 0.0
    %1096 = vmatpush.msra.mxu0 0.0
    %1097 = vmatpush.msra.mxu0 0.0
    %1098 = vmatpush.msra.mxu0 0.0
    %1099 = vmatpush.msra.mxu0 %v934
    %1100 = vmatpush.msra.mxu0 %v928
    %1101 = vmatpush.msra.mxu0 %v922
    %1102 = vmatpush.msra.mxu0 %v916
    %1103 = vmatpush.msra.mxu0 %v910
    %1104 = vmatpush.msra.mxu0 %v904
    %1105 = vmatpush.msra.mxu0 %v898
    %1106 = vmatpush.msra.mxu0 %v892
    %1107 = vmatmul.f32.gmra.mxu0 %v1040
    %v1108 = vpop.f32.mrf.mxu0
    %v1109 = vadd.f32 0.0, %v1108
    %1110 = vmatmul.f32.gmra.mxu0 %v1043
    %v1111 = vpop.f32.mrf.mxu0
    %v1112 = vadd.f32 0.0, %v1111
    %1113 = vdwg.mxu0
    %1114 = vmatpush.msra.mxu0 0.0
    %1115 = vmatpush.msra.mxu0 0.0
    %1116 = vmatpush.msra.mxu0 0.0
    %1117 = vmatpush.msra.mxu0 0.0
    %1118 = vmatpush.msra.mxu0 0.0
    %1119 = vmatpush.msra.mxu0 0.0
    %1120 = vmatpush.msra.mxu0 0.0
    %1121 = vmatpush.msra.mxu0 0.0
    %1122 = vmatpush.msra.mxu0 %v935
    %1123 = vmatpush.msra.mxu0 %v929
    %1124 = vmatpush.msra.mxu0 %v923
    %1125 = vmatpush.msra.mxu0 %v917
    %1126 = vmatpush.msra.mxu0 %v911
    %1127 = vmatpush.msra.mxu0 %v905
    %1128 = vmatpush.msra.mxu0 %v899
    %1129 = vmatpush.msra.mxu0 %v893
    %1130 = vmatmul.f32.gmra.mxu0 %v1040
    %v1131 = vpop.f32.mrf.mxu0
    %v1132 = vadd.f32 0.0, %v1131
    %1133 = vmatmul.f32.gmra.mxu0 %v1043
    %v1134 = vpop.f32.mrf.mxu0
    %v1135 = vadd.f32 0.0, %v1134
    %1136 = vdwg.mxu0
    %1137 = vmatpush.msra.mxu0 0.0
    %1138 = vmatpush.msra.mxu0 0.0
    %1139 = vmatpush.msra.mxu0 0.0
    %1140 = vmatpush.msra.mxu0 0.0
    %1141 = vmatpush.msra.mxu0 0.0
    %1142 = vmatpush.msra.mxu0 0.0
    %1143 = vmatpush.msra.mxu0 0.0
    %1144 = vmatpush.msra.mxu0 0.0
    %1145 = vmatpush.msra.mxu0 %v936
    %1146 = vmatpush.msra.mxu0 %v930
    %1147 = vmatpush.msra.mxu0 %v924
    %1148 = vmatpush.msra.mxu0 %v918
    %1149 = vmatpush.msra.mxu0 %v912
    %1150 = vmatpush.msra.mxu0 %v906
    %1151 = vmatpush.msra.mxu0 %v900
    %1152 = vmatpush.msra.mxu0 %v894
    %1153 = vmatmul.f32.gmra.mxu0 %v1040
    %v1154 = vpop.f32.mrf.mxu0
    %v1155 = vadd.f32 0.0, %v1154
    %1156 = vmatmul.f32.gmra.mxu0 %v1043
    %v1157 = vpop.f32.mrf.mxu0
    %v1158 = vadd.f32 0.0, %v1157
    %1159 = vdwg.mxu0
    %1160 = vmatpush.msra.mxu0 0.0
    %1161 = vmatpush.msra.mxu0 0.0
    %1162 = vmatpush.msra.mxu0 0.0
    %1163 = vmatpush.msra.mxu0 0.0
    %1164 = vmatpush.msra.mxu0 0.0
    %1165 = vmatpush.msra.mxu0 0.0
    %1166 = vmatpush.msra.mxu0 0.0
    %1167 = vmatpush.msra.mxu0 0.0
    %1168 = vmatpush.msra.mxu0 %v937
    %1169 = vmatpush.msra.mxu0 %v931
    %1170 = vmatpush.msra.mxu0 %v925
    %1171 = vmatpush.msra.mxu0 %v919
    %1172 = vmatpush.msra.mxu0 %v913
    %1173 = vmatpush.msra.mxu0 %v907
    %1174 = vmatpush.msra.mxu0 %v901
    %1175 = vmatpush.msra.mxu0 %v895
    %1176 = vmatmul.f32.gmra.mxu0 %v1040
    %v1177 = vpop.f32.mrf.mxu0
    %v1178 = vadd.f32 0.0, %v1177
    %1179 = vmatmul.f32.gmra.mxu0 %v1043
    %v1180 = vpop.f32.mrf.mxu0
    %v1181 = vadd.f32 0.0, %v1180
    %1182 = vdwg.mxu0
    %1183 = vmatpush.msra.mxu0 %v953
    %1184 = vmatpush.msra.mxu0 %v952
    %1185 = vmatpush.msra.mxu0 %v951
    %1186 = vmatpush.msra.mxu0 %v950
    %1187 = vmatpush.msra.mxu0 %v949
    %1188 = vmatpush.msra.mxu0 %v948
    %1189 = vmatpush.msra.mxu0 %v947
    %1190 = vmatpush.msra.mxu0 %v946
    %1191 = vmatpush.msra.mxu0 %v945
    %1192 = vmatpush.msra.mxu0 %v944
    %1193 = vmatpush.msra.mxu0 %v943
    %1194 = vmatpush.msra.mxu0 %v942
    %1195 = vmatpush.msra.mxu0 %v941
    %1196 = vmatpush.msra.mxu0 %v940
    %1197 = vmatpush.msra.mxu0 %v939
    %1198 = vmatpush.msra.mxu0 %v938
    %1199 = vmatmul.f32.gmra.mxu0 %v1063
    %v1200 = vpop.f32.mrf.mxu0
    %v1201 = vadd.f32 0.0, %v1200
    %1202 = vmatmul.f32.gmra.mxu0 %v1066
    %v1203 = vpop.f32.mrf.mxu0
    %v1204 = vadd.f32 0.0, %v1203
    %1205 = vdwg.mxu0
    %1206 = vmatpush.msra.mxu0 %v969
    %1207 = vmatpush.msra.mxu0 %v968
    %1208 = vmatpush.msra.mxu0 %v967
    %1209 = vmatpush.msra.mxu0 %v966
    %1210 = vmatpush.msra.mxu0 %v965
    %1211 = vmatpush.msra.mxu0 %v964
    %1212 = vmatpush.msra.mxu0 %v963
    %1213 = vmatpush.msra.mxu0 %v962
    %1214 = vmatpush.msra.mxu0 %v961
    %1215 = vmatpush.msra.mxu0 %v960
    %1216 = vmatpush.msra.mxu0 %v959
    %1217 = vmatpush.msra.mxu0 %v958
    %1218 = vmatpush.msra.mxu0 %v957
    %1219 = vmatpush.msra.mxu0 %v956
    %1220 = vmatpush.msra.mxu0 %v955
    %1221 = vmatpush.msra.mxu0 %v954
    %1222 = vmatmul.f32.gmra.mxu0 %v1086
    %v1223 = vpop.f32.mrf.mxu0
    %v1224 = vadd.f32 %v1201, %v1223
    %1225 = vmatmul.f32.gmra.mxu0 %v1089
    %v1226 = vpop.f32.mrf.mxu0
    %v1227 = vadd.f32 %v1204, %v1226
    %1228 = vdwg.mxu0
    %1229 = vmatpush.msra.mxu0 %v985
    %1230 = vmatpush.msra.mxu0 %v984
    %1231 = vmatpush.msra.mxu0 %v983
    %1232 = vmatpush.msra.mxu0 %v982
    %1233 = vmatpush.msra.mxu0 %v981
    %1234 = vmatpush.msra.mxu0 %v980
    %1235 = vmatpush.msra.mxu0 %v979
    %1236 = vmatpush.msra.mxu0 %v978
    %1237 = vmatpush.msra.mxu0 %v977
    %1238 = vmatpush.msra.mxu0 %v976
    %1239 = vmatpush.msra.mxu0 %v975
    %1240 = vmatpush.msra.mxu0 %v974
    %1241 = vmatpush.msra.mxu0 %v973
    %1242 = vmatpush.msra.mxu0 %v972
    %1243 = vmatpush.msra.mxu0 %v971
    %1244 = vmatpush.msra.mxu0 %v970
    %1245 = vmatmul.f32.gmra.mxu0 %v1109
    %v1246 = vpop.f32.mrf.mxu0
    %v1247 = vadd.f32 %v1224, %v1246
    %1248 = vmatmul.f32.gmra.mxu0 %v1112
    %v1249 = vpop.f32.mrf.mxu0
    %v1250 = vadd.f32 %v1227, %v1249
    %1251 = vdwg.mxu0
    %1252 = vmatpush.msra.mxu0 %v1001
    %1253 = vmatpush.msra.mxu0 %v1000
    %1254 = vmatpush.msra.mxu0 %v999
    %1255 = vmatpush.msra.mxu0 %v998
    %1256 = vmatpush.msra.mxu0 %v997
    %1257 = vmatpush.msra.mxu0 %v996
    %1258 = vmatpush.msra.mxu0 %v995
    %1259 = vmatpush.msra.mxu0 %v994
    %1260 = vmatpush.msra.mxu0 %v993
    %1261 = vmatpush.msra.mxu0 %v992
    %1262 = vmatpush.msra.mxu0 %v991
    %1263 = vmatpush.msra.mxu0 %v990
    %1264 = vmatpush.msra.mxu0 %v989
    %1265 = vmatpush.msra.mxu0 %v988
    %1266 = vmatpush.msra.mxu0 %v987
    %1267 = vmatpush.msra.mxu0 %v986
    %1268 = vmatmul.f32.gmra.mxu0 %v1132
    %v1269 = vpop.f32.mrf.mxu0
    %v1270 = vadd.f32 %v1247, %v1269
    %1271 = vmatmul.f32.gmra.mxu0 %v1135
    %v1272 = vpop.f32.mrf.mxu0
    %v1273 = vadd.f32 %v1250, %v1272
    %1274 = vdwg.mxu0
    %1275 = vmatpush.msra.mxu0 %v1017
    %1276 = vmatpush.msra.mxu0 %v1016
    %1277 = vmatpush.msra.mxu0 %v1015
    %1278 = vmatpush.msra.mxu0 %v1014
    %1279 = vmatpush.msra.mxu0 %v1013
    %1280 = vmatpush.msra.mxu0 %v1012
    %1281 = vmatpush.msra.mxu0 %v1011
    %1282 = vmatpush.msra.mxu0 %v1010
    %1283 = vmatpush.msra.mxu0 %v1009
    %1284 = vmatpush.msra.mxu0 %v1008
    %1285 = vmatpush.msra.mxu0 %v1007
    %1286 = vmatpush.msra.mxu0 %v1006
    %1287 = vmatpush.msra.mxu0 %v1005
    %1288 = vmatpush.msra.mxu0 %v1004
    %1289 = vmatpush.msra.mxu0 %v1003
    %1290 = vmatpush.msra.mxu0 %v1002
    %1291 = vmatmul.f32.gmra.mxu0 %v1155
    %v1292 = vpop.f32.mrf.mxu0
    %v1293 = vadd.f32 %v1270, %v1292
    %1294 = vmatmul.f32.gmra.mxu0 %v1158
    %v1295 = vpop.f32.mrf.mxu0
    %v1296 = vadd.f32 %v1273, %v1295
    %1297 = vdwg.mxu0
    %1298 = vmatpush.msra.mxu0 %v1033
    %1299 = vmatpush.msra.mxu0 %v1032
    %1300 = vmatpush.msra.mxu0 %v1031
    %1301 = vmatpush.msra.mxu0 %v1030
    %1302 = vmatpush.msra.mxu0 %v1029
    %1303 = vmatpush.msra.mxu0 %v1028
    %1304 = vmatpush.msra.mxu0 %v1027
    %1305 = vmatpush.msra.mxu0 %v1026
    %1306 = vmatpush.msra.mxu0 %v1025
    %1307 = vmatpush.msra.mxu0 %v1024
    %1308 = vmatpush.msra.mxu0 %v1023
    %1309 = vmatpush.msra.mxu0 %v1022
    %1310 = vmatpush.msra.mxu0 %v1021
    %1311 = vmatpush.msra.mxu0 %v1020
    %1312 = vmatpush.msra.mxu0 %v1019
    %1313 = vmatpush.msra.mxu0 %v1018
    %1314 = vmatmul.f32.gmra.mxu0 %v1178
    %v1315 = vpop.f32.mrf.mxu0
    %v1316 = vadd.f32 %v1293, %v1315
    %1317 = vmatmul.f32.gmra.mxu0 %v1181
    %v1318 = vpop.f32.mrf.mxu0
    %v1319 = vadd.f32 %v1296, %v1318
    %1320 = vdwg.mxu0
    %1321 = vxpose.xlu0.b32.start [1/16] %v1316, 128
    %1322 = vxpose.xlu0.b32.cont [2/16] %v1319, 128
    %1323 = vxpose.xlu0.b32.cont [3/16] 0.0, 128
    %1324 = vxpose.xlu0.b32.cont [4/16] 0.0, 128
    %1325 = vxpose.xlu0.b32.cont [5/16] 0.0, 128
    %1326 = vxpose.xlu0.b32.cont [6/16] 0.0, 128
    %1327 = vxpose.xlu0.b32.cont [7/16] 0.0, 128
    %1328 = vxpose.xlu0.b32.cont [8/16] 0.0, 128
    %1329 = vxpose.xlu0.b32.cont [9/16] 0.0, 128
    %1330 = vxpose.xlu0.b32.cont [10/16] 0.0, 128
    %1331 = vxpose.xlu0.b32.cont [11/16] 0.0, 128
    %1332 = vxpose.xlu0.b32.cont [12/16] 0.0, 128
    %1333 = vxpose.xlu0.b32.cont [13/16] 0.0, 128
    %1334 = vxpose.xlu0.b32.cont [14/16] 0.0, 128
    %1335 = vxpose.xlu0.b32.cont [15/16] 0.0, 128
    %1336 = vxpose.xlu0.b32.end [16/16] 0.0, 128
    %v1337 = vpop.trf.xlu0
    %v1338 = vpop.trf.xlu0
    %v1339 = vpop.trf.xlu0
    %v1340 = vpop.trf.xlu0
    %v1341 = vpop.trf.xlu0
    %v1342 = vpop.trf.xlu0
    %v1343 = vpop.trf.xlu0
    %v1344 = vpop.trf.xlu0
    %v1345 = vpop.trf.xlu0
    %v1346 = vpop.trf.xlu0
    %v1347 = vpop.trf.xlu0
    %v1348 = vpop.trf.xlu0
    %v1349 = vpop.trf.xlu0
    %v1350 = vpop.trf.xlu0
    %v1351 = vpop.trf.xlu0
    %v1352 = vpop.trf.xlu0
    %1354 = vset.pattern.permute.xlu0 8
    %1355 = vperm.xlu0 %1354, %v1316
    %v1356 = vpop.permute.xlu0 %1355
    %1359 = vset.pattern.permute.xlu0 8
    %1360 = vperm.xlu0 %1359, %v1319
    %v1361 = vpop.permute.xlu0 %1360
    %v1363 = vperm.slane %v1337, 0
    %v1364 = vadd.f32 %v1356, %v1363
    %v1365 = vadd.f32 %v1361, %v1363
    %1366 = vset.pattern.permute.xlu0 9
    %1367 = vperm.xlu0 %1366, %v1316
    %v1368 = vpop.permute.xlu0 %1367
    %1370 = vset.pattern.permute.xlu0 9
    %1371 = vperm.xlu0 %1370, %v1319
    %v1372 = vpop.permute.xlu0 %1371
    %v1374 = vperm.slane %v1337, 1
    %v1375 = vadd.f32 %v1368, %v1374
    %v1376 = vadd.f32 %v1372, %v1374
    %1377 = vset.pattern.permute.xlu0 10
    %1378 = vperm.xlu0 %1377, %v1316
    %v1379 = vpop.permute.xlu0 %1378
    %1381 = vset.pattern.permute.xlu0 10
    %1382 = vperm.xlu0 %1381, %v1319
    %v1383 = vpop.permute.xlu0 %1382
    %v1385 = vperm.slane %v1337, 2
    %v1386 = vadd.f32 %v1379, %v1385
    %v1387 = vadd.f32 %v1383, %v1385
    %1388 = vset.pattern.permute.xlu0 11
    %1389 = vperm.xlu0 %1388, %v1316
    %v1390 = vpop.permute.xlu0 %1389
    %1392 = vset.pattern.permute.xlu0 11
    %1393 = vperm.xlu0 %1392, %v1319
    %v1394 = vpop.permute.xlu0 %1393
    %v1396 = vperm.slane %v1337, 3
    %v1397 = vadd.f32 %v1390, %v1396
    %v1398 = vadd.f32 %v1394, %v1396
    %1399 = vset.pattern.permute.xlu0 12
    %1400 = vperm.xlu0 %1399, %v1316
    %v1401 = vpop.permute.xlu0 %1400
    %1403 = vset.pattern.permute.xlu0 12
    %1404 = vperm.xlu0 %1403, %v1319
    %v1405 = vpop.permute.xlu0 %1404
    %v1407 = vperm.slane %v1337, 4
    %v1408 = vadd.f32 %v1401, %v1407
    %v1409 = vadd.f32 %v1405, %v1407
    %1410 = vset.pattern.permute.xlu0 13
    %1411 = vperm.xlu0 %1410, %v1316
    %v1412 = vpop.permute.xlu0 %1411
    %1414 = vset.pattern.permute.xlu0 13
    %1415 = vperm.xlu0 %1414, %v1319
    %v1416 = vpop.permute.xlu0 %1415
    %v1418 = vperm.slane %v1337, 5
    %v1419 = vadd.f32 %v1412, %v1418
    %v1420 = vadd.f32 %v1416, %v1418
    %1421 = vset.pattern.permute.xlu0 14
    %1422 = vperm.xlu0 %1421, %v1316
    %v1423 = vpop.permute.xlu0 %1422
    %1425 = vset.pattern.permute.xlu0 14
    %1426 = vperm.xlu0 %1425, %v1319
    %v1427 = vpop.permute.xlu0 %1426
    %v1429 = vperm.slane %v1337, 6
    %v1430 = vadd.f32 %v1423, %v1429
    %v1431 = vadd.f32 %v1427, %v1429
    %1432 = vset.pattern.permute.xlu0 15
    %1433 = vperm.xlu0 %1432, %v1316
    %v1434 = vpop.permute.xlu0 %1433
    %1436 = vset.pattern.permute.xlu0 15
    %1437 = vperm.xlu0 %1436, %v1319
    %v1438 = vpop.permute.xlu0 %1437
    %v1440 = vperm.slane %v1337, 7
    %v1441 = vadd.f32 %v1434, %v1440
    %v1442 = vadd.f32 %v1438, %v1440
    %vm1443 = vcmp.ge.f32.partialorder %v1364, 0.0
    %vm1444 = vcmp.ge.f32.partialorder %v1365, 0.0
    %vm1445 = vcmp.ge.f32.partialorder %v1375, 0.0
    %vm1446 = vcmp.ge.f32.partialorder %v1376, 0.0
    %vm1447 = vcmp.ge.f32.partialorder %v1386, 0.0
    %vm1448 = vcmp.ge.f32.partialorder %v1387, 0.0
    %vm1449 = vcmp.ge.f32.partialorder %v1397, 0.0
    %vm1450 = vcmp.ge.f32.partialorder %v1398, 0.0
    %vm1451 = vcmp.ge.f32.partialorder %v1408, 0.0
    %vm1452 = vcmp.ge.f32.partialorder %v1409, 0.0
    %vm1453 = vcmp.ge.f32.partialorder %v1419, 0.0
    %vm1454 = vcmp.ge.f32.partialorder %v1420, 0.0
    %vm1455 = vcmp.ge.f32.partialorder %v1430, 0.0
    %vm1456 = vcmp.ge.f32.partialorder %v1431, 0.0
    %vm1457 = vcmp.ge.f32.partialorder %v1441, 0.0
    %vm1458 = vcmp.ge.f32.partialorder %v1442, 0.0
    %v1459 = vmul.f32 %v1364, 0.2
    %v1460 = vmul.f32 %v1365, 0.2
    %v1461 = vmul.f32 %v1375, 0.2
    %v1462 = vmul.f32 %v1376, 0.2
    %v1463 = vmul.f32 %v1386, 0.2
    %v1464 = vmul.f32 %v1387, 0.2
    %v1465 = vmul.f32 %v1397, 0.2
    %v1466 = vmul.f32 %v1398, 0.2
    %v1467 = vmul.f32 %v1408, 0.2
    %v1468 = vmul.f32 %v1409, 0.2
    %v1469 = vmul.f32 %v1419, 0.2
    %v1470 = vmul.f32 %v1420, 0.2
    %v1471 = vmul.f32 %v1430, 0.2
    %v1472 = vmul.f32 %v1431, 0.2
    %v1473 = vmul.f32 %v1441, 0.2
    %v1474 = vmul.f32 %v1442, 0.2
    %v1475 = vsel %vm1443, %v1364, %v1459
    %v1476 = vsel %vm1444, %v1365, %v1460
    %v1477 = vsel %vm1445, %v1375, %v1461
    %v1478 = vsel %vm1446, %v1376, %v1462
    %v1479 = vsel %vm1447, %v1386, %v1463
    %v1480 = vsel %vm1448, %v1387, %v1464
    %v1481 = vsel %vm1449, %v1397, %v1465
    %v1482 = vsel %vm1450, %v1398, %v1466
    %v1483 = vsel %vm1451, %v1408, %v1467
    %v1484 = vsel %vm1452, %v1409, %v1468
    %v1485 = vsel %vm1453, %v1419, %v1469
    %v1486 = vsel %vm1454, %v1420, %v1470
    %v1487 = vsel %vm1455, %v1430, %v1471
    %v1488 = vsel %vm1456, %v1431, %v1472
    %v1489 = vsel %vm1457, %v1441, %v1473
    %v1490 = vsel %vm1458, %v1442, %v1474
    %v1491 = vsel %vm52, %v1475, -1e+30
    %v1492 = vsel %vm53, %v1476, -1e+30
    %v1493 = vsel %vm52, %v1477, -1e+30
    %v1494 = vsel %vm53, %v1478, -1e+30
    %v1495 = vsel %vm52, %v1479, -1e+30
    %v1496 = vsel %vm53, %v1480, -1e+30
    %v1497 = vsel %vm52, %v1481, -1e+30
    %v1498 = vsel %vm53, %v1482, -1e+30
    %v1499 = vsel %vm52, %v1483, -1e+30
    %v1500 = vsel %vm53, %v1484, -1e+30
    %v1501 = vsel %vm52, %v1485, -1e+30
    %v1502 = vsel %vm53, %v1486, -1e+30
    %v1503 = vsel %vm52, %v1487, -1e+30
    %v1504 = vsel %vm53, %v1488, -1e+30
    %v1505 = vsel %vm52, %v1489, -1e+30
    %v1506 = vsel %vm53, %v1490, -1e+30
    %v1507 = vsel %vm315, %v1491, -inf
    %1508 = vmax.xlane.f32.xlu0 %v1507
    %v1509 = vpop.xlane.xlu0 %1508
    %v1510 = vsel %vm315, %v1492, -inf
    %1511 = vmax.xlane.f32.xlu0 %v1510
    %v1512 = vpop.xlane.xlu0 %1511
    %v1513 = vsel %vm315, %v1493, -inf
    %1514 = vmax.xlane.f32.xlu0 %v1513
    %v1515 = vpop.xlane.xlu0 %1514
    %v1516 = vsel %vm315, %v1494, -inf
    %1517 = vmax.xlane.f32.xlu0 %v1516
    %v1518 = vpop.xlane.xlu0 %1517
    %v1519 = vsel %vm315, %v1495, -inf
    %1520 = vmax.xlane.f32.xlu0 %v1519
    %v1521 = vpop.xlane.xlu0 %1520
    %v1522 = vsel %vm315, %v1496, -inf
    %1523 = vmax.xlane.f32.xlu0 %v1522
    %v1524 = vpop.xlane.xlu0 %1523
    %v1525 = vsel %vm315, %v1497, -inf
    %1526 = vmax.xlane.f32.xlu0 %v1525
    %v1527 = vpop.xlane.xlu0 %1526
    %v1528 = vsel %vm315, %v1498, -inf
    %1529 = vmax.xlane.f32.xlu0 %v1528
    %v1530 = vpop.xlane.xlu0 %1529
    %v1531 = vsel %vm315, %v1499, -inf
    %1532 = vmax.xlane.f32.xlu0 %v1531
    %v1533 = vpop.xlane.xlu0 %1532
    %v1534 = vsel %vm315, %v1500, -inf
    %1535 = vmax.xlane.f32.xlu0 %v1534
    %v1536 = vpop.xlane.xlu0 %1535
    %v1537 = vsel %vm315, %v1501, -inf
    %1538 = vmax.xlane.f32.xlu0 %v1537
    %v1539 = vpop.xlane.xlu0 %1538
    %v1540 = vsel %vm315, %v1502, -inf
    %1541 = vmax.xlane.f32.xlu0 %v1540
    %v1542 = vpop.xlane.xlu0 %1541
    %v1543 = vsel %vm315, %v1503, -inf
    %1544 = vmax.xlane.f32.xlu0 %v1543
    %v1545 = vpop.xlane.xlu0 %1544
    %v1546 = vsel %vm315, %v1504, -inf
    %1547 = vmax.xlane.f32.xlu0 %v1546
    %v1548 = vpop.xlane.xlu0 %1547
    %v1549 = vsel %vm315, %v1505, -inf
    %1550 = vmax.xlane.f32.xlu0 %v1549
    %v1551 = vpop.xlane.xlu0 %1550
    %v1552 = vsel %vm315, %v1506, -inf
    %1553 = vmax.xlane.f32.xlu0 %v1552
    %v1554 = vpop.xlane.xlu0 %1553
    %v1555 = vsub.f32 %v1491, %v1509
    %v1556 = vsub.f32 %v1492, %v1512
    %v1557 = vsub.f32 %v1493, %v1515
    %v1558 = vsub.f32 %v1494, %v1518
    %v1559 = vsub.f32 %v1495, %v1521
    %v1560 = vsub.f32 %v1496, %v1524
    %v1561 = vsub.f32 %v1497, %v1527
    %v1562 = vsub.f32 %v1498, %v1530
    %v1563 = vsub.f32 %v1499, %v1533
    %v1564 = vsub.f32 %v1500, %v1536
    %v1565 = vsub.f32 %v1501, %v1539
    %v1566 = vsub.f32 %v1502, %v1542
    %v1567 = vsub.f32 %v1503, %v1545
    %v1568 = vsub.f32 %v1504, %v1548
    %v1569 = vsub.f32 %v1505, %v1551
    %v1570 = vsub.f32 %v1506, %v1554
    %v1571 = vmul.f32 %v1555, 1.442695
    %v1572 = vpow.pop %v1571
    %v1573 = vmul.f32 %v1556, 1.442695
    %v1574 = vpow.pop %v1573
    %v1575 = vmul.f32 %v1557, 1.442695
    %v1576 = vpow.pop %v1575
    %v1577 = vmul.f32 %v1558, 1.442695
    %v1578 = vpow.pop %v1577
    %v1579 = vmul.f32 %v1559, 1.442695
    %v1580 = vpow.pop %v1579
    %v1581 = vmul.f32 %v1560, 1.442695
    %v1582 = vpow.pop %v1581
    %v1583 = vmul.f32 %v1561, 1.442695
    %v1584 = vpow.pop %v1583
    %v1585 = vmul.f32 %v1562, 1.442695
    %v1586 = vpow.pop %v1585
    %v1587 = vmul.f32 %v1563, 1.442695
    %v1588 = vpow.pop %v1587
    %v1589 = vmul.f32 %v1564, 1.442695
    %v1590 = vpow.pop %v1589
    %v1591 = vmul.f32 %v1565, 1.442695
    %v1592 = vpow.pop %v1591
    %v1593 = vmul.f32 %v1566, 1.442695
    %v1594 = vpow.pop %v1593
    %v1595 = vmul.f32 %v1567, 1.442695
    %v1596 = vpow.pop %v1595
    %v1597 = vmul.f32 %v1568, 1.442695
    %v1598 = vpow.pop %v1597
    %v1599 = vmul.f32 %v1569, 1.442695
    %v1600 = vpow.pop %v1599
    %v1601 = vmul.f32 %v1570, 1.442695
    %v1602 = vpow.pop %v1601
    %v1603 = vmul.f32 %v1572, %v50
    %v1604 = vmul.f32 %v1574, %v51
    %v1605 = vmul.f32 %v1576, %v50
    %v1606 = vmul.f32 %v1578, %v51
    %v1607 = vmul.f32 %v1580, %v50
    %v1608 = vmul.f32 %v1582, %v51
    %v1609 = vmul.f32 %v1584, %v50
    %v1610 = vmul.f32 %v1586, %v51
    %v1611 = vmul.f32 %v1588, %v50
    %v1612 = vmul.f32 %v1590, %v51
    %v1613 = vmul.f32 %v1592, %v50
    %v1614 = vmul.f32 %v1594, %v51
    %v1615 = vmul.f32 %v1596, %v50
    %v1616 = vmul.f32 %v1598, %v51
    %v1617 = vmul.f32 %v1600, %v50
    %v1618 = vmul.f32 %v1602, %v51
    %v1619 = vsel %vm315, %v1603, 0.0
    %1620 = vadd.xlane.f32.xlu0 %v1619
    %v1621 = vpop.xlane.xlu0 %1620
    %v1622 = vsel %vm315, %v1604, 0.0
    %1623 = vadd.xlane.f32.xlu0 %v1622
    %v1624 = vpop.xlane.xlu0 %1623
    %v1625 = vsel %vm315, %v1605, 0.0
    %1626 = vadd.xlane.f32.xlu0 %v1625
    %v1627 = vpop.xlane.xlu0 %1626
    %v1628 = vsel %vm315, %v1606, 0.0
    %1629 = vadd.xlane.f32.xlu0 %v1628
    %v1630 = vpop.xlane.xlu0 %1629
    %v1631 = vsel %vm315, %v1607, 0.0
    %1632 = vadd.xlane.f32.xlu0 %v1631
    %v1633 = vpop.xlane.xlu0 %1632
    %v1634 = vsel %vm315, %v1608, 0.0
    %1635 = vadd.xlane.f32.xlu0 %v1634
    %v1636 = vpop.xlane.xlu0 %1635
    %v1637 = vsel %vm315, %v1609, 0.0
    %1638 = vadd.xlane.f32.xlu0 %v1637
    %v1639 = vpop.xlane.xlu0 %1638
    %v1640 = vsel %vm315, %v1610, 0.0
    %1641 = vadd.xlane.f32.xlu0 %v1640
    %v1642 = vpop.xlane.xlu0 %1641
    %v1643 = vsel %vm315, %v1611, 0.0
    %1644 = vadd.xlane.f32.xlu0 %v1643
    %v1645 = vpop.xlane.xlu0 %1644
    %v1646 = vsel %vm315, %v1612, 0.0
    %1647 = vadd.xlane.f32.xlu0 %v1646
    %v1648 = vpop.xlane.xlu0 %1647
    %v1649 = vsel %vm315, %v1613, 0.0
    %1650 = vadd.xlane.f32.xlu0 %v1649
    %v1651 = vpop.xlane.xlu0 %1650
    %v1652 = vsel %vm315, %v1614, 0.0
    %1653 = vadd.xlane.f32.xlu0 %v1652
    %v1654 = vpop.xlane.xlu0 %1653
    %v1655 = vsel %vm315, %v1615, 0.0
    %1656 = vadd.xlane.f32.xlu0 %v1655
    %v1657 = vpop.xlane.xlu0 %1656
    %v1658 = vsel %vm315, %v1616, 0.0
    %1659 = vadd.xlane.f32.xlu0 %v1658
    %v1660 = vpop.xlane.xlu0 %1659
    %v1661 = vsel %vm315, %v1617, 0.0
    %1662 = vadd.xlane.f32.xlu0 %v1661
    %v1663 = vpop.xlane.xlu0 %1662
    %v1664 = vsel %vm315, %v1618, 0.0
    %1665 = vadd.xlane.f32.xlu0 %v1664
    %v1666 = vpop.xlane.xlu0 %1665
    %v1667 = vadd.f32 %v1621, 1e-16
    %v1668 = vadd.f32 %v1624, 1e-16
    %v1669 = vadd.f32 %v1627, 1e-16
    %v1670 = vadd.f32 %v1630, 1e-16
    %v1671 = vadd.f32 %v1633, 1e-16
    %v1672 = vadd.f32 %v1636, 1e-16
    %v1673 = vadd.f32 %v1639, 1e-16
    %v1674 = vadd.f32 %v1642, 1e-16
    %v1675 = vadd.f32 %v1645, 1e-16
    %v1676 = vadd.f32 %v1648, 1e-16
    %v1677 = vadd.f32 %v1651, 1e-16
    %v1678 = vadd.f32 %v1654, 1e-16
    %v1679 = vadd.f32 %v1657, 1e-16
    %v1680 = vadd.f32 %v1660, 1e-16
    %v1681 = vadd.f32 %v1663, 1e-16
    %v1682 = vadd.f32 %v1666, 1e-16
    %v1683 = vrcp.pop %v1667
    %v1684 = vmul.f32 %v1667, %v1683
    %v1685 = vsub.f32 1.0, %v1684
    %v1686 = vmul.f32 %v1683, %v1685
    %v1687 = vadd.f32 %v1683, %v1686
    %vm1688 = vweird.f32 %v1667
    %vm1689 = vweird.f32 %v1683
    %vm1690 = vmor %vm1688, %vm1689
    %v1691 = vsel %vm1690, %v1683, %v1687
    %v1692 = vand.u32 2147483647, %v1667
    %vm1693 = vcmp.eq.f32.partialorder %v1692, 8.507059e+37
    %v1694 = vand.u32 %v1667, 2147483648
    %v1695 = vor.u32 1.1754944e-38, %v1694
    %v1696 = vsel %vm1693, %v1695, %v1691
    %v1697 = vmul.f32 %v1603, %v1696
    %v1698 = vrcp.pop %v1668
    %v1699 = vmul.f32 %v1668, %v1698
    %v1700 = vsub.f32 1.0, %v1699
    %v1701 = vmul.f32 %v1698, %v1700
    %v1702 = vadd.f32 %v1698, %v1701
    %vm1703 = vweird.f32 %v1668
    %vm1704 = vweird.f32 %v1698
    %vm1705 = vmor %vm1703, %vm1704
    %v1706 = vsel %vm1705, %v1698, %v1702
    %v1707 = vand.u32 2147483647, %v1668
    %vm1708 = vcmp.eq.f32.partialorder %v1707, 8.507059e+37
    %v1709 = vand.u32 %v1668, 2147483648
    %v1710 = vor.u32 1.1754944e-38, %v1709
    %v1711 = vsel %vm1708, %v1710, %v1706
    %v1712 = vmul.f32 %v1604, %v1711
    %v1713 = vrcp.pop %v1669
    %v1714 = vmul.f32 %v1669, %v1713
    %v1715 = vsub.f32 1.0, %v1714
    %v1716 = vmul.f32 %v1713, %v1715
    %v1717 = vadd.f32 %v1713, %v1716
    %vm1718 = vweird.f32 %v1669
    %vm1719 = vweird.f32 %v1713
    %vm1720 = vmor %vm1718, %vm1719
    %v1721 = vsel %vm1720, %v1713, %v1717
    %v1722 = vand.u32 2147483647, %v1669
    %vm1723 = vcmp.eq.f32.partialorder %v1722, 8.507059e+37
    %v1724 = vand.u32 %v1669, 2147483648
    %v1725 = vor.u32 1.1754944e-38, %v1724
    %v1726 = vsel %vm1723, %v1725, %v1721
    %v1727 = vmul.f32 %v1605, %v1726
    %v1728 = vrcp.pop %v1670
    %v1729 = vmul.f32 %v1670, %v1728
    %v1730 = vsub.f32 1.0, %v1729
    %v1731 = vmul.f32 %v1728, %v1730
    %v1732 = vadd.f32 %v1728, %v1731
    %vm1733 = vweird.f32 %v1670
    %vm1734 = vweird.f32 %v1728
    %vm1735 = vmor %vm1733, %vm1734
    %v1736 = vsel %vm1735, %v1728, %v1732
    %v1737 = vand.u32 2147483647, %v1670
    %vm1738 = vcmp.eq.f32.partialorder %v1737, 8.507059e+37
    %v1739 = vand.u32 %v1670, 2147483648
    %v1740 = vor.u32 1.1754944e-38, %v1739
    %v1741 = vsel %vm1738, %v1740, %v1736
    %v1742 = vmul.f32 %v1606, %v1741
    %v1743 = vrcp.pop %v1671
    %v1744 = vmul.f32 %v1671, %v1743
    %v1745 = vsub.f32 1.0, %v1744
    %v1746 = vmul.f32 %v1743, %v1745
    %v1747 = vadd.f32 %v1743, %v1746
    %vm1748 = vweird.f32 %v1671
    %vm1749 = vweird.f32 %v1743
    %vm1750 = vmor %vm1748, %vm1749
    %v1751 = vsel %vm1750, %v1743, %v1747
    %v1752 = vand.u32 2147483647, %v1671
    %vm1753 = vcmp.eq.f32.partialorder %v1752, 8.507059e+37
    %v1754 = vand.u32 %v1671, 2147483648
    %v1755 = vor.u32 1.1754944e-38, %v1754
    %v1756 = vsel %vm1753, %v1755, %v1751
    %v1757 = vmul.f32 %v1607, %v1756
    %v1758 = vrcp.pop %v1672
    %v1759 = vmul.f32 %v1672, %v1758
    %v1760 = vsub.f32 1.0, %v1759
    %v1761 = vmul.f32 %v1758, %v1760
    %v1762 = vadd.f32 %v1758, %v1761
    %vm1763 = vweird.f32 %v1672
    %vm1764 = vweird.f32 %v1758
    %vm1765 = vmor %vm1763, %vm1764
    %v1766 = vsel %vm1765, %v1758, %v1762
    %v1767 = vand.u32 2147483647, %v1672
    %vm1768 = vcmp.eq.f32.partialorder %v1767, 8.507059e+37
    %v1769 = vand.u32 %v1672, 2147483648
    %v1770 = vor.u32 1.1754944e-38, %v1769
    %v1771 = vsel %vm1768, %v1770, %v1766
    %v1772 = vmul.f32 %v1608, %v1771
    %v1773 = vrcp.pop %v1673
    %v1774 = vmul.f32 %v1673, %v1773
    %v1775 = vsub.f32 1.0, %v1774
    %v1776 = vmul.f32 %v1773, %v1775
    %v1777 = vadd.f32 %v1773, %v1776
    %vm1778 = vweird.f32 %v1673
    %vm1779 = vweird.f32 %v1773
    %vm1780 = vmor %vm1778, %vm1779
    %v1781 = vsel %vm1780, %v1773, %v1777
    %v1782 = vand.u32 2147483647, %v1673
    %vm1783 = vcmp.eq.f32.partialorder %v1782, 8.507059e+37
    %v1784 = vand.u32 %v1673, 2147483648
    %v1785 = vor.u32 1.1754944e-38, %v1784
    %v1786 = vsel %vm1783, %v1785, %v1781
    %v1787 = vmul.f32 %v1609, %v1786
    %v1788 = vrcp.pop %v1674
    %v1789 = vmul.f32 %v1674, %v1788
    %v1790 = vsub.f32 1.0, %v1789
    %v1791 = vmul.f32 %v1788, %v1790
    %v1792 = vadd.f32 %v1788, %v1791
    %vm1793 = vweird.f32 %v1674
    %vm1794 = vweird.f32 %v1788
    %vm1795 = vmor %vm1793, %vm1794
    %v1796 = vsel %vm1795, %v1788, %v1792
    %v1797 = vand.u32 2147483647, %v1674
    %vm1798 = vcmp.eq.f32.partialorder %v1797, 8.507059e+37
    %v1799 = vand.u32 %v1674, 2147483648
    %v1800 = vor.u32 1.1754944e-38, %v1799
    %v1801 = vsel %vm1798, %v1800, %v1796
    %v1802 = vmul.f32 %v1610, %v1801
    %v1803 = vrcp.pop %v1675
    %v1804 = vmul.f32 %v1675, %v1803
    %v1805 = vsub.f32 1.0, %v1804
    %v1806 = vmul.f32 %v1803, %v1805
    %v1807 = vadd.f32 %v1803, %v1806
    %vm1808 = vweird.f32 %v1675
    %vm1809 = vweird.f32 %v1803
    %vm1810 = vmor %vm1808, %vm1809
    %v1811 = vsel %vm1810, %v1803, %v1807
    %v1812 = vand.u32 2147483647, %v1675
    %vm1813 = vcmp.eq.f32.partialorder %v1812, 8.507059e+37
    %v1814 = vand.u32 %v1675, 2147483648
    %v1815 = vor.u32 1.1754944e-38, %v1814
    %v1816 = vsel %vm1813, %v1815, %v1811
    %v1817 = vmul.f32 %v1611, %v1816
    %v1818 = vrcp.pop %v1676
    %v1819 = vmul.f32 %v1676, %v1818
    %v1820 = vsub.f32 1.0, %v1819
    %v1821 = vmul.f32 %v1818, %v1820
    %v1822 = vadd.f32 %v1818, %v1821
    %vm1823 = vweird.f32 %v1676
    %vm1824 = vweird.f32 %v1818
    %vm1825 = vmor %vm1823, %vm1824
    %v1826 = vsel %vm1825, %v1818, %v1822
    %v1827 = vand.u32 2147483647, %v1676
    %vm1828 = vcmp.eq.f32.partialorder %v1827, 8.507059e+37
    %v1829 = vand.u32 %v1676, 2147483648
    %v1830 = vor.u32 1.1754944e-38, %v1829
    %v1831 = vsel %vm1828, %v1830, %v1826
    %v1832 = vmul.f32 %v1612, %v1831
    %v1833 = vrcp.pop %v1677
    %v1834 = vmul.f32 %v1677, %v1833
    %v1835 = vsub.f32 1.0, %v1834
    %v1836 = vmul.f32 %v1833, %v1835
    %v1837 = vadd.f32 %v1833, %v1836
    %vm1838 = vweird.f32 %v1677
    %vm1839 = vweird.f32 %v1833
    %vm1840 = vmor %vm1838, %vm1839
    %v1841 = vsel %vm1840, %v1833, %v1837
    %v1842 = vand.u32 2147483647, %v1677
    %vm1843 = vcmp.eq.f32.partialorder %v1842, 8.507059e+37
    %v1844 = vand.u32 %v1677, 2147483648
    %v1845 = vor.u32 1.1754944e-38, %v1844
    %v1846 = vsel %vm1843, %v1845, %v1841
    %v1847 = vmul.f32 %v1613, %v1846
    %v1848 = vrcp.pop %v1678
    %v1849 = vmul.f32 %v1678, %v1848
    %v1850 = vsub.f32 1.0, %v1849
    %v1851 = vmul.f32 %v1848, %v1850
    %v1852 = vadd.f32 %v1848, %v1851
    %vm1853 = vweird.f32 %v1678
    %vm1854 = vweird.f32 %v1848
    %vm1855 = vmor %vm1853, %vm1854
    %v1856 = vsel %vm1855, %v1848, %v1852
    %v1857 = vand.u32 2147483647, %v1678
    %vm1858 = vcmp.eq.f32.partialorder %v1857, 8.507059e+37
    %v1859 = vand.u32 %v1678, 2147483648
    %v1860 = vor.u32 1.1754944e-38, %v1859
    %v1861 = vsel %vm1858, %v1860, %v1856
    %v1862 = vmul.f32 %v1614, %v1861
    %v1863 = vrcp.pop %v1679
    %v1864 = vmul.f32 %v1679, %v1863
    %v1865 = vsub.f32 1.0, %v1864
    %v1866 = vmul.f32 %v1863, %v1865
    %v1867 = vadd.f32 %v1863, %v1866
    %vm1868 = vweird.f32 %v1679
    %vm1869 = vweird.f32 %v1863
    %vm1870 = vmor %vm1868, %vm1869
    %v1871 = vsel %vm1870, %v1863, %v1867
    %v1872 = vand.u32 2147483647, %v1679
    %vm1873 = vcmp.eq.f32.partialorder %v1872, 8.507059e+37
    %v1874 = vand.u32 %v1679, 2147483648
    %v1875 = vor.u32 1.1754944e-38, %v1874
    %v1876 = vsel %vm1873, %v1875, %v1871
    %v1877 = vmul.f32 %v1615, %v1876
    %v1878 = vrcp.pop %v1680
    %v1879 = vmul.f32 %v1680, %v1878
    %v1880 = vsub.f32 1.0, %v1879
    %v1881 = vmul.f32 %v1878, %v1880
    %v1882 = vadd.f32 %v1878, %v1881
    %vm1883 = vweird.f32 %v1680
    %vm1884 = vweird.f32 %v1878
    %vm1885 = vmor %vm1883, %vm1884
    %v1886 = vsel %vm1885, %v1878, %v1882
    %v1887 = vand.u32 2147483647, %v1680
    %vm1888 = vcmp.eq.f32.partialorder %v1887, 8.507059e+37
    %v1889 = vand.u32 %v1680, 2147483648
    %v1890 = vor.u32 1.1754944e-38, %v1889
    %v1891 = vsel %vm1888, %v1890, %v1886
    %v1892 = vmul.f32 %v1616, %v1891
    %v1893 = vrcp.pop %v1681
    %v1894 = vmul.f32 %v1681, %v1893
    %v1895 = vsub.f32 1.0, %v1894
    %v1896 = vmul.f32 %v1893, %v1895
    %v1897 = vadd.f32 %v1893, %v1896
    %vm1898 = vweird.f32 %v1681
    %vm1899 = vweird.f32 %v1893
    %vm1900 = vmor %vm1898, %vm1899
    %v1901 = vsel %vm1900, %v1893, %v1897
    %v1902 = vand.u32 2147483647, %v1681
    %vm1903 = vcmp.eq.f32.partialorder %v1902, 8.507059e+37
    %v1904 = vand.u32 %v1681, 2147483648
    %v1905 = vor.u32 1.1754944e-38, %v1904
    %v1906 = vsel %vm1903, %v1905, %v1901
    %v1907 = vmul.f32 %v1617, %v1906
    %v1908 = vrcp.pop %v1682
    %v1909 = vmul.f32 %v1682, %v1908
    %v1910 = vsub.f32 1.0, %v1909
    %v1911 = vmul.f32 %v1908, %v1910
    %v1912 = vadd.f32 %v1908, %v1911
    %vm1913 = vweird.f32 %v1682
    %vm1914 = vweird.f32 %v1908
    %vm1915 = vmor %vm1913, %vm1914
    %v1916 = vsel %vm1915, %v1908, %v1912
    %v1917 = vand.u32 2147483647, %v1682
    %vm1918 = vcmp.eq.f32.partialorder %v1917, 8.507059e+37
    %v1919 = vand.u32 %v1682, 2147483648
    %v1920 = vor.u32 1.1754944e-38, %v1919
    %v1921 = vsel %vm1918, %v1920, %v1916
    %v1922 = vmul.f32 %v1618, %v1921
    %v1924 = vsel %vm315, %v1697, 0
    %v1927 = vsel %vm315, %v1712, 0
    %v1930 = vsel %vm315, %v1727, 0
    %v1933 = vsel %vm315, %v1742, 0
    %v1936 = vsel %vm315, %v1757, 0
    %v1939 = vsel %vm315, %v1772, 0
    %v1942 = vsel %vm315, %v1787, 0
    %v1945 = vsel %vm315, %v1802, 0
    %v1948 = vsel %vm315, %v1817, 0
    %v1951 = vsel %vm315, %v1832, 0
    %v1954 = vsel %vm315, %v1847, 0
    %v1957 = vsel %vm315, %v1862, 0
    %v1960 = vsel %vm315, %v1877, 0
    %v1963 = vsel %vm315, %v1892, 0
    %v1966 = vsel %vm315, %v1907, 0
    %v1969 = vsel %vm315, %v1922, 0
    %1971 = vmatpush.msra.mxu0 0.0
    %1972 = vmatpush.msra.mxu0 0.0
    %1973 = vmatpush.msra.mxu0 0.0
    %1974 = vmatpush.msra.mxu0 0.0
    %1975 = vmatpush.msra.mxu0 0.0
    %1976 = vmatpush.msra.mxu0 0.0
    %1977 = vmatpush.msra.mxu0 0.0
    %1978 = vmatpush.msra.mxu0 0.0
    %1979 = vmatpush.msra.mxu0 0.0
    %1980 = vmatpush.msra.mxu0 0.0
    %1981 = vmatpush.msra.mxu0 0.0
    %1982 = vmatpush.msra.mxu0 0.0
    %1983 = vmatpush.msra.mxu0 0.0
    %1984 = vmatpush.msra.mxu0 0.0
    %1985 = vmatpush.msra.mxu0 %v1066
    %1986 = vmatpush.msra.mxu0 %v1063
    %1987 = vmatmul.f32.gmra.mxu0 %v1924
    %v1988 = vpop.f32.mrf.mxu0
    %v1989 = vadd.f32 0.0, %v1988
    %1990 = vmatmul.f32.gmra.mxu0 %v1927
    %v1991 = vpop.f32.mrf.mxu0
    %v1992 = vadd.f32 0.0, %v1991
    %1993 = vmatmul.f32.gmra.mxu0 %v1930
    %v1994 = vpop.f32.mrf.mxu0
    %v1995 = vadd.f32 0.0, %v1994
    %1996 = vmatmul.f32.gmra.mxu0 %v1933
    %v1997 = vpop.f32.mrf.mxu0
    %v1998 = vadd.f32 0.0, %v1997
    %1999 = vmatmul.f32.gmra.mxu0 %v1936
    %v2000 = vpop.f32.mrf.mxu0
    %v2001 = vadd.f32 0.0, %v2000
    %2002 = vmatmul.f32.gmra.mxu0 %v1939
    %v2003 = vpop.f32.mrf.mxu0
    %v2004 = vadd.f32 0.0, %v2003
    %2005 = vmatmul.f32.gmra.mxu0 %v1942
    %v2006 = vpop.f32.mrf.mxu0
    %v2007 = vadd.f32 0.0, %v2006
    %2008 = vmatmul.f32.gmra.mxu0 %v1945
    %v2009 = vpop.f32.mrf.mxu0
    %v2010 = vadd.f32 0.0, %v2009
    %2011 = vmatmul.f32.gmra.mxu0 %v1948
    %v2012 = vpop.f32.mrf.mxu0
    %v2013 = vadd.f32 0.0, %v2012
    %2014 = vmatmul.f32.gmra.mxu0 %v1951
    %v2015 = vpop.f32.mrf.mxu0
    %v2016 = vadd.f32 0.0, %v2015
    %2017 = vmatmul.f32.gmra.mxu0 %v1954
    %v2018 = vpop.f32.mrf.mxu0
    %v2019 = vadd.f32 0.0, %v2018
    %2020 = vmatmul.f32.gmra.mxu0 %v1957
    %v2021 = vpop.f32.mrf.mxu0
    %v2022 = vadd.f32 0.0, %v2021
    %2023 = vmatmul.f32.gmra.mxu0 %v1960
    %v2024 = vpop.f32.mrf.mxu0
    %v2025 = vadd.f32 0.0, %v2024
    %2026 = vmatmul.f32.gmra.mxu0 %v1963
    %v2027 = vpop.f32.mrf.mxu0
    %v2028 = vadd.f32 0.0, %v2027
    %2029 = vmatmul.f32.gmra.mxu0 %v1966
    %v2030 = vpop.f32.mrf.mxu0
    %v2031 = vadd.f32 0.0, %v2030
    %2032 = vmatmul.f32.gmra.mxu0 %v1969
    %v2033 = vpop.f32.mrf.mxu0
    %v2034 = vadd.f32 0.0, %v2033
    %2035 = vdwg.mxu0
    %2036 = vmatpush.msra.mxu0 0.0
    %2037 = vmatpush.msra.mxu0 0.0
    %2038 = vmatpush.msra.mxu0 0.0
    %2039 = vmatpush.msra.mxu0 0.0
    %2040 = vmatpush.msra.mxu0 0.0
    %2041 = vmatpush.msra.mxu0 0.0
    %2042 = vmatpush.msra.mxu0 0.0
    %2043 = vmatpush.msra.mxu0 0.0
    %2044 = vmatpush.msra.mxu0 0.0
    %2045 = vmatpush.msra.mxu0 0.0
    %2046 = vmatpush.msra.mxu0 0.0
    %2047 = vmatpush.msra.mxu0 0.0
    %2048 = vmatpush.msra.mxu0 0.0
    %2049 = vmatpush.msra.mxu0 0.0
    %2050 = vmatpush.msra.mxu0 %v1089
    %2051 = vmatpush.msra.mxu0 %v1086
    %2052 = vmatmul.f32.gmra.mxu0 %v1924
    %v2053 = vpop.f32.mrf.mxu0
    %v2054 = vadd.f32 0.0, %v2053
    %2055 = vmatmul.f32.gmra.mxu0 %v1927
    %v2056 = vpop.f32.mrf.mxu0
    %v2057 = vadd.f32 0.0, %v2056
    %2058 = vmatmul.f32.gmra.mxu0 %v1930
    %v2059 = vpop.f32.mrf.mxu0
    %v2060 = vadd.f32 0.0, %v2059
    %2061 = vmatmul.f32.gmra.mxu0 %v1933
    %v2062 = vpop.f32.mrf.mxu0
    %v2063 = vadd.f32 0.0, %v2062
    %2064 = vmatmul.f32.gmra.mxu0 %v1936
    %v2065 = vpop.f32.mrf.mxu0
    %v2066 = vadd.f32 0.0, %v2065
    %2067 = vmatmul.f32.gmra.mxu0 %v1939
    %v2068 = vpop.f32.mrf.mxu0
    %v2069 = vadd.f32 0.0, %v2068
    %2070 = vmatmul.f32.gmra.mxu0 %v1942
    %v2071 = vpop.f32.mrf.mxu0
    %v2072 = vadd.f32 0.0, %v2071
    %2073 = vmatmul.f32.gmra.mxu0 %v1945
    %v2074 = vpop.f32.mrf.mxu0
    %v2075 = vadd.f32 0.0, %v2074
    %2076 = vmatmul.f32.gmra.mxu0 %v1948
    %v2077 = vpop.f32.mrf.mxu0
    %v2078 = vadd.f32 0.0, %v2077
    %2079 = vmatmul.f32.gmra.mxu0 %v1951
    %v2080 = vpop.f32.mrf.mxu0
    %v2081 = vadd.f32 0.0, %v2080
    %2082 = vmatmul.f32.gmra.mxu0 %v1954
    %v2083 = vpop.f32.mrf.mxu0
    %v2084 = vadd.f32 0.0, %v2083
    %2085 = vmatmul.f32.gmra.mxu0 %v1957
    %v2086 = vpop.f32.mrf.mxu0
    %v2087 = vadd.f32 0.0, %v2086
    %2088 = vmatmul.f32.gmra.mxu0 %v1960
    %v2089 = vpop.f32.mrf.mxu0
    %v2090 = vadd.f32 0.0, %v2089
    %2091 = vmatmul.f32.gmra.mxu0 %v1963
    %v2092 = vpop.f32.mrf.mxu0
    %v2093 = vadd.f32 0.0, %v2092
    %2094 = vmatmul.f32.gmra.mxu0 %v1966
    %v2095 = vpop.f32.mrf.mxu0
    %v2096 = vadd.f32 0.0, %v2095
    %2097 = vmatmul.f32.gmra.mxu0 %v1969
    %v2098 = vpop.f32.mrf.mxu0
    %v2099 = vadd.f32 0.0, %v2098
    %2100 = vdwg.mxu0
    %2101 = vmatpush.msra.mxu0 0.0
    %2102 = vmatpush.msra.mxu0 0.0
    %2103 = vmatpush.msra.mxu0 0.0
    %2104 = vmatpush.msra.mxu0 0.0
    %2105 = vmatpush.msra.mxu0 0.0
    %2106 = vmatpush.msra.mxu0 0.0
    %2107 = vmatpush.msra.mxu0 0.0
    %2108 = vmatpush.msra.mxu0 0.0
    %2109 = vmatpush.msra.mxu0 0.0
    %2110 = vmatpush.msra.mxu0 0.0
    %2111 = vmatpush.msra.mxu0 0.0
    %2112 = vmatpush.msra.mxu0 0.0
    %2113 = vmatpush.msra.mxu0 0.0
    %2114 = vmatpush.msra.mxu0 0.0
    %2115 = vmatpush.msra.mxu0 %v1112
    %2116 = vmatpush.msra.mxu0 %v1109
    %2117 = vmatmul.f32.gmra.mxu0 %v1924
    %v2118 = vpop.f32.mrf.mxu0
    %v2119 = vadd.f32 0.0, %v2118
    %2120 = vmatmul.f32.gmra.mxu0 %v1927
    %v2121 = vpop.f32.mrf.mxu0
    %v2122 = vadd.f32 0.0, %v2121
    %2123 = vmatmul.f32.gmra.mxu0 %v1930
    %v2124 = vpop.f32.mrf.mxu0
    %v2125 = vadd.f32 0.0, %v2124
    %2126 = vmatmul.f32.gmra.mxu0 %v1933
    %v2127 = vpop.f32.mrf.mxu0
    %v2128 = vadd.f32 0.0, %v2127
    %2129 = vmatmul.f32.gmra.mxu0 %v1936
    %v2130 = vpop.f32.mrf.mxu0
    %v2131 = vadd.f32 0.0, %v2130
    %2132 = vmatmul.f32.gmra.mxu0 %v1939
    %v2133 = vpop.f32.mrf.mxu0
    %v2134 = vadd.f32 0.0, %v2133
    %2135 = vmatmul.f32.gmra.mxu0 %v1942
    %v2136 = vpop.f32.mrf.mxu0
    %v2137 = vadd.f32 0.0, %v2136
    %2138 = vmatmul.f32.gmra.mxu0 %v1945
    %v2139 = vpop.f32.mrf.mxu0
    %v2140 = vadd.f32 0.0, %v2139
    %2141 = vmatmul.f32.gmra.mxu0 %v1948
    %v2142 = vpop.f32.mrf.mxu0
    %v2143 = vadd.f32 0.0, %v2142
    %2144 = vmatmul.f32.gmra.mxu0 %v1951
    %v2145 = vpop.f32.mrf.mxu0
    %v2146 = vadd.f32 0.0, %v2145
    %2147 = vmatmul.f32.gmra.mxu0 %v1954
    %v2148 = vpop.f32.mrf.mxu0
    %v2149 = vadd.f32 0.0, %v2148
    %2150 = vmatmul.f32.gmra.mxu0 %v1957
    %v2151 = vpop.f32.mrf.mxu0
    %v2152 = vadd.f32 0.0, %v2151
    %2153 = vmatmul.f32.gmra.mxu0 %v1960
    %v2154 = vpop.f32.mrf.mxu0
    %v2155 = vadd.f32 0.0, %v2154
    %2156 = vmatmul.f32.gmra.mxu0 %v1963
    %v2157 = vpop.f32.mrf.mxu0
    %v2158 = vadd.f32 0.0, %v2157
    %2159 = vmatmul.f32.gmra.mxu0 %v1966
    %v2160 = vpop.f32.mrf.mxu0
    %v2161 = vadd.f32 0.0, %v2160
    %2162 = vmatmul.f32.gmra.mxu0 %v1969
    %v2163 = vpop.f32.mrf.mxu0
    %v2164 = vadd.f32 0.0, %v2163
    %2165 = vdwg.mxu0
    %v2166 = vperm.slane %v1035, 0
    %v2167 = vperm.slane %v1036, 0
    %v2168 = vperm.slane %v1037, 0
    %v2169 = vmul.f32 %v1989, %v2166
    %v2170 = vmul.f32 %v2054, %v2167
    %v2171 = vmul.f32 %v2119, %v2168
    %v2172 = vmul.f32 %v1992, %v2166
    %v2173 = vmul.f32 %v2057, %v2167
    %v2174 = vmul.f32 %v2122, %v2168
    %v2175 = vperm.slane %v1035, 1
    %v2176 = vperm.slane %v1036, 1
    %v2177 = vperm.slane %v1037, 1
    %v2178 = vmul.f32 %v1995, %v2175
    %v2179 = vmul.f32 %v2060, %v2176
    %v2180 = vmul.f32 %v2125, %v2177
    %v2181 = vmul.f32 %v1998, %v2175
    %v2182 = vmul.f32 %v2063, %v2176
    %v2183 = vmul.f32 %v2128, %v2177
    %v2184 = vadd.f32 %v2169, %v2178
    %v2185 = vadd.f32 %v2170, %v2179
    %v2186 = vadd.f32 %v2171, %v2180
    %v2187 = vadd.f32 %v2172, %v2181
    %v2188 = vadd.f32 %v2173, %v2182
    %v2189 = vadd.f32 %v2174, %v2183
    %v2190 = vperm.slane %v1035, 2
    %v2191 = vperm.slane %v1036, 2
    %v2192 = vperm.slane %v1037, 2
    %v2193 = vmul.f32 %v2001, %v2190
    %v2194 = vmul.f32 %v2066, %v2191
    %v2195 = vmul.f32 %v2131, %v2192
    %v2196 = vmul.f32 %v2004, %v2190
    %v2197 = vmul.f32 %v2069, %v2191
    %v2198 = vmul.f32 %v2134, %v2192
    %v2199 = vadd.f32 %v2184, %v2193
    %v2200 = vadd.f32 %v2185, %v2194
    %v2201 = vadd.f32 %v2186, %v2195
    %v2202 = vadd.f32 %v2187, %v2196
    %v2203 = vadd.f32 %v2188, %v2197
    %v2204 = vadd.f32 %v2189, %v2198
    %v2205 = vperm.slane %v1035, 3
    %v2206 = vperm.slane %v1036, 3
    %v2207 = vperm.slane %v1037, 3
    %v2208 = vmul.f32 %v2007, %v2205
    %v2209 = vmul.f32 %v2072, %v2206
    %v2210 = vmul.f32 %v2137, %v2207
    %v2211 = vmul.f32 %v2010, %v2205
    %v2212 = vmul.f32 %v2075, %v2206
    %v2213 = vmul.f32 %v2140, %v2207
    %v2214 = vadd.f32 %v2199, %v2208
    %v2215 = vadd.f32 %v2200, %v2209
    %v2216 = vadd.f32 %v2201, %v2210
    %v2217 = vadd.f32 %v2202, %v2211
    %v2218 = vadd.f32 %v2203, %v2212
    %v2219 = vadd.f32 %v2204, %v2213
    %v2220 = vperm.slane %v1035, 4
    %v2221 = vperm.slane %v1036, 4
    %v2222 = vperm.slane %v1037, 4
    %v2223 = vmul.f32 %v2013, %v2220
    %v2224 = vmul.f32 %v2078, %v2221
    %v2225 = vmul.f32 %v2143, %v2222
    %v2226 = vmul.f32 %v2016, %v2220
    %v2227 = vmul.f32 %v2081, %v2221
    %v2228 = vmul.f32 %v2146, %v2222
    %v2229 = vadd.f32 %v2214, %v2223
    %v2230 = vadd.f32 %v2215, %v2224
    %v2231 = vadd.f32 %v2216, %v2225
    %v2232 = vadd.f32 %v2217, %v2226
    %v2233 = vadd.f32 %v2218, %v2227
    %v2234 = vadd.f32 %v2219, %v2228
    %v2235 = vperm.slane %v1035, 5
    %v2236 = vperm.slane %v1036, 5
    %v2237 = vperm.slane %v1037, 5
    %v2238 = vmul.f32 %v2019, %v2235
    %v2239 = vmul.f32 %v2084, %v2236
    %v2240 = vmul.f32 %v2149, %v2237
    %v2241 = vmul.f32 %v2022, %v2235
    %v2242 = vmul.f32 %v2087, %v2236
    %v2243 = vmul.f32 %v2152, %v2237
    %v2244 = vadd.f32 %v2229, %v2238
    %v2245 = vadd.f32 %v2230, %v2239
    %v2246 = vadd.f32 %v2231, %v2240
    %v2247 = vadd.f32 %v2232, %v2241
    %v2248 = vadd.f32 %v2233, %v2242
    %v2249 = vadd.f32 %v2234, %v2243
    %v2250 = vperm.slane %v1035, 6
    %v2251 = vperm.slane %v1036, 6
    %v2252 = vperm.slane %v1037, 6
    %v2253 = vmul.f32 %v2025, %v2250
    %v2254 = vmul.f32 %v2090, %v2251
    %v2255 = vmul.f32 %v2155, %v2252
    %v2256 = vmul.f32 %v2028, %v2250
    %v2257 = vmul.f32 %v2093, %v2251
    %v2258 = vmul.f32 %v2158, %v2252
    %v2259 = vadd.f32 %v2244, %v2253
    %v2260 = vadd.f32 %v2245, %v2254
    %v2261 = vadd.f32 %v2246, %v2255
    %v2262 = vadd.f32 %v2247, %v2256
    %v2263 = vadd.f32 %v2248, %v2257
    %v2264 = vadd.f32 %v2249, %v2258
    %v2265 = vperm.slane %v1035, 7
    %v2266 = vperm.slane %v1036, 7
    %v2267 = vperm.slane %v1037, 7
    %v2268 = vmul.f32 %v2031, %v2265
    %v2269 = vmul.f32 %v2096, %v2266
    %v2270 = vmul.f32 %v2161, %v2267
    %v2271 = vmul.f32 %v2034, %v2265
    %v2272 = vmul.f32 %v2099, %v2266
    %v2273 = vmul.f32 %v2164, %v2267
    %v2274 = vadd.f32 %v2259, %v2268
    %v2275 = vadd.f32 %v2260, %v2269
    %v2276 = vadd.f32 %v2261, %v2270
    %v2277 = vadd.f32 %v2262, %v2271
    %v2278 = vadd.f32 %v2263, %v2272
    %v2279 = vadd.f32 %v2264, %v2273
    %v2281 = vperm.slane %v1034, 0
    %v2282 = vperm.slane %v1034, 1
    %v2283 = vperm.slane %v1034, 2
    %v2287 = vadd.f32 %v2274, %v2281
    %v2288 = vadd.f32 %v2275, %v2282
    %v2289 = vadd.f32 %v2276, %v2283
    %v2290 = vadd.f32 %v2277, %v2281
    %v2291 = vadd.f32 %v2278, %v2282
    %v2292 = vadd.f32 %v2279, %v2283
    %v2293 = vmax.f32 %v2287, 0.0
    %v2294 = vmax.f32 %v2288, 0.0
    %v2295 = vmax.f32 %v2289, 0.0
    %v2296 = vmax.f32 %v2290, 0.0
    %v2297 = vmax.f32 %v2291, 0.0
    %v2298 = vmax.f32 %v2292, 0.0
    %v2299 = vld [vmem:[%s10] sm:$0xff]
    %v2300 = vld [vmem:[%s10 + $0x8] sm:$0xff]
    %v2301 = vld [vmem:[%s10 + $0x10] sm:$0xff]
    %v2302 = vld [vmem:[%s10 + $0x18] sm:$0xff]
    %v2303 = vld [vmem:[%s10 + $0x20] sm:$0xff]
    %v2304 = vld [vmem:[%s10 + $0x28] sm:$0xff]
    %v2305 = vld [vmem:[%s10 + $0x30] sm:$0xff]
    %v2306 = vld [vmem:[%s10 + $0x38] sm:$0xff]
    %v2307 = vld [vmem:[%s10 + $0x40] sm:$0xff]
    %v2308 = vld [vmem:[%s10 + $0x48] sm:$0xff]
    %v2309 = vld [vmem:[%s10 + $0x50] sm:$0xff]
    %v2310 = vld [vmem:[%s10 + $0x58] sm:$0xff]
    %v2311 = vld [vmem:[%s10 + $0x60] sm:$0xff]
    %v2312 = vld [vmem:[%s10 + $0x68] sm:$0xff]
    %v2313 = vld [vmem:[%s10 + $0x70] sm:$0xff]
    %v2314 = vld [vmem:[%s10 + $0x78] sm:$0xff]
    %v2315 = vld [vmem:[%s10 + $0x80] sm:$0xff]
    %v2316 = vld [vmem:[%s10 + $0x88] sm:$0xff]
    %v2317 = vld [vmem:[%s10 + $0x90] sm:$0xff]
    %v2318 = vld [vmem:[%s10 + $0x98] sm:$0xff]
    %v2319 = vld [vmem:[%s10 + $0xa0] sm:$0xff]
    %v2320 = vld [vmem:[%s10 + $0xa8] sm:$0xff]
    %v2321 = vld [vmem:[%s10 + $0xb0] sm:$0xff]
    %v2322 = vld [vmem:[%s10 + $0xb8] sm:$0xff]
    %v2323 = vld [vmem:[%s10 + $0xc0] sm:$0xff]
    %v2324 = vld [vmem:[%s10 + $0xc8] sm:$0xff]
    %v2325 = vld [vmem:[%s10 + $0xd0] sm:$0xff]
    %v2326 = vld [vmem:[%s10 + $0xd8] sm:$0xff]
    %v2327 = vld [vmem:[%s10 + $0xe0] sm:$0xff]
    %v2328 = vld [vmem:[%s10 + $0xe8] sm:$0xff]
    %v2329 = vld [vmem:[%s10 + $0xf0] sm:$0xff]
    %v2330 = vld [vmem:[%s10 + $0xf8] sm:$0xff]
    %v2331 = vld [vmem:[%s10 + $0x100] sm:$0xff]
    %v2332 = vld [vmem:[%s10 + $0x108] sm:$0xff]
    %v2333 = vld [vmem:[%s10 + $0x110] sm:$0xff]
    %v2334 = vld [vmem:[%s10 + $0x118] sm:$0xff]
    %v2335 = vld [vmem:[%s10 + $0x120] sm:$0xff]
    %v2336 = vld [vmem:[%s10 + $0x128] sm:$0xff]
    %v2337 = vld [vmem:[%s10 + $0x130] sm:$0xff]
    %v2338 = vld [vmem:[%s10 + $0x138] sm:$0xff]
    %v2339 = vld [vmem:[%s10 + $0x140] sm:$0xff]
    %v2340 = vld [vmem:[%s10 + $0x148] sm:$0xff]
    %v2341 = vld [vmem:[%s10 + $0x150] sm:$0xff]
    %v2342 = vld [vmem:[%s10 + $0x158] sm:$0xff]
    %v2343 = vld [vmem:[%s10 + $0x160] sm:$0xff]
    %v2344 = vld [vmem:[%s10 + $0x168] sm:$0xff]
    %v2345 = vld [vmem:[%s10 + $0x170] sm:$0xff]
    %v2346 = vld [vmem:[%s10 + $0x178] sm:$0xff]
    %v2347 = vld [vmem:[%s11] sm:$0xff]
    %v2348 = vld [vmem:[%s11 + $0x8] sm:$0xff]
    %v2349 = vld [vmem:[%s11 + $0x10] sm:$0xff]
    %v2350 = vld [vmem:[%s11 + $0x18] sm:$0xff]
    %v2351 = vld [vmem:[%s12] sm:$0x1]
    %v2352 = vld [vmem:[%s13] sm:$0x1]
    %2353 = vmatpush.msra.mxu0 %v2314
    %2354 = vmatpush.msra.mxu0 %v2313
    %2355 = vmatpush.msra.mxu0 %v2312
    %2356 = vmatpush.msra.mxu0 %v2311
    %2357 = vmatpush.msra.mxu0 %v2310
    %2358 = vmatpush.msra.mxu0 %v2309
    %2359 = vmatpush.msra.mxu0 %v2308
    %2360 = vmatpush.msra.mxu0 %v2307
    %2361 = vmatpush.msra.mxu0 %v2306
    %2362 = vmatpush.msra.mxu0 %v2305
    %2363 = vmatpush.msra.mxu0 %v2304
    %2364 = vmatpush.msra.mxu0 %v2303
    %2365 = vmatpush.msra.mxu0 %v2302
    %2366 = vmatpush.msra.mxu0 %v2301
    %2367 = vmatpush.msra.mxu0 %v2300
    %2368 = vmatpush.msra.mxu0 %v2299
    %2369 = vmatmul.f32.gmra.mxu0 %v2293
    %v2370 = vpop.f32.mrf.mxu0
    %v2371 = vadd.f32 0.0, %v2370
    %2372 = vmatmul.f32.gmra.mxu0 %v2296
    %v2373 = vpop.f32.mrf.mxu0
    %v2374 = vadd.f32 0.0, %v2373
    %2375 = vdwg.mxu0
    %2376 = vmatpush.msra.mxu0 %v2330
    %2377 = vmatpush.msra.mxu0 %v2329
    %2378 = vmatpush.msra.mxu0 %v2328
    %2379 = vmatpush.msra.mxu0 %v2327
    %2380 = vmatpush.msra.mxu0 %v2326
    %2381 = vmatpush.msra.mxu0 %v2325
    %2382 = vmatpush.msra.mxu0 %v2324
    %2383 = vmatpush.msra.mxu0 %v2323
    %2384 = vmatpush.msra.mxu0 %v2322
    %2385 = vmatpush.msra.mxu0 %v2321
    %2386 = vmatpush.msra.mxu0 %v2320
    %2387 = vmatpush.msra.mxu0 %v2319
    %2388 = vmatpush.msra.mxu0 %v2318
    %2389 = vmatpush.msra.mxu0 %v2317
    %2390 = vmatpush.msra.mxu0 %v2316
    %2391 = vmatpush.msra.mxu0 %v2315
    %2392 = vmatmul.f32.gmra.mxu0 %v2294
    %v2393 = vpop.f32.mrf.mxu0
    %v2394 = vadd.f32 %v2371, %v2393
    %2395 = vmatmul.f32.gmra.mxu0 %v2297
    %v2396 = vpop.f32.mrf.mxu0
    %v2397 = vadd.f32 %v2374, %v2396
    %2398 = vdwg.mxu0
    %2399 = vmatpush.msra.mxu0 %v2346
    %2400 = vmatpush.msra.mxu0 %v2345
    %2401 = vmatpush.msra.mxu0 %v2344
    %2402 = vmatpush.msra.mxu0 %v2343
    %2403 = vmatpush.msra.mxu0 %v2342
    %2404 = vmatpush.msra.mxu0 %v2341
    %2405 = vmatpush.msra.mxu0 %v2340
    %2406 = vmatpush.msra.mxu0 %v2339
    %2407 = vmatpush.msra.mxu0 %v2338
    %2408 = vmatpush.msra.mxu0 %v2337
    %2409 = vmatpush.msra.mxu0 %v2336
    %2410 = vmatpush.msra.mxu0 %v2335
    %2411 = vmatpush.msra.mxu0 %v2334
    %2412 = vmatpush.msra.mxu0 %v2333
    %2413 = vmatpush.msra.mxu0 %v2332
    %2414 = vmatpush.msra.mxu0 %v2331
    %2415 = vmatmul.f32.gmra.mxu0 %v2295
    %v2416 = vpop.f32.mrf.mxu0
    %v2417 = vadd.f32 %v2394, %v2416
    %2418 = vmatmul.f32.gmra.mxu0 %v2298
    %v2419 = vpop.f32.mrf.mxu0
    %v2420 = vadd.f32 %v2397, %v2419
    %2421 = vdwg.mxu0
    %v2423 = vsel %vm76, %v2417, 0
    %v2426 = vsel %vm76, %v2420, 0
    %2428 = vmatpush.msra.mxu0 0.0
    %2429 = vmatpush.msra.mxu0 0.0
    %2430 = vmatpush.msra.mxu0 0.0
    %2431 = vmatpush.msra.mxu0 0.0
    %2432 = vmatpush.msra.mxu0 0.0
    %2433 = vmatpush.msra.mxu0 0.0
    %2434 = vmatpush.msra.mxu0 0.0
    %2435 = vmatpush.msra.mxu0 0.0
    %2436 = vmatpush.msra.mxu0 0.0
    %2437 = vmatpush.msra.mxu0 0.0
    %2438 = vmatpush.msra.mxu0 0.0
    %2439 = vmatpush.msra.mxu0 0.0
    %2440 = vmatpush.msra.mxu0 %v2350
    %2441 = vmatpush.msra.mxu0 %v2349
    %2442 = vmatpush.msra.mxu0 %v2348
    %2443 = vmatpush.msra.mxu0 %v2347
    %2444 = vmatmul.f32.gmra.mxu0 %v2423
    %v2445 = vpop.f32.mrf.mxu0
    %v2446 = vadd.f32 0.0, %v2445
    %2447 = vmatmul.f32.gmra.mxu0 %v2426
    %v2448 = vpop.f32.mrf.mxu0
    %v2449 = vadd.f32 0.0, %v2448
    %2450 = vdwg.mxu0
    %2451 = vxpose.xlu0.b32.start [1/16] %v2446, 128
    %2452 = vxpose.xlu0.b32.cont [2/16] %v2449, 128
    %2453 = vxpose.xlu0.b32.cont [3/16] 0.0, 128
    %2454 = vxpose.xlu0.b32.cont [4/16] 0.0, 128
    %2455 = vxpose.xlu0.b32.cont [5/16] 0.0, 128
    %2456 = vxpose.xlu0.b32.cont [6/16] 0.0, 128
    %2457 = vxpose.xlu0.b32.cont [7/16] 0.0, 128
    %2458 = vxpose.xlu0.b32.cont [8/16] 0.0, 128
    %2459 = vxpose.xlu0.b32.cont [9/16] 0.0, 128
    %2460 = vxpose.xlu0.b32.cont [10/16] 0.0, 128
    %2461 = vxpose.xlu0.b32.cont [11/16] 0.0, 128
    %2462 = vxpose.xlu0.b32.cont [12/16] 0.0, 128
    %2463 = vxpose.xlu0.b32.cont [13/16] 0.0, 128
    %2464 = vxpose.xlu0.b32.cont [14/16] 0.0, 128
    %2465 = vxpose.xlu0.b32.cont [15/16] 0.0, 128
    %2466 = vxpose.xlu0.b32.end [16/16] 0.0, 128
    %v2467 = vpop.trf.xlu0
    %v2468 = vpop.trf.xlu0
    %v2469 = vpop.trf.xlu0
    %v2470 = vpop.trf.xlu0
    %v2471 = vpop.trf.xlu0
    %v2472 = vpop.trf.xlu0
    %v2473 = vpop.trf.xlu0
    %v2474 = vpop.trf.xlu0
    %v2475 = vpop.trf.xlu0
    %v2476 = vpop.trf.xlu0
    %v2477 = vpop.trf.xlu0
    %v2478 = vpop.trf.xlu0
    %v2479 = vpop.trf.xlu0
    %v2480 = vpop.trf.xlu0
    %v2481 = vpop.trf.xlu0
    %v2482 = vpop.trf.xlu0
    %2484 = vset.pattern.permute.xlu0 1
    %2485 = vperm.xlu0 %2484, %v2446
    %v2486 = vpop.permute.xlu0 %2485
    %2489 = vset.pattern.permute.xlu0 1
    %2490 = vperm.xlu0 %2489, %v2449
    %v2491 = vpop.permute.xlu0 %2490
    %v2493 = vperm.slane %v2467, 0
    %v2494 = vadd.f32 %v2486, %v2493
    %v2495 = vadd.f32 %v2491, %v2493
    %vm2496 = vcmp.ge.f32.partialorder %v2494, 0.0
    %vm2497 = vcmp.ge.f32.partialorder %v2495, 0.0
    %v2498 = vmul.f32 %v2494, 0.2
    %v2499 = vmul.f32 %v2495, 0.2
    %v2500 = vsel %vm2496, %v2494, %v2498
    %v2501 = vsel %vm2497, %v2495, %v2499
    %v2502 = vsel %vm52, %v2500, -1e+30
    %v2503 = vsel %vm53, %v2501, -1e+30
    %v2504 = vsel %vm315, %v2502, -inf
    %2505 = vmax.xlane.f32.xlu0 %v2504
    %v2506 = vpop.xlane.xlu0 %2505
    %v2507 = vsel %vm315, %v2503, -inf
    %2508 = vmax.xlane.f32.xlu0 %v2507
    %v2509 = vpop.xlane.xlu0 %2508
    %v2510 = vsub.f32 %v2502, %v2506
    %v2511 = vsub.f32 %v2503, %v2509
    %v2512 = vmul.f32 %v2510, 1.442695
    %v2513 = vpow.pop %v2512
    %v2514 = vmul.f32 %v2511, 1.442695
    %v2515 = vpow.pop %v2514
    %v2516 = vmul.f32 %v2513, %v50
    %v2517 = vmul.f32 %v2515, %v51
    %v2518 = vsel %vm315, %v2516, 0.0
    %2519 = vadd.xlane.f32.xlu0 %v2518
    %v2520 = vpop.xlane.xlu0 %2519
    %v2521 = vsel %vm315, %v2517, 0.0
    %2522 = vadd.xlane.f32.xlu0 %v2521
    %v2523 = vpop.xlane.xlu0 %2522
    %v2524 = vadd.f32 %v2520, 1e-16
    %v2525 = vadd.f32 %v2523, 1e-16
    %v2526 = vrcp.pop %v2524
    %v2527 = vmul.f32 %v2524, %v2526
    %v2528 = vsub.f32 1.0, %v2527
    %v2529 = vmul.f32 %v2526, %v2528
    %v2530 = vadd.f32 %v2526, %v2529
    %vm2531 = vweird.f32 %v2524
    %vm2532 = vweird.f32 %v2526
    %vm2533 = vmor %vm2531, %vm2532
    %v2534 = vsel %vm2533, %v2526, %v2530
    %v2535 = vand.u32 2147483647, %v2524
    %vm2536 = vcmp.eq.f32.partialorder %v2535, 8.507059e+37
    %v2537 = vand.u32 %v2524, 2147483648
    %v2538 = vor.u32 1.1754944e-38, %v2537
    %v2539 = vsel %vm2536, %v2538, %v2534
    %v2540 = vmul.f32 %v2516, %v2539
    %v2541 = vrcp.pop %v2525
    %v2542 = vmul.f32 %v2525, %v2541
    %v2543 = vsub.f32 1.0, %v2542
    %v2544 = vmul.f32 %v2541, %v2543
    %v2545 = vadd.f32 %v2541, %v2544
    %vm2546 = vweird.f32 %v2525
    %vm2547 = vweird.f32 %v2541
    %vm2548 = vmor %vm2546, %vm2547
    %v2549 = vsel %vm2548, %v2541, %v2545
    %v2550 = vand.u32 2147483647, %v2525
    %vm2551 = vcmp.eq.f32.partialorder %v2550, 8.507059e+37
    %v2552 = vand.u32 %v2525, 2147483648
    %v2553 = vor.u32 1.1754944e-38, %v2552
    %v2554 = vsel %vm2551, %v2553, %v2549
    %v2555 = vmul.f32 %v2517, %v2554
    %v2557 = vsel %vm315, %v2540, 0
    %v2560 = vsel %vm315, %v2555, 0
    %2562 = vmatpush.msra.mxu0 0.0
    %2563 = vmatpush.msra.mxu0 0.0
    %2564 = vmatpush.msra.mxu0 0.0
    %2565 = vmatpush.msra.mxu0 0.0
    %2566 = vmatpush.msra.mxu0 0.0
    %2567 = vmatpush.msra.mxu0 0.0
    %2568 = vmatpush.msra.mxu0 0.0
    %2569 = vmatpush.msra.mxu0 0.0
    %2570 = vmatpush.msra.mxu0 0.0
    %2571 = vmatpush.msra.mxu0 0.0
    %2572 = vmatpush.msra.mxu0 0.0
    %2573 = vmatpush.msra.mxu0 0.0
    %2574 = vmatpush.msra.mxu0 0.0
    %2575 = vmatpush.msra.mxu0 0.0
    %2576 = vmatpush.msra.mxu0 %v2420
    %2577 = vmatpush.msra.mxu0 %v2417
    %2578 = vmatmul.f32.gmra.mxu0 %v2557
    %v2579 = vpop.f32.mrf.mxu0
    %v2580 = vadd.f32 0.0, %v2579
    %2581 = vmatmul.f32.gmra.mxu0 %v2560
    %v2582 = vpop.f32.mrf.mxu0
    %v2583 = vadd.f32 0.0, %v2582
    %2584 = vdwg.mxu0
    %v2586 = vperm.slane %v2352, 0
    %v2588 = vmul.f32 %v2580, %v2586
    %v2589 = vmul.f32 %v2583, %v2586
    %v2591 = vperm.slane %v2351, 0
    %v2593 = vadd.f32 %v2588, %v2591
    %v2594 = vadd.f32 %v2589, %v2591
    %2595 = vst.msk [vmem:[#allocation2] sm:$0xff] %vm315, %v2593
    %2596 = vst.msk [vmem:[#allocation2 + $0x8] sm:$0xff] %vm315, %v2594
    // Predicated region
    $region58: #{tpu_custom_call.1} parent=1 // pred_check
      _
    $region59: #{tpu_custom_call.1} parent=1 // pred_check_branch
      %2598 = sbr.rel (0) target = $region61
    $region60: #{tpu_custom_call.1} parent=1 // pred_region
      %2600 = vsyncadd [#allocation3], 0
      %s2601 = sshll.u32 [#allocation2], 4
      %s2602 = int_to_ptr.vmem [resolvable:$true] %s2601
      %s2603 = sshll.u32 %s14, 4
      %s2604 = int_to_ptr.hbm [resolvable:$true] %s2603
      %2609 = dma.vmem_to_hbm [thread:$0]  %s2602, 256, %s2604, [#allocation3], 128, 128, 8
    $region61: #{tpu_custom_call.1} parent=1 // pred_fallthru
      _
    // Predicated region
    $region62: #{tpu_custom_call.1} parent=1 // pred_check
      _
    $region63: #{tpu_custom_call.1} parent=1 // pred_check_branch
      %2611 = sbr.rel (0) target = $region65
    $region64: #{tpu_custom_call.1} parent=1 // pred_region
      %2613 = dma.done [#allocation3], 256
    $region65: #{tpu_custom_call.1} parent=1 // pred_fallthru
      _
    %2614 = vsyncpa [#allocation3], 1

</llo_original>
